<compile_context>
chip_gen: v7x
topology: tpu7x:2x2x1
jax: 0.10.0
libtpu: 0.0.40
codegen_flags: <defaults>
</compile_context>

<pallas_src>
import jax
import jax.numpy as jnp
from jax import lax
from jax.experimental import pallas as pl
from jax.experimental.pallas import tpu as pltpu

# Scoped-VMEM request: above v5e's 16 MiB default, comfortably below v7x's 64 MiB.
VMEM_LIMIT = 32 * 1024 * 1024


# ----------------------------- small helpers -----------------------------

def _decrease(x, k, s, p, d=1):
    # mirrors decrease_dim() in the PyTorch code
    return (x + 2 * p - d * (k - 1) - 1) // s + 1


def _round_up(x, m):
    return (x + m - 1) // m * m


def _row_tiles(rows, target=256):
    tr = min(target, _round_up(rows, 8))
    return tr, _round_up(rows, tr)


def _pad_rows(a, rows_p):
    if a.shape[0] == rows_p:
        return a
    pad = [(0, rows_p - a.shape[0])] + [(0, 0)] * (a.ndim - 1)
    return jnp.pad(a, pad)


def _bn_affine(gamma, beta, mean, var, eps=1e-5):
    scale = gamma / jnp.sqrt(var + eps)
    return scale, beta - mean * scale


# ----------------------------- Pallas kernels -----------------------------

def _conv_kernel(lens_ref, w_ref, scale_ref, shift_ref, toidx_ref, p_ref, o_ref):
    # Transposed conv matmul: (cout, K) @ (K, TM) so the big n*do*to axis is lane-dense.
    # Fused eval-BN + ReLU + MaskConv time mask (mask built in-kernel from conv_lens).
    n_i = pl.program_id(0)
    acc = jnp.dot(w_ref[...], p_ref[0], preferred_element_type=jnp.float32)   # (cout, TM)
    y = jnp.maximum(acc * scale_ref[...] + shift_ref[...], 0.0)
    valid = (toidx_ref[...] < lens_ref[n_i]).astype(jnp.float32)              # (1, TM)
    o_ref[0] = (y * valid).astype(o_ref.dtype)


def _bigru_kernel(xf_ref, xb_ref, vb_ref, wif_ref, bif_ref, wib_ref, bib_ref,
                  whf_ref, bnf_ref, whb_ref, bnb_ref,
                  of_ref, ob_ref, hf_ref, hb_ref, gf_ref, gb_ref):
    # One time chunk of the bidirectional GRU with the input projection fused in.
    # Rows are (t*NP + b): the grid walks forward-time chunks for the fwd direction while
    # the BlockSpec index_maps feed mirrored chunks for the bwd direction; h_fwd / h_bwd
    # persist in VMEM scratch across grid steps; gate tensors never touch HBM.
    rows, g3 = gf_ref.shape
    h_dim = g3 // 3
    nb = hf_ref.shape[0]          # batch rows padded to a multiple of 8
    tc = rows // nb               # time steps in this chunk

    @pl.when(pl.program_id(0) == 0)
    def _():
        hf_ref[...] = jnp.zeros_like(hf_ref)
        hb_ref[...] = jnp.zeros_like(hb_ref)

    # chunk-level input projections: one big MXU matmul per direction, gates stay in VMEM
    gf_ref[...] = jnp.dot(xf_ref[...], wif_ref[...],
                          preferred_element_type=jnp.float32) + bif_ref[...]
    gb_ref[...] = jnp.dot(xb_ref[...], wib_ref[...],
                          preferred_element_type=jnp.float32) + bib_ref[...]

    # hoist recurrent weights / n-gate hidden biases out of the per-step path
    whf = whf_ref[...]
    whb = whb_ref[...]
    bnf = bnf_ref[...]
    bnb = bnb_ref[...]

    def step(t, carry):
        hf, hb = carry
        # ---- forward direction, local time t ----
        off = pl.multiple_of(t * nb, nb)
        gif = gf_ref[pl.ds(off, nb), :]                             # (NP, 3H)
        ghf = jnp.dot(hf, whf, preferred_element_type=jnp.float32)
        rf = jax.nn.sigmoid(gif[:, 0:h_dim] + ghf[:, 0:h_dim])
        zf = jax.nn.sigmoid(gif[:, h_dim:2 * h_dim] + ghf[:, h_dim:2 * h_dim])
        cf = jnp.tanh(gif[:, 2 * h_dim:] + rf * (ghf[:, 2 * h_dim:] + bnf))
        hf = (1.0 - zf) * cf + zf * hf
        of_ref[pl.ds(off, nb), :] = hf.astype(of_ref.dtype)
        # ---- backward direction, local time tc-1-t (block is already the mirrored chunk) ----
        offb = pl.multiple_of((tc - 1 - t) * nb, nb)
        gib = gb_ref[pl.ds(offb, nb), :]
        ghb = jnp.dot(hb, whb, preferred_element_type=jnp.float32)
        rb = jax.nn.sigmoid(gib[:, 0:h_dim] + ghb[:, 0:h_dim])
        zb = jax.nn.sigmoid(gib[:, h_dim:2 * h_dim] + ghb[:, h_dim:2 * h_dim])
        cb = jnp.tanh(gib[:, 2 * h_dim:] + rb * (ghb[:, 2 * h_dim:] + bnb))
        # packed-sequence semantics: reset the state for t >= length so each sequence's
        # reverse pass starts at its own last valid frame.
        hb = ((1.0 - zb) * cb + zb * hb) * vb_ref[pl.ds(offb, nb), :]
        ob_ref[pl.ds(offb, nb), :] = hb.astype(ob_ref.dtype)
        return hf, hb

    hf, hb = lax.fori_loop(0, tc, step, (hf_ref[...], hb_ref[...]))
    hf_ref[...] = hf
    hb_ref[...] = hb


def _head_kernel(f_ref, b_ref, valid_ref, wprj_ref, scale_ref, shift_ref,
                 wfc_ref, bfc_ref, o_ref):
    # prj Linear (no bias) -> BatchNorm1d(eval) -> ReLU -> Linear -> log_softmax, then
    # zero padded frames (pad_packed_sequence pads with 0).  Feature axes are padded to
    # multiples of 128; padded logit columns carry a -1e30 bias so they never win the
    # max / contribute to the LSE.  The wrapper slices the padding off.
    s = (f_ref[...] + b_ref[...]).astype(jnp.bfloat16)
    p = jnp.dot(s, wprj_ref[...], preferred_element_type=jnp.float32)
    p = jnp.maximum(p * scale_ref[...] + shift_ref[...], 0.0)
    logits = (jnp.dot(p.astype(jnp.bfloat16), wfc_ref[...],
                      preferred_element_type=jnp.float32) + bfc_ref[...])
    mx = jnp.max(logits, axis=-1, keepdims=True)
    sh = logits - mx
    lse = jnp.log(jnp.sum(jnp.exp(sh), axis=-1, keepdims=True))
    o_ref[...] = ((sh - lse) * valid_ref[...]).astype(o_ref.dtype)


# ----------------------------- wrappers -----------------------------

def conv_bn_relu_mask(x, w, bn_scale, bn_shift, conv_lens, stride, padding):
    """Conv2d(bias=False) + BatchNorm2d(eval) + ReLU + MaskConv time mask.

    Returns ((N, Cout, Dout, Tout) bf16, Dout, Tout)."""
    n, cin, d, t = x.shape
    cout, _, kh, kw = w.shape
    sh, sw = stride
    ph, pw = padding
    do = _decrease(d, kh, sh, ph)
    to = _decrease(t, kw, sw, pw)
    kdim = cin * kh * kw
    m = do * to

    # im2col patch extraction stays in plain-JAX glue.
    # TODO(synk): replace with a fully in-kernel conv (DMA the raw input window per tile
    # and accumulate kh*kw shifted matmuls) to kill the kh*kw HBM blow-up of im2col.
    xp = jnp.pad(x, ((0, 0), (0, 0), (ph, ph), (pw, pw)))
    idx_h = (jnp.arange(do) * sh)[:, None] + jnp.arange(kh)[None, :]   # (do, kh)
    idx_w = (jnp.arange(to) * sw)[:, None] + jnp.arange(kw)[None, :]   # (to, kw)
    patches = xp[:, :, idx_h[:, :, None, None], idx_w[None, None, :, :]]  # (n,cin,do,kh,to,kw)
    patches_t = patches.transpose(0, 1, 3, 5, 2, 4).reshape(n, kdim, m).astype(jnp.bfloat16)

    m_pad = _round_up(m, 128)
    tm = 512 if m_pad % 512 == 0 else (256 if m_pad % 256 == 0 else 128)
    if m_pad != m:
        patches_t = jnp.pad(patches_t, ((0, 0), (0, 0), (0, m_pad - m)))
    # time index of each output column (columns are ordered (d_out, t_out))
    to_idx = (jnp.arange(m_pad, dtype=jnp.int32) % to).reshape(1, m_pad)

    w2 = w.reshape(cout, kdim).astype(jnp.bfloat16)
    scale2 = bn_scale.reshape(cout, 1).astype(jnp.float32)
    shift2 = bn_shift.reshape(cout, 1).astype(jnp.float32)

    out = pl.pallas_call(
        _conv_kernel,
        out_shape=jax.ShapeDtypeStruct((n, cout, m_pad), jnp.bfloat16),
        grid_spec=pltpu.PrefetchScalarGridSpec(
            num_scalar_prefetch=1,
            grid=(n, m_pad // tm),
            in_specs=[
                pl.BlockSpec((cout, kdim), lambda ni, mi, lens: (0, 0)),      # weights (resident)
                pl.BlockSpec((cout, 1), lambda ni, mi, lens: (0, 0)),         # BN scale
                pl.BlockSpec((cout, 1), lambda ni, mi, lens: (0, 0)),         # BN shift
                pl.BlockSpec((1, tm), lambda ni, mi, lens: (0, mi)),          # per-column t index
                pl.BlockSpec((1, kdim, tm), lambda ni, mi, lens: (ni, 0, mi)),  # patches^T
            ],
            out_specs=pl.BlockSpec((1, cout, tm), lambda ni, mi, lens: (ni, 0, mi)),
        ),
        compiler_params=pltpu.CompilerParams(
            dimension_semantics=("parallel", "parallel"),
            vmem_limit_bytes=VMEM_LIMIT),
    )(conv_lens.astype(jnp.int32), w2, scale2, shift2, to_idx, patches_t)

    if m_pad != m:
        out = out[:, :, :m]
    return out.reshape(n, cout, do, to), do, to


def _pick_t_chunk(t2, np_, feat_dim, g3):
    # Keep the per-chunk GRU VMEM footprint (double-buffered bf16 feat blocks for both
    # directions + f32 gate scratch for both directions) under ~8 MiB.
    per_t = np_ * (2 * 2 * feat_dim * 2 + 2 * _round_up(g3, 128) * 4)
    tc = (8 * 1024 * 1024) // max(per_t, 1)
    tc = max(8, min(128, tc // 8 * 8))
    return min(tc, _round_up(t2, 8))


def acoustic_model_forward(params, x, lengths):
    """x: (N, 1, D, T) float32, lengths: (N,) int32 sorted descending.

    Returns (out, conv_lens): out is (T_conv, N, out_dim) log-probs, zero past each
    sequence's conv length.  Callers wanting the exact pad_packed_sequence shape should
    trim out[:max(conv_lens)] themselves (done in __main__, outside jit)."""
    lengths = lengths.astype(jnp.int32)
    # only conv1 (time stride 2) changes the time length; conv2 keeps it.
    conv_lens = (lengths - 1) // 2 + 1

    s1, b1 = _bn_affine(params['bn1_gamma'], params['bn1_beta'],
                        params['bn1_mean'], params['bn1_var'])
    s2, b2 = _bn_affine(params['bn2_gamma'], params['bn2_beta'],
                        params['bn2_mean'], params['bn2_var'])

    y1, _, _ = conv_bn_relu_mask(x, params['conv1_w'], s1, b1, conv_lens, (2, 2), (10, 5))
    y2, d2, t2 = conv_bn_relu_mask(y1, params['conv2_w'], s2, b2, conv_lens, (2, 1), (5, 5))

    n, c, _, _ = y2.shape
    feat_dim = c * d2
    hidden = params['w_hh_f'].shape[1]
    g3 = 3 * hidden

    # (T, N, C*D) like torch's view/transpose; the only XLA transpose left is this one
    # small pass over the conv2 activation.
    feat = y2.reshape(n, feat_dim, t2).transpose(2, 0, 1)        # (t2, N, F) bf16

    # pad batch to a multiple of 8 (sublane-aligned rows) and time to the GRU time-chunk
    np_ = _round_up(n, 8)
    t_chunk = _pick_t_chunk(t2, np_, feat_dim, g3)
    t_pad = _round_up(t2, t_chunk)
    num_chunks = t_pad // t_chunk
    feat = jnp.pad(feat, ((0, t_pad - t2), (0, np_ - n), (0, 0)))
    rows = t_pad * np_
    feat2d = feat.reshape(rows, feat_dim)                        # row = t*NP + b, bf16

    # frame validity (rows, 1): 1 for (t < conv_lens[b], b < n), else 0
    lens_p = jnp.zeros((np_,), jnp.int32).at[:n].set(conv_lens)
    valid2d = (jnp.arange(t_pad)[:, None] < lens_p[None, :]).astype(jnp.float32).reshape(rows, 1)

    # ---- GRU parameters ----
    def _fold_rz(b_ih, b_hh):
        # r/z hidden biases fold into the input gates; only the n-gate hidden bias must
        # stay inside r * (.) in the recurrence.
        return b_ih + jnp.concatenate([b_hh[:2 * hidden],
                                       jnp.zeros((hidden,), b_hh.dtype)])

    w_if = params['w_ih_f'].T.astype(jnp.bfloat16)                # (F, 3H)
    w_ib = params['w_ih_b'].T.astype(jnp.bfloat16)
    bi_f = _fold_rz(params['b_ih_f'], params['b_hh_f']).reshape(1, g3).astype(jnp.float32)
    bi_b = _fold_rz(params['b_ih_b'], params['b_hh_b']).reshape(1, g3).astype(jnp.float32)
    wh_f = params['w_hh_f'].T.astype(jnp.float32)                 # (H, 3H)
    wh_b = params['w_hh_b'].T.astype(jnp.float32)
    bn_f = params['b_hh_f'][2 * hidden:].reshape(1, hidden).astype(jnp.float32)
    bn_b = params['b_hh_b'][2 * hidden:].reshape(1, hidden).astype(jnp.float32)

    # ---- time-chunked bidirectional GRU with fused input projection ----
    blk = t_chunk * np_
    out_f2d, out_b2d = pl.pallas_call(
        _bigru_kernel,
        out_shape=(jax.ShapeDtypeStruct((rows, hidden), jnp.bfloat16),
                   jax.ShapeDtypeStruct((rows, hidden), jnp.bfloat16)),
        grid=(num_chunks,),
        in_specs=[
            pl.BlockSpec((blk, feat_dim), lambda ci: (ci, 0)),                      # feat (fwd order)
            pl.BlockSpec((blk, feat_dim), lambda ci: (num_chunks - 1 - ci, 0)),     # feat (bwd order)
            pl.BlockSpec((blk, 1), lambda ci: (num_chunks - 1 - ci, 0)),            # valid (bwd order)
            pl.BlockSpec((feat_dim, g3), lambda ci: (0, 0)),                        # W_ih fwd (resident)
            pl.BlockSpec((1, g3), lambda ci: (0, 0)),                               # bias fwd
            pl.BlockSpec((feat_dim, g3), lambda ci: (0, 0)),                        # W_ih bwd (resident)
            pl.BlockSpec((1, g3), lambda ci: (0, 0)),                               # bias bwd
            pl.BlockSpec((hidden, g3), lambda ci: (0, 0)),                          # W_hh fwd (resident)
            pl.BlockSpec((1, hidden), lambda ci: (0, 0)),                           # b_hn fwd
            pl.BlockSpec((hidden, g3), lambda ci: (0, 0)),                          # W_hh bwd (resident)
            pl.BlockSpec((1, hidden), lambda ci: (0, 0)),                           # b_hn bwd
        ],
        out_specs=(pl.BlockSpec((blk, hidden), lambda ci: (ci, 0)),
                   pl.BlockSpec((blk, hidden), lambda ci: (num_chunks - 1 - ci, 0))),
        scratch_shapes=[pltpu.VMEM((np_, hidden), jnp.float32),
                        pltpu.VMEM((np_, hidden), jnp.float32),
                        pltpu.VMEM((blk, g3), jnp.float32),
                        pltpu.VMEM((blk, g3), jnp.float32)],
        compiler_params=pltpu.CompilerParams(
            dimension_semantics=("arbitrary",), vmem_limit_bytes=VMEM_LIMIT),
    )(feat2d, feat2d, valid2d, w_if, bi_f, w_ib, bi_b, wh_f, bn_f, wh_b, bn_b)
    # TODO(synk): on v7x the fwd / bwd directions could be split across the two TensorCores.

    # ---- head: prj -> BN1d -> ReLU -> Linear -> log_softmax -> zero padded frames ----
    prj = params['w_prj'].shape[0]
    out_dim = params['w_fc'].shape[0]
    prj_p = _round_up(prj, 128)
    out_p = _round_up(out_dim, 128)

    fs, fb = _bn_affine(params['fcbn_gamma'], params['fcbn_beta'],
                        params['fcbn_mean'], params['fcbn_var'])
    w_prj_p = jnp.zeros((hidden, prj_p), jnp.bfloat16).at[:, :prj].set(
        params['w_prj'].T.astype(jnp.bfloat16))
    scale_p = jnp.zeros((1, prj_p), jnp.float32).at[0, :prj].set(fs)
    shift_p = jnp.zeros((1, prj_p), jnp.float32).at[0, :prj].set(fb)
    w_fc_p = jnp.zeros((prj_p, out_p), jnp.bfloat16).at[:prj, :out_dim].set(
        params['w_fc'].T.astype(jnp.bfloat16))
    b_fc_p = jnp.full((1, out_p), -1e30, jnp.float32).at[0, :out_dim].set(
        params['b_fc'].astype(jnp.float32))

    tr, rows_p = _row_tiles(rows, 256)
    f2d = _pad_rows(out_f2d, rows_p)
    b2d = _pad_rows(out_b2d, rows_p)
    v2d = _pad_rows(valid2d, rows_p)

    out2d = pl.pallas_call(
        _head_kernel,
        out_shape=jax.ShapeDtypeStruct((rows_p, out_p), jnp.float32),
        grid=(rows_p // tr,),
        in_specs=[pl.BlockSpec((tr, hidden), lambda i: (i, 0)),
                  pl.BlockSpec((tr, hidden), lambda i: (i, 0)),
                  pl.BlockSpec((tr, 1), lambda i: (i, 0)),
                  pl.BlockSpec((hidden, prj_p), lambda i: (0, 0)),
                  pl.BlockSpec((1, prj_p), lambda i: (0, 0)),
                  pl.BlockSpec((1, prj_p), lambda i: (0, 0)),
                  pl.BlockSpec((prj_p, out_p), lambda i: (0, 0)),
                  pl.BlockSpec((1, out_p), lambda i: (0, 0))],
        out_specs=pl.BlockSpec((tr, out_p), lambda i: (i, 0)),
        compiler_params=pltpu.CompilerParams(
            dimension_semantics=("parallel",), vmem_limit_bytes=VMEM_LIMIT),
    )(f2d, b2d, v2d, w_prj_p, scale_p, shift_p, w_fc_p, b_fc_p)
    # TODO(synk): head=False branch (return prj output without fc/log_softmax) not wired up.

    out = out2d[:rows, :out_dim].reshape(t_pad, np_, out_dim)[:t2, :n, :]
    return out, conv_lens


# ----------------------------- deterministic params -----------------------------

def init_params(key, input_size, hidden, prj, out_dim):
    ks = iter(jax.random.split(key, 32))
    nxt = lambda: next(ks)
    uni = lambda k, shape, s: jax.random.uniform(k, shape, jnp.float32, -s, s)

    d1 = _decrease(input_size, 21, 2, 10)
    d2 = _decrease(d1, 11, 2, 5)
    feat = d2 * 32                       # == MaskConv.output_dim(input_size)

    p = {}
    p['conv1_w'] = uni(nxt(), (32, 1, 21, 11), (1 * 21 * 11) ** -0.5)
    p['conv2_w'] = uni(nxt(), (32, 32, 11, 11), (32 * 11 * 11) ** -0.5)
    for nm in ('bn1', 'bn2'):
        p[f'{nm}_gamma'] = 1.0 + 0.1 * jax.random.normal(nxt(), (32,), jnp.float32)
        p[f'{nm}_beta'] = 0.1 * jax.random.normal(nxt(), (32,), jnp.float32)
        p[f'{nm}_mean'] = 0.1 * jax.random.normal(nxt(), (32,), jnp.float32)
        p[f'{nm}_var'] = 1.0 + 0.1 * jax.random.uniform(nxt(), (32,), jnp.float32)

    gs = hidden ** -0.5
    for d in ('f', 'b'):                 # forward / reverse GRU directions
        p[f'w_ih_{d}'] = uni(nxt(), (3 * hidden, feat), gs)   # gate order (r, z, n)
        p[f'w_hh_{d}'] = uni(nxt(), (3 * hidden, hidden), gs)
        p[f'b_ih_{d}'] = uni(nxt(), (3 * hidden,), gs)
        p[f'b_hh_{d}'] = uni(nxt(), (3 * hidden,), gs)

    p['w_prj'] = uni(nxt(), (prj, hidden), hidden ** -0.5)    # Linear(hidden, prj, bias=False)
    p['fcbn_gamma'] = 1.0 + 0.1 * jax.random.normal(nxt(), (prj,), jnp.float32)
    p['fcbn_beta'] = 0.1 * jax.random.normal(nxt(), (prj,), jnp.float32)
    p['fcbn_mean'] = 0.1 * jax.random.normal(nxt(), (prj,), jnp.float32)
    p['fcbn_var'] = 1.0 + 0.1 * jax.random.uniform(nxt(), (prj,), jnp.float32)
    p['w_fc'] = uni(nxt(), (out_dim, prj), prj ** -0.5)       # Linear(prj, output_size)
    p['b_fc'] = uni(nxt(), (out_dim,), prj ** -0.5)
    return p


if __name__ == "__main__":
    N, D, T = 2, 32, 16                 # batch, freq bins, time frames
    hidden, prj, out_dim = 32, 16, 12
    key = jax.random.PRNGKey(0)
    kx, kp = jax.random.split(key)

    x = jax.random.normal(kx, (N, 1, D, T), jnp.float32)
    lengths = jnp.array([16, 12], dtype=jnp.int32)   # sorted descending (enforce_sorted=True)

    params = init_params(kp, D, hidden, prj, out_dim)
    fwd = jax.jit(acoustic_model_forward)
    out, out_lens = fwd(params, x, lengths)
    out, out_lens = jax.block_until_ready((out, out_lens))

    # pad_packed_sequence pads only to the longest sequence in the batch: trim here with
    # concrete values (outside jit), as advised for the traced-int concern.
    max_len = int(out_lens[0])                       # lengths are sorted descending
    out = out[:max_len]

    assert out.shape == (max_len, N, out_dim)
    assert bool(jnp.all(jnp.isfinite(out)))
    # padded frames of the shorter sequence must be exactly zero (pad_packed semantics)
    assert bool(jnp.all(out[int(out_lens[1]):, 1, :] == 0.0))
    print("KERNEL_OK")
</pallas_src>

<mosaic_0001>
module attributes {stable_mosaic.version = 11 : i64} {
  func.func @_conv_kernel(%arg0: i32, %arg1: i32, %arg2: memref<2xi32, #tpu.memory_space<smem>>, %arg3: memref<32x231xbf16, #tpu.memory_space<vmem>>, %arg4: memref<32x1xf32, #tpu.memory_space<vmem>>, %arg5: memref<32x1xf32, #tpu.memory_space<vmem>>, %arg6: memref<1x128xi32, #tpu.memory_space<vmem>>, %arg7: memref<1x231x128xbf16, #tpu.memory_space<vmem>>, %arg8: memref<1x32x128xbf16, #tpu.memory_space<vmem>>) attributes {dimension_semantics = [#tpu.dimension_semantics<parallel>, #tpu.dimension_semantics<parallel>], iteration_bounds = array<i64: 2, 1>, scalar_prefetch = 1 : i64, scratch_operands = 0 : i64, tpu.core_type = #tpu.core_type<tc>, window_params = [{pipeline_mode = #tpu.pipeline_mode<synchronous>, transform_indices = @transform_0, window_bounds = array<i64: 32, 231>}, {pipeline_mode = #tpu.pipeline_mode<synchronous>, transform_indices = @transform_1, window_bounds = array<i64: 32, 1>}, {pipeline_mode = #tpu.pipeline_mode<synchronous>, transform_indices = @transform_2, window_bounds = array<i64: 32, 1>}, {transform_indices = @transform_3, window_bounds = array<i64: 1, 128>}, {transform_indices = @transform_4, window_bounds = array<i64: 1, 231, 128>}, {transform_indices = @transform_5, window_bounds = array<i64: 1, 32, 128>}]} {
    %c0 = arith.constant 0 : index
    %c0_0 = arith.constant 0 : index
    %0 = vector.load %arg3[%c0, %c0_0] : memref<32x231xbf16, #tpu.memory_space<vmem>>, vector<32x231xbf16>
    %c0_1 = arith.constant 0 : index
    %c0_2 = arith.constant 0 : index
    %c0_3 = arith.constant 0 : index
    %1 = vector.load %arg7[%c0_1, %c0_2, %c0_3] : memref<1x231x128xbf16, #tpu.memory_space<vmem>>, vector<1x231x128xbf16>
    %2 = vector.shape_cast %1 : vector<1x231x128xbf16> to vector<231x128xbf16>
    %cst = arith.constant dense<0.000000e+00> : vector<32x128xf32>
    %3 = tpu.matmul %0, %2, %cst {dimension_numbers = #tpu.dot_dimension_numbers<[1], [0], [0], [1], [0, 0, 1, 1], [], []>} : vector<32x231xbf16>, vector<231x128xbf16>, vector<32x128xf32> -> vector<32x128xf32>
    %c0_4 = arith.constant 0 : index
    %c0_5 = arith.constant 0 : index
    %4 = vector.load %arg4[%c0_4, %c0_5] : memref<32x1xf32, #tpu.memory_space<vmem>>, vector<32x1xf32>
    %5 = vector.broadcast %4 : vector<32x1xf32> to vector<32x128xf32>
    %6 = arith.mulf %3, %5 : vector<32x128xf32>
    %c0_6 = arith.constant 0 : index
    %c0_7 = arith.constant 0 : index
    %7 = vector.load %arg5[%c0_6, %c0_7] : memref<32x1xf32, #tpu.memory_space<vmem>>, vector<32x1xf32>
    %8 = vector.broadcast %7 : vector<32x1xf32> to vector<32x128xf32>
    %9 = arith.addf %6, %8 : vector<32x128xf32>
    %cst_8 = arith.constant 0.000000e+00 : f32
    %10 = vector.broadcast %cst_8 : f32 to vector<32x128xf32>
    %11 = arith.maximumf %9, %10 : vector<32x128xf32>
    %c0_9 = arith.constant 0 : index
    %c0_10 = arith.constant 0 : index
    %12 = vector.load %arg6[%c0_9, %c0_10] : memref<1x128xi32, #tpu.memory_space<vmem>>, vector<1x128xi32>
    %13 = arith.index_cast %arg0 : i32 to index
    %14 = memref.load %arg2[%13] : memref<2xi32, #tpu.memory_space<smem>>
    %15 = vector.broadcast %14 : i32 to vector<1x128xi32>
    %16 = arith.cmpi slt, %12, %15 : vector<1x128xi32>
    %17 = arith.extui %16 : vector<1x128xi1> to vector<1x128xi32>
    %18 = arith.sitofp %17 : vector<1x128xi32> to vector<1x128xf32>
    %19 = vector.broadcast %18 : vector<1x128xf32> to vector<32x128xf32>
    %20 = arith.mulf %11, %19 : vector<32x128xf32>
    %21 = arith.truncf %20 : vector<32x128xf32> to vector<32x128xbf16>
    %c0_11 = arith.constant 0 : index
    %c0_12 = arith.constant 0 : index
    %c0_13 = arith.constant 0 : index
    %22 = vector.load %arg8[%c0_11, %c0_12, %c0_13] : memref<1x32x128xbf16, #tpu.memory_space<vmem>>, vector<1x32x128xbf16>
    %23 = vector.shape_cast %22 : vector<1x32x128xbf16> to vector<32x128xbf16>
    %24 = vector.shape_cast %21 : vector<32x128xbf16> to vector<1x32x128xbf16>
    tpu.vector_store %arg8[%c0_11, %c0_12, %c0_13], %24 {strides = array<i32>} : memref<1x32x128xbf16, #tpu.memory_space<vmem>>, vector<1x32x128xbf16>,
    return
  }
  func.func @transform_0(%arg0: i32, %arg1: i32, %arg2: memref<2xi32, #tpu.memory_space<smem>>) -> (i32, i32) {
    %c0_i32 = arith.constant 0 : i32
    %c0_i32_0 = arith.constant 0 : i32
    %c0_i32_1 = arith.constant 0 : i32
    return %c0_i32, %c0_i32_0 : i32, i32
  }
  func.func @transform_1(%arg0: i32, %arg1: i32, %arg2: memref<2xi32, #tpu.memory_space<smem>>) -> (i32, i32) {
    %c0_i32 = arith.constant 0 : i32
    %c0_i32_0 = arith.constant 0 : i32
    %c0_i32_1 = arith.constant 0 : i32
    return %c0_i32, %c0_i32_0 : i32, i32
  }
  func.func @transform_2(%arg0: i32, %arg1: i32, %arg2: memref<2xi32, #tpu.memory_space<smem>>) -> (i32, i32) {
    %c0_i32 = arith.constant 0 : i32
    %c0_i32_0 = arith.constant 0 : i32
    %c0_i32_1 = arith.constant 0 : i32
    return %c0_i32, %c0_i32_0 : i32, i32
  }
  func.func @transform_3(%arg0: i32, %arg1: i32, %arg2: memref<2xi32, #tpu.memory_space<smem>>) -> (i32, i32) {
    %c0_i32 = arith.constant 0 : i32
    %c0_i32_0 = arith.constant 0 : i32
    return %c0_i32, %arg1 : i32, i32
  }
  func.func @transform_4(%arg0: i32, %arg1: i32, %arg2: memref<2xi32, #tpu.memory_space<smem>>) -> (i32, i32, i32) {
    %c0_i32 = arith.constant 0 : i32
    %c0_i32_0 = arith.constant 0 : i32
    return %arg0, %c0_i32, %arg1 : i32, i32, i32
  }
  func.func @transform_5(%arg0: i32, %arg1: i32, %arg2: memref<2xi32, #tpu.memory_space<smem>>) -> (i32, i32, i32) {
    %c0_i32 = arith.constant 0 : i32
    %c0_i32_0 = arith.constant 0 : i32
    return %arg0, %c0_i32, %arg1 : i32, i32, i32
  }
}

module attributes {stable_mosaic.version = 11 : i64} {
  func.func @_conv_kernel(%arg0: i32, %arg1: i32, %arg2: memref<2xi32, #tpu.memory_space<smem>>, %arg3: memref<32x3872xbf16, #tpu.memory_space<vmem>>, %arg4: memref<32x1xf32, #tpu.memory_space<vmem>>, %arg5: memref<32x1xf32, #tpu.memory_space<vmem>>, %arg6: memref<1x128xi32, #tpu.memory_space<vmem>>, %arg7: memref<1x3872x128xbf16, #tpu.memory_space<vmem>>, %arg8: memref<1x32x128xbf16, #tpu.memory_space<vmem>>) attributes {dimension_semantics = [#tpu.dimension_semantics<parallel>, #tpu.dimension_semantics<parallel>], iteration_bounds = array<i64: 2, 1>, scalar_prefetch = 1 : i64, scratch_operands = 0 : i64, tpu.core_type = #tpu.core_type<tc>, window_params = [{pipeline_mode = #tpu.pipeline_mode<synchronous>, transform_indices = @transform_0, window_bounds = array<i64: 32, 3872>}, {pipeline_mode = #tpu.pipeline_mode<synchronous>, transform_indices = @transform_1, window_bounds = array<i64: 32, 1>}, {pipeline_mode = #tpu.pipeline_mode<synchronous>, transform_indices = @transform_2, window_bounds = array<i64: 32, 1>}, {transform_indices = @transform_3, window_bounds = array<i64: 1, 128>}, {transform_indices = @transform_4, window_bounds = array<i64: 1, 3872, 128>}, {transform_indices = @transform_5, window_bounds = array<i64: 1, 32, 128>}]} {
    %c0 = arith.constant 0 : index
    %c0_0 = arith.constant 0 : index
    %0 = vector.load %arg3[%c0, %c0_0] : memref<32x3872xbf16, #tpu.memory_space<vmem>>, vector<32x3872xbf16>
    %c0_1 = arith.constant 0 : index
    %c0_2 = arith.constant 0 : index
    %c0_3 = arith.constant 0 : index
    %1 = vector.load %arg7[%c0_1, %c0_2, %c0_3] : memref<1x3872x128xbf16, #tpu.memory_space<vmem>>, vector<1x3872x128xbf16>
    %2 = vector.shape_cast %1 : vector<1x3872x128xbf16> to vector<3872x128xbf16>
    %cst = arith.constant dense<0.000000e+00> : vector<32x128xf32>
    %3 = tpu.matmul %0, %2, %cst {dimension_numbers = #tpu.dot_dimension_numbers<[1], [0], [0], [1], [0, 0, 1, 1], [], []>} : vector<32x3872xbf16>, vector<3872x128xbf16>, vector<32x128xf32> -> vector<32x128xf32>
    %c0_4 = arith.constant 0 : index
    %c0_5 = arith.constant 0 : index
    %4 = vector.load %arg4[%c0_4, %c0_5] : memref<32x1xf32, #tpu.memory_space<vmem>>, vector<32x1xf32>
    %5 = vector.broadcast %4 : vector<32x1xf32> to vector<32x128xf32>
    %6 = arith.mulf %3, %5 : vector<32x128xf32>
    %c0_6 = arith.constant 0 : index
    %c0_7 = arith.constant 0 : index
    %7 = vector.load %arg5[%c0_6, %c0_7] : memref<32x1xf32, #tpu.memory_space<vmem>>, vector<32x1xf32>
    %8 = vector.broadcast %7 : vector<32x1xf32> to vector<32x128xf32>
    %9 = arith.addf %6, %8 : vector<32x128xf32>
    %cst_8 = arith.constant 0.000000e+00 : f32
    %10 = vector.broadcast %cst_8 : f32 to vector<32x128xf32>
    %11 = arith.maximumf %9, %10 : vector<32x128xf32>
    %c0_9 = arith.constant 0 : index
    %c0_10 = arith.constant 0 : index
    %12 = vector.load %arg6[%c0_9, %c0_10] : memref<1x128xi32, #tpu.memory_space<vmem>>, vector<1x128xi32>
    %13 = arith.index_cast %arg0 : i32 to index
    %14 = memref.load %arg2[%13] : memref<2xi32, #tpu.memory_space<smem>>
    %15 = vector.broadcast %14 : i32 to vector<1x128xi32>
    %16 = arith.cmpi slt, %12, %15 : vector<1x128xi32>
    %17 = arith.extui %16 : vector<1x128xi1> to vector<1x128xi32>
    %18 = arith.sitofp %17 : vector<1x128xi32> to vector<1x128xf32>
    %19 = vector.broadcast %18 : vector<1x128xf32> to vector<32x128xf32>
    %20 = arith.mulf %11, %19 : vector<32x128xf32>
    %21 = arith.truncf %20 : vector<32x128xf32> to vector<32x128xbf16>
    %c0_11 = arith.constant 0 : index
    %c0_12 = arith.constant 0 : index
    %c0_13 = arith.constant 0 : index
    %22 = vector.load %arg8[%c0_11, %c0_12, %c0_13] : memref<1x32x128xbf16, #tpu.memory_space<vmem>>, vector<1x32x128xbf16>
    %23 = vector.shape_cast %22 : vector<1x32x128xbf16> to vector<32x128xbf16>
    %24 = vector.shape_cast %21 : vector<32x128xbf16> to vector<1x32x128xbf16>
    tpu.vector_store %arg8[%c0_11, %c0_12, %c0_13], %24 {strides = array<i32>} : memref<1x32x128xbf16, #tpu.memory_space<vmem>>, vector<1x32x128xbf16>,
    return
  }
  func.func @transform_0(%arg0: i32, %arg1: i32, %arg2: memref<2xi32, #tpu.memory_space<smem>>) -> (i32, i32) {
    %c0_i32 = arith.constant 0 : i32
    %c0_i32_0 = arith.constant 0 : i32
    %c0_i32_1 = arith.constant 0 : i32
    return %c0_i32, %c0_i32_0 : i32, i32
  }
  func.func @transform_1(%arg0: i32, %arg1: i32, %arg2: memref<2xi32, #tpu.memory_space<smem>>) -> (i32, i32) {
    %c0_i32 = arith.constant 0 : i32
    %c0_i32_0 = arith.constant 0 : i32
    %c0_i32_1 = arith.constant 0 : i32
    return %c0_i32, %c0_i32_0 : i32, i32
  }
  func.func @transform_2(%arg0: i32, %arg1: i32, %arg2: memref<2xi32, #tpu.memory_space<smem>>) -> (i32, i32) {
    %c0_i32 = arith.constant 0 : i32
    %c0_i32_0 = arith.constant 0 : i32
    %c0_i32_1 = arith.constant 0 : i32
    return %c0_i32, %c0_i32_0 : i32, i32
  }
  func.func @transform_3(%arg0: i32, %arg1: i32, %arg2: memref<2xi32, #tpu.memory_space<smem>>) -> (i32, i32) {
    %c0_i32 = arith.constant 0 : i32
    %c0_i32_0 = arith.constant 0 : i32
    return %c0_i32, %arg1 : i32, i32
  }
  func.func @transform_4(%arg0: i32, %arg1: i32, %arg2: memref<2xi32, #tpu.memory_space<smem>>) -> (i32, i32, i32) {
    %c0_i32 = arith.constant 0 : i32
    %c0_i32_0 = arith.constant 0 : i32
    return %arg0, %c0_i32, %arg1 : i32, i32, i32
  }
  func.func @transform_5(%arg0: i32, %arg1: i32, %arg2: memref<2xi32, #tpu.memory_space<smem>>) -> (i32, i32, i32) {
    %c0_i32 = arith.constant 0 : i32
    %c0_i32_0 = arith.constant 0 : i32
    return %arg0, %c0_i32, %arg1 : i32, i32, i32
  }
}

module attributes {stable_mosaic.version = 11 : i64} {
  func.func @_bigru_kernel(%arg0: i32, %arg1: memref<64x256xbf16, #tpu.memory_space<vmem>>, %arg2: memref<64x256xbf16, #tpu.memory_space<vmem>>, %arg3: memref<64x1xf32, #tpu.memory_space<vmem>>, %arg4: memref<256x96xbf16, #tpu.memory_space<vmem>>, %arg5: memref<1x96xf32, #tpu.memory_space<vmem>>, %arg6: memref<256x96xbf16, #tpu.memory_space<vmem>>, %arg7: memref<1x96xf32, #tpu.memory_space<vmem>>, %arg8: memref<32x96xf32, #tpu.memory_space<vmem>>, %arg9: memref<1x32xf32, #tpu.memory_space<vmem>>, %arg10: memref<32x96xf32, #tpu.memory_space<vmem>>, %arg11: memref<1x32xf32, #tpu.memory_space<vmem>>, %arg12: memref<64x32xbf16, #tpu.memory_space<vmem>>, %arg13: memref<64x32xbf16, #tpu.memory_space<vmem>>, %arg14: memref<8x32xf32, #tpu.memory_space<vmem>>, %arg15: memref<8x32xf32, #tpu.memory_space<vmem>>, %arg16: memref<64x96xf32, #tpu.memory_space<vmem>>, %arg17: memref<64x96xf32, #tpu.memory_space<vmem>>) attributes {dimension_semantics = [#tpu.dimension_semantics<arbitrary>], iteration_bounds = array<i64: 1>, scalar_prefetch = 0 : i64, scratch_operands = 4 : i64, tpu.core_type = #tpu.core_type<tc>, window_params = [{transform_indices = @transform_0, window_bounds = array<i64: 64, 256>}, {transform_indices = @transform_1, window_bounds = array<i64: 64, 256>}, {transform_indices = @transform_2, window_bounds = array<i64: 64, 1>}, {pipeline_mode = #tpu.pipeline_mode<synchronous>, transform_indices = @transform_3, window_bounds = array<i64: 256, 96>}, {pipeline_mode = #tpu.pipeline_mode<synchronous>, transform_indices = @transform_4, window_bounds = array<i64: 1, 96>}, {pipeline_mode = #tpu.pipeline_mode<synchronous>, transform_indices = @transform_5, window_bounds = array<i64: 256, 96>}, {pipeline_mode = #tpu.pipeline_mode<synchronous>, transform_indices = @transform_6, window_bounds = array<i64: 1, 96>}, {pipeline_mode = #tpu.pipeline_mode<synchronous>, transform_indices = @transform_7, window_bounds = array<i64: 32, 96>}, {pipeline_mode = #tpu.pipeline_mode<synchronous>, transform_indices = @transform_8, window_bounds = array<i64: 1, 32>}, {pipeline_mode = #tpu.pipeline_mode<synchronous>, transform_indices = @transform_9, window_bounds = array<i64: 32, 96>}, {pipeline_mode = #tpu.pipeline_mode<synchronous>, transform_indices = @transform_10, window_bounds = array<i64: 1, 32>}, {transform_indices = @transform_11, window_bounds = array<i64: 64, 32>}, {transform_indices = @transform_12, window_bounds = array<i64: 64, 32>}]} {
    %c0_i32 = arith.constant 0 : i32
    %0 = arith.cmpi eq, %arg0, %c0_i32 : i32
    %1 = arith.extui %0 : i1 to i32
    %c0_i32_0 = arith.constant 0 : i32
    %2 = arith.cmpi ne, %1, %c0_i32_0 : i32
    scf.if %2 {
      %cst_35 = arith.constant 0.000000e+00 : f32
      %27 = vector.broadcast %cst_35 : f32 to vector<8x32xf32>
      %c0_36 = arith.constant 0 : index
      %c0_37 = arith.constant 0 : index
      %28 = vector.load %arg14[%c0_36, %c0_37] : memref<8x32xf32, #tpu.memory_space<vmem>>, vector<8x32xf32>
      tpu.vector_store %arg14[%c0_36, %c0_37], %27 {strides = array<i32>} : memref<8x32xf32, #tpu.memory_space<vmem>>, vector<8x32xf32>,
      %cst_38 = arith.constant 0.000000e+00 : f32
      %29 = vector.broadcast %cst_38 : f32 to vector<8x32xf32>
      %c0_39 = arith.constant 0 : index
      %c0_40 = arith.constant 0 : index
      %30 = vector.load %arg15[%c0_39, %c0_40] : memref<8x32xf32, #tpu.memory_space<vmem>>, vector<8x32xf32>
      tpu.vector_store %arg15[%c0_39, %c0_40], %29 {strides = array<i32>} : memref<8x32xf32, #tpu.memory_space<vmem>>, vector<8x32xf32>,
    } else {
    }
    %c0 = arith.constant 0 : index
    %c0_1 = arith.constant 0 : index
    %3 = vector.load %arg1[%c0, %c0_1] : memref<64x256xbf16, #tpu.memory_space<vmem>>, vector<64x256xbf16>
    %c0_2 = arith.constant 0 : index
    %c0_3 = arith.constant 0 : index
    %4 = vector.load %arg4[%c0_2, %c0_3] : memref<256x96xbf16, #tpu.memory_space<vmem>>, vector<256x96xbf16>
    %cst = arith.constant dense<0.000000e+00> : vector<64x96xf32>
    %5 = tpu.matmul %3, %4, %cst {dimension_numbers = #tpu.dot_dimension_numbers<[1], [0], [0], [1], [0, 0, 1, 1], [], []>} : vector<64x256xbf16>, vector<256x96xbf16>, vector<64x96xf32> -> vector<64x96xf32>
    %c0_4 = arith.constant 0 : index
    %c0_5 = arith.constant 0 : index
    %6 = vector.load %arg5[%c0_4, %c0_5] : memref<1x96xf32, #tpu.memory_space<vmem>>, vector<1x96xf32>
    %7 = vector.broadcast %6 : vector<1x96xf32> to vector<64x96xf32>
    %8 = arith.addf %5, %7 : vector<64x96xf32>
    %c0_6 = arith.constant 0 : index
    %c0_7 = arith.constant 0 : index
    %9 = vector.load %arg16[%c0_6, %c0_7] : memref<64x96xf32, #tpu.memory_space<vmem>>, vector<64x96xf32>
    tpu.vector_store %arg16[%c0_6, %c0_7], %8 {strides = array<i32>} : memref<64x96xf32, #tpu.memory_space<vmem>>, vector<64x96xf32>,
    %c0_8 = arith.constant 0 : index
    %c0_9 = arith.constant 0 : index
    %10 = vector.load %arg2[%c0_8, %c0_9] : memref<64x256xbf16, #tpu.memory_space<vmem>>, vector<64x256xbf16>
    %c0_10 = arith.constant 0 : index
    %c0_11 = arith.constant 0 : index
    %11 = vector.load %arg6[%c0_10, %c0_11] : memref<256x96xbf16, #tpu.memory_space<vmem>>, vector<256x96xbf16>
    %cst_12 = arith.constant dense<0.000000e+00> : vector<64x96xf32>
    %12 = tpu.matmul %10, %11, %cst_12 {dimension_numbers = #tpu.dot_dimension_numbers<[1], [0], [0], [1], [0, 0, 1, 1], [], []>} : vector<64x256xbf16>, vector<256x96xbf16>, vector<64x96xf32> -> vector<64x96xf32>
    %c0_13 = arith.constant 0 : index
    %c0_14 = arith.constant 0 : index
    %13 = vector.load %arg7[%c0_13, %c0_14] : memref<1x96xf32, #tpu.memory_space<vmem>>, vector<1x96xf32>
    %14 = vector.broadcast %13 : vector<1x96xf32> to vector<64x96xf32>
    %15 = arith.addf %12, %14 : vector<64x96xf32>
    %c0_15 = arith.constant 0 : index
    %c0_16 = arith.constant 0 : index
    %16 = vector.load %arg17[%c0_15, %c0_16] : memref<64x96xf32, #tpu.memory_space<vmem>>, vector<64x96xf32>
    tpu.vector_store %arg17[%c0_15, %c0_16], %15 {strides = array<i32>} : memref<64x96xf32, #tpu.memory_space<vmem>>, vector<64x96xf32>,
    %c0_17 = arith.constant 0 : index
    %c0_18 = arith.constant 0 : index
    %17 = vector.load %arg8[%c0_17, %c0_18] : memref<32x96xf32, #tpu.memory_space<vmem>>, vector<32x96xf32>
    %c0_19 = arith.constant 0 : index
    %c0_20 = arith.constant 0 : index
    %18 = vector.load %arg10[%c0_19, %c0_20] : memref<32x96xf32, #tpu.memory_space<vmem>>, vector<32x96xf32>
    %c0_21 = arith.constant 0 : index
    %c0_22 = arith.constant 0 : index
    %19 = vector.load %arg9[%c0_21, %c0_22] : memref<1x32xf32, #tpu.memory_space<vmem>>, vector<1x32xf32>
    %c0_23 = arith.constant 0 : index
    %c0_24 = arith.constant 0 : index
    %20 = vector.load %arg11[%c0_23, %c0_24] : memref<1x32xf32, #tpu.memory_space<vmem>>, vector<1x32xf32>
    %c0_25 = arith.constant 0 : index
    %c0_26 = arith.constant 0 : index
    %21 = vector.load %arg14[%c0_25, %c0_26] : memref<8x32xf32, #tpu.memory_space<vmem>>, vector<8x32xf32>
    %c0_27 = arith.constant 0 : index
    %c0_28 = arith.constant 0 : index
    %22 = vector.load %arg15[%c0_27, %c0_28] : memref<8x32xf32, #tpu.memory_space<vmem>>, vector<8x32xf32>
    %c0_i32_29 = arith.constant 0 : i32
    %c8_i32 = arith.constant 8 : i32
    %23 = arith.addi %c0_i32_29, %c8_i32 : i32
    %c1_i32 = arith.constant 1 : i32
    %24:2 = scf.for %arg18 = %c0_i32_29 to %23 step %c1_i32 iter_args(%arg19 = %21, %arg20 = %22) -> (vector<8x32xf32>, vector<8x32xf32>)  : i32 {
      %c8_i32_35 = arith.constant 8 : i32
      %27 = arith.muli %arg18, %c8_i32_35 : i32
      %28 = tpu.assume_multiple %27, 8 : i32
      %29 = arith.index_cast %28 : i32 to index
      %c0_36 = arith.constant 0 : index
      %30 = vector.load %arg16[%29, %c0_36] : memref<64x96xf32, #tpu.memory_space<vmem>>, vector<8x96xf32>
      %cst_37 = arith.constant dense<0.000000e+00> : vector<8x96xf32>
      %31 = tpu.matmul %arg19, %17, %cst_37 {dimension_numbers = #tpu.dot_dimension_numbers<[1], [0], [0], [1], [0, 0, 1, 1], [], []>} : vector<8x32xf32>, vector<32x96xf32>, vector<8x96xf32> -> vector<8x96xf32>
      %32 = vector.extract_strided_slice %30 {offsets = [0, 0], sizes = [8, 32], strides = [1, 1]} : vector<8x96xf32> to vector<8x32xf32>
      %33 = vector.extract_strided_slice %31 {offsets = [0, 0], sizes = [8, 32], strides = [1, 1]} : vector<8x96xf32> to vector<8x32xf32>
      %34 = arith.addf %32, %33 : vector<8x32xf32>
      %35 = arith.negf %34 : vector<8x32xf32>
      %36 = math.exp %35 : vector<8x32xf32>
      %cst_38 = arith.constant 1.000000e+00 : f32
      %37 = vector.broadcast %cst_38 : f32 to vector<8x32xf32>
      %38 = arith.addf %37, %36 : vector<8x32xf32>
      %39 = arith.divf %37, %38 : vector<8x32xf32>
      %40 = vector.extract_strided_slice %30 {offsets = [0, 32], sizes = [8, 32], strides = [1, 1]} : vector<8x96xf32> to vector<8x32xf32>
      %41 = vector.extract_strided_slice %31 {offsets = [0, 32], sizes = [8, 32], strides = [1, 1]} : vector<8x96xf32> to vector<8x32xf32>
      %42 = arith.addf %40, %41 : vector<8x32xf32>
      %43 = arith.negf %42 : vector<8x32xf32>
      %44 = math.exp %43 : vector<8x32xf32>
      %cst_39 = arith.constant 1.000000e+00 : f32
      %45 = vector.broadcast %cst_39 : f32 to vector<8x32xf32>
      %46 = arith.addf %45, %44 : vector<8x32xf32>
      %47 = arith.divf %45, %46 : vector<8x32xf32>
      %48 = vector.extract_strided_slice %30 {offsets = [0, 64], sizes = [8, 32], strides = [1, 1]} : vector<8x96xf32> to vector<8x32xf32>
      %49 = vector.extract_strided_slice %31 {offsets = [0, 64], sizes = [8, 32], strides = [1, 1]} : vector<8x96xf32> to vector<8x32xf32>
      %50 = vector.broadcast %19 : vector<1x32xf32> to vector<8x32xf32>
      %51 = arith.addf %49, %50 : vector<8x32xf32>
      %52 = arith.mulf %39, %51 : vector<8x32xf32>
      %53 = arith.addf %48, %52 : vector<8x32xf32>
      %54 = math.tanh %53 : vector<8x32xf32>
      %cst_40 = arith.constant 1.000000e+00 : f32
      %55 = vector.broadcast %cst_40 : f32 to vector<8x32xf32>
      %56 = arith.subf %55, %47 : vector<8x32xf32>
      %57 = arith.mulf %56, %54 : vector<8x32xf32>
      %58 = arith.mulf %47, %arg19 : vector<8x32xf32>
      %59 = arith.addf %57, %58 : vector<8x32xf32>
      %60 = arith.truncf %59 : vector<8x32xf32> to vector<8x32xbf16>
      %61 = arith.index_cast %28 : i32 to index
      %c0_41 = arith.constant 0 : index
      %62 = vector.load %arg12[%61, %c0_41] : memref<64x32xbf16, #tpu.memory_space<vmem>>, vector<8x32xbf16>
      tpu.vector_store %arg12[%61, %c0_41], %60 {strides = array<i32>} : memref<64x32xbf16, #tpu.memory_space<vmem>>, vector<8x32xbf16>,
      %c7_i32 = arith.constant 7 : i32
      %63 = arith.subi %c7_i32, %arg18 : i32
      %c8_i32_42 = arith.constant 8 : i32
      %64 = arith.muli %63, %c8_i32_42 : i32
      %65 = tpu.assume_multiple %64, 8 : i32
      %66 = arith.index_cast %65 : i32 to index
      %c0_43 = arith.constant 0 : index
      %67 = vector.load %arg17[%66, %c0_43] : memref<64x96xf32, #tpu.memory_space<vmem>>, vector<8x96xf32>
      %cst_44 = arith.constant dense<0.000000e+00> : vector<8x96xf32>
      %68 = tpu.matmul %arg20, %18, %cst_44 {dimension_numbers = #tpu.dot_dimension_numbers<[1], [0], [0], [1], [0, 0, 1, 1], [], []>} : vector<8x32xf32>, vector<32x96xf32>, vector<8x96xf32> -> vector<8x96xf32>
      %69 = vector.extract_strided_slice %67 {offsets = [0, 0], sizes = [8, 32], strides = [1, 1]} : vector<8x96xf32> to vector<8x32xf32>
      %70 = vector.extract_strided_slice %68 {offsets = [0, 0], sizes = [8, 32], strides = [1, 1]} : vector<8x96xf32> to vector<8x32xf32>
      %71 = arith.addf %69, %70 : vector<8x32xf32>
      %72 = arith.negf %71 : vector<8x32xf32>
      %73 = math.exp %72 : vector<8x32xf32>
      %cst_45 = arith.constant 1.000000e+00 : f32
      %74 = vector.broadcast %cst_45 : f32 to vector<8x32xf32>
      %75 = arith.addf %74, %73 : vector<8x32xf32>
      %76 = arith.divf %74, %75 : vector<8x32xf32>
      %77 = vector.extract_strided_slice %67 {offsets = [0, 32], sizes = [8, 32], strides = [1, 1]} : vector<8x96xf32> to vector<8x32xf32>
      %78 = vector.extract_strided_slice %68 {offsets = [0, 32], sizes = [8, 32], strides = [1, 1]} : vector<8x96xf32> to vector<8x32xf32>
      %79 = arith.addf %77, %78 : vector<8x32xf32>
      %80 = arith.negf %79 : vector<8x32xf32>
      %81 = math.exp %80 : vector<8x32xf32>
      %cst_46 = arith.constant 1.000000e+00 : f32
      %82 = vector.broadcast %cst_46 : f32 to vector<8x32xf32>
      %83 = arith.addf %82, %81 : vector<8x32xf32>
      %84 = arith.divf %82, %83 : vector<8x32xf32>
      %85 = vector.extract_strided_slice %67 {offsets = [0, 64], sizes = [8, 32], strides = [1, 1]} : vector<8x96xf32> to vector<8x32xf32>
      %86 = vector.extract_strided_slice %68 {offsets = [0, 64], sizes = [8, 32], strides = [1, 1]} : vector<8x96xf32> to vector<8x32xf32>
      %87 = vector.broadcast %20 : vector<1x32xf32> to vector<8x32xf32>
      %88 = arith.addf %86, %87 : vector<8x32xf32>
      %89 = arith.mulf %76, %88 : vector<8x32xf32>
      %90 = arith.addf %85, %89 : vector<8x32xf32>
      %91 = math.tanh %90 : vector<8x32xf32>
      %cst_47 = arith.constant 1.000000e+00 : f32
      %92 = vector.broadcast %cst_47 : f32 to vector<8x32xf32>
      %93 = arith.subf %92, %84 : vector<8x32xf32>
      %94 = arith.mulf %93, %91 : vector<8x32xf32>
      %95 = arith.mulf %84, %arg20 : vector<8x32xf32>
      %96 = arith.addf %94, %95 : vector<8x32xf32>
      %97 = arith.index_cast %65 : i32 to index
      %c0_48 = arith.constant 0 : index
      %98 = vector.load %arg3[%97, %c0_48] : memref<64x1xf32, #tpu.memory_space<vmem>>, vector<8x1xf32>
      %99 = vector.broadcast %98 : vector<8x1xf32> to vector<8x32xf32>
      %100 = arith.mulf %96, %99 : vector<8x32xf32>
      %101 = arith.truncf %100 : vector<8x32xf32> to vector<8x32xbf16>
      %102 = arith.index_cast %65 : i32 to index
      %c0_49 = arith.constant 0 : index
      %103 = vector.load %arg13[%102, %c0_49] : memref<64x32xbf16, #tpu.memory_space<vmem>>, vector<8x32xbf16>
      tpu.vector_store %arg13[%102, %c0_49], %101 {strides = array<i32>} : memref<64x32xbf16, #tpu.memory_space<vmem>>, vector<8x32xbf16>,
      scf.yield %59, %100 : vector<8x32xf32>, vector<8x32xf32>
    }
    %c8_i32_30 = arith.constant 8 : i32
    %c0_31 = arith.constant 0 : index
    %c0_32 = arith.constant 0 : index
    %25 = vector.load %arg14[%c0_31, %c0_32] : memref<8x32xf32, #tpu.memory_space<vmem>>, vector<8x32xf32>
    tpu.vector_store %arg14[%c0_31, %c0_32], %24#0 {strides = array<i32>} : memref<8x32xf32, #tpu.memory_space<vmem>>, vector<8x32xf32>,
    %c0_33 = arith.constant 0 : index
    %c0_34 = arith.constant 0 : index
    %26 = vector.load %arg15[%c0_33, %c0_34] : memref<8x32xf32, #tpu.memory_space<vmem>>, vector<8x32xf32>
    tpu.vector_store %arg15[%c0_33, %c0_34], %24#1 {strides = array<i32>} : memref<8x32xf32, #tpu.memory_space<vmem>>, vector<8x32xf32>,
    return
  }
  func.func @transform_0(%arg0: i32) -> (i32, i32) {
    %c0_i32 = arith.constant 0 : i32
    %c0_i32_0 = arith.constant 0 : i32
    return %arg0, %c0_i32 : i32, i32
  }
  func.func @transform_1(%arg0: i32) -> (i32, i32) {
    %c0_i32 = arith.constant 0 : i32
    %0 = arith.subi %c0_i32, %arg0 : i32
    %c0_i32_0 = arith.constant 0 : i32
    %c0_i32_1 = arith.constant 0 : i32
    return %0, %c0_i32_0 : i32, i32
  }
  func.func @transform_2(%arg0: i32) -> (i32, i32) {
    %c0_i32 = arith.constant 0 : i32
    %0 = arith.subi %c0_i32, %arg0 : i32
    %c0_i32_0 = arith.constant 0 : i32
    %c0_i32_1 = arith.constant 0 : i32
    return %0, %c0_i32_0 : i32, i32
  }
  func.func @transform_3(%arg0: i32) -> (i32, i32) {
    %c0_i32 = arith.constant 0 : i32
    %c0_i32_0 = arith.constant 0 : i32
    %c0_i32_1 = arith.constant 0 : i32
    return %c0_i32, %c0_i32_0 : i32, i32
  }
  func.func @transform_4(%arg0: i32) -> (i32, i32) {
    %c0_i32 = arith.constant 0 : i32
    %c0_i32_0 = arith.constant 0 : i32
    %c0_i32_1 = arith.constant 0 : i32
    return %c0_i32, %c0_i32_0 : i32, i32
  }
  func.func @transform_5(%arg0: i32) -> (i32, i32) {
    %c0_i32 = arith.constant 0 : i32
    %c0_i32_0 = arith.constant 0 : i32
    %c0_i32_1 = arith.constant 0 : i32
    return %c0_i32, %c0_i32_0 : i32, i32
  }
  func.func @transform_6(%arg0: i32) -> (i32, i32) {
    %c0_i32 = arith.constant 0 : i32
    %c0_i32_0 = arith.constant 0 : i32
    %c0_i32_1 = arith.constant 0 : i32
    return %c0_i32, %c0_i32_0 : i32, i32
  }
  func.func @transform_7(%arg0: i32) -> (i32, i32) {
    %c0_i32 = arith.constant 0 : i32
    %c0_i32_0 = arith.constant 0 : i32
    %c0_i32_1 = arith.constant 0 : i32
    return %c0_i32, %c0_i32_0 : i32, i32
  }
  func.func @transform_8(%arg0: i32) -> (i32, i32) {
    %c0_i32 = arith.constant 0 : i32
    %c0_i32_0 = arith.constant 0 : i32
    %c0_i32_1 = arith.constant 0 : i32
    return %c0_i32, %c0_i32_0 : i32, i32
  }
  func.func @transform_9(%arg0: i32) -> (i32, i32) {
    %c0_i32 = arith.constant 0 : i32
    %c0_i32_0 = arith.constant 0 : i32
    %c0_i32_1 = arith.constant 0 : i32
    return %c0_i32, %c0_i32_0 : i32, i32
  }
  func.func @transform_10(%arg0: i32) -> (i32, i32) {
    %c0_i32 = arith.constant 0 : i32
    %c0_i32_0 = arith.constant 0 : i32
    %c0_i32_1 = arith.constant 0 : i32
    return %c0_i32, %c0_i32_0 : i32, i32
  }
  func.func @transform_11(%arg0: i32) -> (i32, i32) {
    %c0_i32 = arith.constant 0 : i32
    %c0_i32_0 = arith.constant 0 : i32
    return %arg0, %c0_i32 : i32, i32
  }
  func.func @transform_12(%arg0: i32) -> (i32, i32) {
    %c0_i32 = arith.constant 0 : i32
    %0 = arith.subi %c0_i32, %arg0 : i32
    %c0_i32_0 = arith.constant 0 : i32
    %c0_i32_1 = arith.constant 0 : i32
    return %0, %c0_i32_0 : i32, i32
  }
}

module attributes {stable_mosaic.version = 11 : i64} {
  func.func @_head_kernel(%arg0: i32, %arg1: memref<64x32xbf16, #tpu.memory_space<vmem>>, %arg2: memref<64x32xbf16, #tpu.memory_space<vmem>>, %arg3: memref<64x1xf32, #tpu.memory_space<vmem>>, %arg4: memref<32x128xbf16, #tpu.memory_space<vmem>>, %arg5: memref<1x128xf32, #tpu.memory_space<vmem>>, %arg6: memref<1x128xf32, #tpu.memory_space<vmem>>, %arg7: memref<128x128xbf16, #tpu.memory_space<vmem>>, %arg8: memref<1x128xf32, #tpu.memory_space<vmem>>, %arg9: memref<64x128xf32, #tpu.memory_space<vmem>>) attributes {dimension_semantics = [#tpu.dimension_semantics<parallel>], iteration_bounds = array<i64: 1>, scalar_prefetch = 0 : i64, scratch_operands = 0 : i64, tpu.core_type = #tpu.core_type<tc>, window_params = [{transform_indices = @transform_0, window_bounds = array<i64: 64, 32>}, {transform_indices = @transform_1, window_bounds = array<i64: 64, 32>}, {transform_indices = @transform_2, window_bounds = array<i64: 64, 1>}, {pipeline_mode = #tpu.pipeline_mode<synchronous>, transform_indices = @transform_3, window_bounds = array<i64: 32, 128>}, {pipeline_mode = #tpu.pipeline_mode<synchronous>, transform_indices = @transform_4, window_bounds = array<i64: 1, 128>}, {pipeline_mode = #tpu.pipeline_mode<synchronous>, transform_indices = @transform_5, window_bounds = array<i64: 1, 128>}, {pipeline_mode = #tpu.pipeline_mode<synchronous>, transform_indices = @transform_6, window_bounds = array<i64: 128, 128>}, {pipeline_mode = #tpu.pipeline_mode<synchronous>, transform_indices = @transform_7, window_bounds = array<i64: 1, 128>}, {transform_indices = @transform_8, window_bounds = array<i64: 64, 128>}]} {
    %c0 = arith.constant 0 : index
    %c0_0 = arith.constant 0 : index
    %0 = vector.load %arg1[%c0, %c0_0] : memref<64x32xbf16, #tpu.memory_space<vmem>>, vector<64x32xbf16>
    %c0_1 = arith.constant 0 : index
    %c0_2 = arith.constant 0 : index
    %1 = vector.load %arg2[%c0_1, %c0_2] : memref<64x32xbf16, #tpu.memory_space<vmem>>, vector<64x32xbf16>
    %2 = arith.addf %0, %1 : vector<64x32xbf16>
    %c0_3 = arith.constant 0 : index
    %c0_4 = arith.constant 0 : index
    %3 = vector.load %arg4[%c0_3, %c0_4] : memref<32x128xbf16, #tpu.memory_space<vmem>>, vector<32x128xbf16>
    %cst = arith.constant dense<0.000000e+00> : vector<64x128xf32>
    %4 = tpu.matmul %2, %3, %cst {dimension_numbers = #tpu.dot_dimension_numbers<[1], [0], [0], [1], [0, 0, 1, 1], [], []>} : vector<64x32xbf16>, vector<32x128xbf16>, vector<64x128xf32> -> vector<64x128xf32>
    %c0_5 = arith.constant 0 : index
    %c0_6 = arith.constant 0 : index
    %5 = vector.load %arg5[%c0_5, %c0_6] : memref<1x128xf32, #tpu.memory_space<vmem>>, vector<1x128xf32>
    %6 = vector.broadcast %5 : vector<1x128xf32> to vector<64x128xf32>
    %7 = arith.mulf %4, %6 : vector<64x128xf32>
    %c0_7 = arith.constant 0 : index
    %c0_8 = arith.constant 0 : index
    %8 = vector.load %arg6[%c0_7, %c0_8] : memref<1x128xf32, #tpu.memory_space<vmem>>, vector<1x128xf32>
    %9 = vector.broadcast %8 : vector<1x128xf32> to vector<64x128xf32>
    %10 = arith.addf %7, %9 : vector<64x128xf32>
    %cst_9 = arith.constant 0.000000e+00 : f32
    %11 = vector.broadcast %cst_9 : f32 to vector<64x128xf32>
    %12 = arith.maximumf %10, %11 : vector<64x128xf32>
    %13 = arith.truncf %12 : vector<64x128xf32> to vector<64x128xbf16>
    %c0_10 = arith.constant 0 : index
    %c0_11 = arith.constant 0 : index
    %14 = vector.load %arg7[%c0_10, %c0_11] : memref<128x128xbf16, #tpu.memory_space<vmem>>, vector<128x128xbf16>
    %cst_12 = arith.constant dense<0.000000e+00> : vector<64x128xf32>
    %15 = tpu.matmul %13, %14, %cst_12 {dimension_numbers = #tpu.dot_dimension_numbers<[1], [0], [0], [1], [0, 0, 1, 1], [], []>} : vector<64x128xbf16>, vector<128x128xbf16>, vector<64x128xf32> -> vector<64x128xf32>
    %c0_13 = arith.constant 0 : index
    %c0_14 = arith.constant 0 : index
    %16 = vector.load %arg8[%c0_13, %c0_14] : memref<1x128xf32, #tpu.memory_space<vmem>>, vector<1x128xf32>
    %17 = vector.broadcast %16 : vector<1x128xf32> to vector<64x128xf32>
    %18 = arith.addf %15, %17 : vector<64x128xf32>
    %cst_15 = arith.constant dense<0xFF800000> : vector<64xf32>
    %19 = vector.multi_reduction <maximumf>, %18, %cst_15 [1] : vector<64x128xf32> to vector<64xf32>
    %20 = vector.shape_cast %19 : vector<64xf32> to vector<64x1xf32>
    %21 = vector.broadcast %20 : vector<64x1xf32> to vector<64x128xf32>
    %22 = arith.subf %18, %21 : vector<64x128xf32>
    %23 = math.exp %22 : vector<64x128xf32>
    %cst_16 = arith.constant dense<0.000000e+00> : vector<64xf32>
    %24 = vector.multi_reduction <add>, %23, %cst_16 [1] : vector<64x128xf32> to vector<64xf32>
    %25 = vector.shape_cast %24 : vector<64xf32> to vector<64x1xf32>
    %26 = math.log %25 : vector<64x1xf32>
    %27 = vector.broadcast %26 : vector<64x1xf32> to vector<64x128xf32>
    %28 = arith.subf %22, %27 : vector<64x128xf32>
    %c0_17 = arith.constant 0 : index
    %c0_18 = arith.constant 0 : index
    %29 = vector.load %arg3[%c0_17, %c0_18] : memref<64x1xf32, #tpu.memory_space<vmem>>, vector<64x1xf32>
    %30 = vector.broadcast %29 : vector<64x1xf32> to vector<64x128xf32>
    %31 = arith.mulf %28, %30 : vector<64x128xf32>
    %c0_19 = arith.constant 0 : index
    %c0_20 = arith.constant 0 : index
    %32 = vector.load %arg9[%c0_19, %c0_20] : memref<64x128xf32, #tpu.memory_space<vmem>>, vector<64x128xf32>
    tpu.vector_store %arg9[%c0_19, %c0_20], %31 {strides = array<i32>} : memref<64x128xf32, #tpu.memory_space<vmem>>, vector<64x128xf32>,
    return
  }
  func.func @transform_0(%arg0: i32) -> (i32, i32) {
    %c0_i32 = arith.constant 0 : i32
    %c0_i32_0 = arith.constant 0 : i32
    return %arg0, %c0_i32 : i32, i32
  }
  func.func @transform_1(%arg0: i32) -> (i32, i32) {
    %c0_i32 = arith.constant 0 : i32
    %c0_i32_0 = arith.constant 0 : i32
    return %arg0, %c0_i32 : i32, i32
  }
  func.func @transform_2(%arg0: i32) -> (i32, i32) {
    %c0_i32 = arith.constant 0 : i32
    %c0_i32_0 = arith.constant 0 : i32
    return %arg0, %c0_i32 : i32, i32
  }
  func.func @transform_3(%arg0: i32) -> (i32, i32) {
    %c0_i32 = arith.constant 0 : i32
    %c0_i32_0 = arith.constant 0 : i32
    %c0_i32_1 = arith.constant 0 : i32
    return %c0_i32, %c0_i32_0 : i32, i32
  }
  func.func @transform_4(%arg0: i32) -> (i32, i32) {
    %c0_i32 = arith.constant 0 : i32
    %c0_i32_0 = arith.constant 0 : i32
    %c0_i32_1 = arith.constant 0 : i32
    return %c0_i32, %c0_i32_0 : i32, i32
  }
  func.func @transform_5(%arg0: i32) -> (i32, i32) {
    %c0_i32 = arith.constant 0 : i32
    %c0_i32_0 = arith.constant 0 : i32
    %c0_i32_1 = arith.constant 0 : i32
    return %c0_i32, %c0_i32_0 : i32, i32
  }
  func.func @transform_6(%arg0: i32) -> (i32, i32) {
    %c0_i32 = arith.constant 0 : i32
    %c0_i32_0 = arith.constant 0 : i32
    %c0_i32_1 = arith.constant 0 : i32
    return %c0_i32, %c0_i32_0 : i32, i32
  }
  func.func @transform_7(%arg0: i32) -> (i32, i32) {
    %c0_i32 = arith.constant 0 : i32
    %c0_i32_0 = arith.constant 0 : i32
    %c0_i32_1 = arith.constant 0 : i32
    return %c0_i32, %c0_i32_0 : i32, i32
  }
  func.func @transform_8(%arg0: i32) -> (i32, i32) {
    %c0_i32 = arith.constant 0 : i32
    %c0_i32_0 = arith.constant 0 : i32
    return %arg0, %c0_i32 : i32, i32
  }
}

</mosaic_0001>

<llo_original>
// kernel: acoustic_model_forward.4
$region0: #{acoustic_model_forward.4}
  #allocation0 [shape = 'u32[]', space=smem, size = 0x4, offset = 0x4, fixed_abs, tag = 'smem constant byte address 0x4 - core index']
  #allocation1 [shape = 'u32[144,128]{1,0:T(1,128)}', space=vmem, size = 0x12000, scoped, tag = 'internal scratch']
  #allocation2 [shape = 's32[1]{0}', space=sflag, size = 0x4, scoped, tag = 'scoped memory for acoustic_model_forward.4']
  #allocation3 [shape = 'u8[512]{0}', space=smem, size = 0x200, scoped, tag = 'prefetched SMEM operand 0']
  %s0 = inlined_call_operand.vmem [shape: s32[2], index: 0, kind: input, shape index: {}]
  %s1 = inlined_call_operand.vmem [shape: bf16[32,231], index: 1, kind: input, shape index: {}]
  %s2 = inlined_call_operand.vmem [shape: f32[32,1], index: 2, kind: input, shape index: {}]
  %s3 = inlined_call_operand.vmem [shape: f32[32,1], index: 3, kind: input, shape index: {}]
  %s4 = inlined_call_operand.vmem [shape: s32[1,128], index: 4, kind: input, shape index: {}]
  %s5 = inlined_call_operand.vmem [shape: bf16[2,231,128], index: 5, kind: input, shape index: {}]
  %s6 = inlined_call_operand.vmem [shape: bf16[2,32,128], index: 6, kind: output, shape index: {}]
  %s7 = sld [smem:[#allocation0]]
  $region53: #{acoustic_model_forward.4} parent=0
    _
  %s9 = ssub.s32 1, %s7
  %s10 = scalar_select 0, %s9, %s7
  %s11 = sshll.u32 %s0, 4
  %s12 = int_to_ptr.vmem [resolvable:$true] %s11
  %14 = dma.vmem_to_smem %s12, 16, [#allocation3], [#allocation2]
  %15 = dma.done [#allocation2], 16
  %16 = sfence
  loop: start=0, step=1, limit=4
  $region2: #{acoustic_model_forward.4} parent=0 // loop_pre_header
    _
  $region3: #{acoustic_model_forward.4} parent=0 // loop_header
    %s18 = sphi 0, %s22
    %p19 = scmp.ge.s32.totalorder %s18, 4
    %s25 = sphi 0, %s37
    %s26 = sphi 0, %s33
    %s27 = sphi 0, %s25
    %s28 = sphi 0, %s26
    %s29 = sphi 0, %s27
    %s30 = sphi 0, %s28
    %s38 = sphi 0, %s38
    %s40 = sphi 0, %s38
    %s41 = sphi 0, %s40
    %s55 = sphi 0, %s41
    %s59 = sphi 0, %s59
    %s61 = sphi 0, %s59
    %s62 = sphi 0, %s61
    %s76 = sphi 0, %s62
    %s80 = sphi 0, %s80
    %s82 = sphi 0, %s80
    %s83 = sphi 0, %s82
    %s97 = sphi 0, %s83
    %s103 = sphi 0, %s105
    %s106 = sphi 0, %s103
    %s107 = sphi 0, %s106
    %s123 = sphi 0, %s107
    %s131 = sphi 0, %s133
    %s134 = sphi 0, %s131
    %s135 = sphi 0, %s134
    %s151 = sphi 0, %s135
    %s159 = sphi 0, %s161
    %s162 = sphi 0, %s159
    %s163 = sphi 0, %s162
    %s179 = sphi 0, %s163
  $region4: #{acoustic_model_forward.4} parent=0 // loop_header_branch
    %21 = sbr.rel (%p19) target = $region8
  $region5: #{acoustic_model_forward.4} parent=0 // loop_body
    %s23 = ssub.s32 %s18, 1
    %s24 = ssub.s32 %s18, 2
    %s31 = sadd.s32 1, %s26
    %p32 = scmp.ge.s32.totalorder %s31, 1
    %s33 = scalar_select %p32, 0, %s31
    %s34 = sadd.s32 1, %s25
    %s35 = scalar_select %p32, %s34, %s25
    %p36 = scmp.ge.s32.totalorder %s35, 2
    %s37 = scalar_select %p36, 0, %s35
    %s39 = sadd.s32 %s38, 1
    %p42 = scmp.eq.s32.totalorder %s18, 1
    %p43 = scmp.ne.s32.totalorder %s38, %s40
    %p44 = scmp.eq.s32.totalorder %s18, 0
    %p45 = por %p43, %p44
    %p46 = scmp.ne.s32.totalorder %s38, %s40
    %p47 = scmp.eq.s32.totalorder %s23, 1
    %p48 = por %p46, %p47
    %p49 = scmp.ne.s32.totalorder %s40, %s41
    %p50 = scmp.eq.s32.totalorder %s23, 0
    %p51 = por %p49, %p50
    %p52 = scmp.ne.s32.totalorder %s40, %s41
    %p53 = scmp.eq.s32.totalorder %s24, 1
    %p54 = por %p52, %p53
    %p56 = scmp.ne.s32.totalorder %s41, %s55
    %p57 = scmp.eq.s32.totalorder %s24, 0
    %p58 = por %p56, %p57
    %s60 = sadd.s32 %s59, 1
    %p63 = scmp.eq.s32.totalorder %s18, 1
    %p64 = scmp.ne.s32.totalorder %s59, %s61
    %p65 = scmp.eq.s32.totalorder %s18, 0
    %p66 = por %p64, %p65
    %p67 = scmp.ne.s32.totalorder %s59, %s61
    %p68 = scmp.eq.s32.totalorder %s23, 1
    %p69 = por %p67, %p68
    %p70 = scmp.ne.s32.totalorder %s61, %s62
    %p71 = scmp.eq.s32.totalorder %s23, 0
    %p72 = por %p70, %p71
    %p73 = scmp.ne.s32.totalorder %s61, %s62
    %p74 = scmp.eq.s32.totalorder %s24, 1
    %p75 = por %p73, %p74
    %p77 = scmp.ne.s32.totalorder %s62, %s76
    %p78 = scmp.eq.s32.totalorder %s24, 0
    %p79 = por %p77, %p78
    %s81 = sadd.s32 %s80, 1
    %p84 = scmp.eq.s32.totalorder %s18, 1
    %p85 = scmp.ne.s32.totalorder %s80, %s82
    %p86 = scmp.eq.s32.totalorder %s18, 0
    %p87 = por %p85, %p86
    %p88 = scmp.ne.s32.totalorder %s80, %s82
    %p89 = scmp.eq.s32.totalorder %s23, 1
    %p90 = por %p88, %p89
    %p91 = scmp.ne.s32.totalorder %s82, %s83
    %p92 = scmp.eq.s32.totalorder %s23, 0
    %p93 = por %p91, %p92
    %p94 = scmp.ne.s32.totalorder %s82, %s83
    %p95 = scmp.eq.s32.totalorder %s24, 1
    %p96 = por %p94, %p95
    %p98 = scmp.ne.s32.totalorder %s83, %s97
    %p99 = scmp.eq.s32.totalorder %s24, 0
    %p100 = por %p98, %p99
    %s101 = ssub.s32 %s26, %s33
    %p102 = scmp.eq.s32.totalorder %s101, 0
    %s104 = sadd.s32 %s103, 1
    %s105 = scalar_select %p102, %s103, %s104
    %p108 = pneg %p102
    %p109 = scmp.eq.s32.totalorder %s18, 1
    %p110 = por %p108, %p109
    %p111 = scmp.ne.s32.totalorder %s103, %s106
    %p112 = scmp.eq.s32.totalorder %s18, 0
    %p113 = por %p111, %p112
    %p114 = scmp.ne.s32.totalorder %s103, %s106
    %p115 = scmp.eq.s32.totalorder %s23, 1
    %p116 = por %p114, %p115
    %p117 = scmp.ne.s32.totalorder %s106, %s107
    %p118 = scmp.eq.s32.totalorder %s23, 0
    %p119 = por %p117, %p118
    %p120 = scmp.ne.s32.totalorder %s106, %s107
    %p121 = scmp.eq.s32.totalorder %s24, 1
    %p122 = por %p120, %p121
    %p124 = scmp.ne.s32.totalorder %s107, %s123
    %p125 = scmp.eq.s32.totalorder %s24, 0
    %p126 = por %p124, %p125
    %s127 = ssub.s32 %s25, %s37
    %s128 = ssub.s32 %s26, %s33
    %s129 = sor.u32 %s127, %s128
    %p130 = scmp.eq.s32.totalorder %s129, 0
    %s132 = sadd.s32 %s131, 1
    %s133 = scalar_select %p130, %s131, %s132
    %p136 = pneg %p130
    %p137 = scmp.eq.s32.totalorder %s18, 1
    %p138 = por %p136, %p137
    %p139 = scmp.ne.s32.totalorder %s131, %s134
    %p140 = scmp.eq.s32.totalorder %s18, 0
    %p141 = por %p139, %p140
    %p142 = scmp.ne.s32.totalorder %s131, %s134
    %p143 = scmp.eq.s32.totalorder %s23, 1
    %p144 = por %p142, %p143
    %p145 = scmp.ne.s32.totalorder %s134, %s135
    %p146 = scmp.eq.s32.totalorder %s23, 0
    %p147 = por %p145, %p146
    %p148 = scmp.ne.s32.totalorder %s134, %s135
    %p149 = scmp.eq.s32.totalorder %s24, 1
    %p150 = por %p148, %p149
    %p152 = scmp.ne.s32.totalorder %s135, %s151
    %p153 = scmp.eq.s32.totalorder %s24, 0
    %p154 = por %p152, %p153
    %s155 = ssub.s32 %s25, %s37
    %s156 = ssub.s32 %s26, %s33
    %s157 = sor.u32 %s155, %s156
    %p158 = scmp.eq.s32.totalorder %s157, 0
    %s160 = sadd.s32 %s159, 1
    %s161 = scalar_select %p158, %s159, %s160
    %p164 = pneg %p158
    %p165 = scmp.eq.s32.totalorder %s18, 1
    %p166 = por %p164, %p165
    %p167 = scmp.ne.s32.totalorder %s159, %s162
    %p168 = scmp.eq.s32.totalorder %s18, 0
    %p169 = por %p167, %p168
    %p170 = scmp.ne.s32.totalorder %s159, %s162
    %p171 = scmp.eq.s32.totalorder %s23, 1
    %p172 = por %p170, %p171
    %p173 = scmp.ne.s32.totalorder %s162, %s163
    %p174 = scmp.eq.s32.totalorder %s23, 0
    %p175 = por %p173, %p174
    %p176 = scmp.ne.s32.totalorder %s162, %s163
    %p177 = scmp.eq.s32.totalorder %s24, 1
    %p178 = por %p176, %p177
    %p180 = scmp.ne.s32.totalorder %s163, %s179
    %p181 = scmp.eq.s32.totalorder %s24, 0
    %p182 = por %p180, %p181
    %p183 = scmp.le.s32.totalorder 1, %s18
    %p184 = scmp.lt.s32.totalorder %s18, 3
    %p185 = pnand %p183, %p184
    %p186 = pneg %p185
    // Predicated region
    $region9: #{acoustic_model_forward.4} parent=5 // pred_check
      _
    $region10: #{acoustic_model_forward.4} parent=5 // pred_check_branch
      %188 = sbr.rel (%p185) target = $region12
    $region11: #{acoustic_model_forward.4} parent=5 // pred_region
      %s189 = ssub.s32 %s18, 1
      // Predicated region
      $region13: #{acoustic_model_forward.4} parent=11 // pred_check
        %p190 = pneg %p51
      $region14: #{acoustic_model_forward.4} parent=11 // pred_check_branch
        %192 = sbr.rel (%p190) target = $region16
      $region15: #{acoustic_model_forward.4} parent=11 // pred_region
        _
      $region16: #{acoustic_model_forward.4} parent=11 // pred_fallthru
        _
      // Predicated region
      $region17: #{acoustic_model_forward.4} parent=11 // pred_check
        %p193 = pneg %p72
      $region18: #{acoustic_model_forward.4} parent=11 // pred_check_branch
        %195 = sbr.rel (%p193) target = $region20
      $region19: #{acoustic_model_forward.4} parent=11 // pred_region
        _
      $region20: #{acoustic_model_forward.4} parent=11 // pred_fallthru
        _
      // Predicated region
      $region21: #{acoustic_model_forward.4} parent=11 // pred_check
        %p196 = pneg %p93
      $region22: #{acoustic_model_forward.4} parent=11 // pred_check_branch
        %198 = sbr.rel (%p196) target = $region24
      $region23: #{acoustic_model_forward.4} parent=11 // pred_region
        _
      $region24: #{acoustic_model_forward.4} parent=11 // pred_fallthru
        _
      // Predicated region
      $region25: #{acoustic_model_forward.4} parent=11 // pred_check
        %p199 = pneg %p119
      $region26: #{acoustic_model_forward.4} parent=11 // pred_check_branch
        %201 = sbr.rel (%p199) target = $region28
      $region27: #{acoustic_model_forward.4} parent=11 // pred_region
        %p202 = scmp.lt.s32.totalorder %s28, 0
        %s203 = scalar_select %p202, %s28, 0
        %s204 = scalar_lea.vmem %s4, %s203
      $region28: #{acoustic_model_forward.4} parent=11 // pred_fallthru
        _
    $region12: #{acoustic_model_forward.4} parent=5 // pred_fallthru
      _
    %p205 = scmp.lt.s32.totalorder %s18, 2
    // Predicated region
    $region29: #{acoustic_model_forward.4} parent=5 // pred_check
      %p206 = pneg %p205
    $region30: #{acoustic_model_forward.4} parent=5 // pred_check_branch
      %208 = sbr.rel (%p206) target = $region32
    $region31: #{acoustic_model_forward.4} parent=5 // pred_region
      // Predicated region
      $region33: #{acoustic_model_forward.4} parent=31 // pred_check
        %p209 = pneg %p141
      $region34: #{acoustic_model_forward.4} parent=31 // pred_check_branch
        %211 = sbr.rel (%p209) target = $region36
      $region35: #{acoustic_model_forward.4} parent=31 // pred_region
        %p212 = scmp.lt.s32.totalorder %s25, 1
        %s213 = scalar_select %p212, %s25, 1
        %p214 = scmp.lt.s32.totalorder %s26, 0
        %s215 = scalar_select %p214, %s26, 0
        %s216 = smul.addr %s213, 29
        %s217 = sadd.s32 %s215, %s216
        %s218 = smul.addr %s217, 4
        %s219 = scalar_lea.vmem %s5, %s218
      $region36: #{acoustic_model_forward.4} parent=31 // pred_fallthru
        _
    $region32: #{acoustic_model_forward.4} parent=5 // pred_fallthru
      _
    %p220 = scmp.le.s32.totalorder 1, %s18
    %p221 = scmp.lt.s32.totalorder %s18, 3
    %p222 = pnand %p220, %p221
    %p223 = pneg %p222
    // Predicated region
    $region37: #{acoustic_model_forward.4} parent=5 // pred_check
      _
    $region38: #{acoustic_model_forward.4} parent=5 // pred_check_branch
      %225 = sbr.rel (%p222) target = $region40
    $region39: #{acoustic_model_forward.4} parent=5 // pred_region
      %s226 = ssub.s32 %s18, 1
      %p227 = pneg %p51
      %p228 = pneg %p48
      %p229 = pneg %p72
      %p230 = pneg %p69
      %p231 = pneg %p93
      %p232 = pneg %p90
      %p233 = scmp.lt.s32.totalorder %s28, 0
      %s234 = scalar_select %p233, %s28, 0
      %s235 = scalar_lea.vmem %s4, %s234
      %p236 = pneg %p119
      %p237 = pneg %p116
      %p238 = scmp.lt.s32.totalorder %s27, 1
      %s239 = scalar_select %p238, %s27, 1
      %p240 = scmp.lt.s32.totalorder %s28, 0
      %s241 = scalar_select %p240, %s28, 0
      %s242 = smul.addr %s239, 29
      %s243 = sadd.s32 %s241, %s242
      %s244 = smul.addr %s243, 4
      %s245 = scalar_lea.vmem %s5, %s244
      %p246 = pneg %p147
      %p247 = pneg %p144
      %p248 = pneg %p175
      %p249 = pneg %p172
      %p250 = scmp.lt.s32.totalorder %s27, 1
      %s251 = scalar_select %p250, %s27, 1
      %p252 = scmp.lt.s32.totalorder %s28, 0
      %s253 = scalar_select %p252, %s28, 0
      %s254 = smul.addr %s251, 4
      %s255 = sadd.s32 %s253, %s254
      %s256 = smul.addr %s255, 4
      %s257 = scalar_lea.vmem %s6, %s256
      %p258 = scmp.lt.s32.totalorder %s28, 0
      %s259 = scalar_select %p258, %s28, 0
      %s260 = scalar_lea.vmem %s4, %s259
      %p261 = scmp.lt.s32.totalorder %s27, 1
      %s262 = scalar_select %p261, %s27, 1
      %p263 = scmp.lt.s32.totalorder %s28, 0
      %s264 = scalar_select %p263, %s28, 0
      %s265 = smul.addr %s262, 29
      %s266 = sadd.s32 %s264, %s265
      %s267 = smul.addr %s266, 4
      %s268 = scalar_lea.vmem %s5, %s267
      %p269 = scmp.lt.s32.totalorder %s27, 1
      %s270 = scalar_select %p269, %s27, 1
      %p271 = scmp.lt.s32.totalorder %s28, 0
      %s272 = scalar_select %p271, %s28, 0
      %s273 = smul.addr %s270, 4
      %s274 = sadd.s32 %s272, %s273
      %s275 = smul.addr %s274, 4
      %s276 = scalar_lea.vmem %s6, %s275
      %v278 = vld [vmem:[%s1] sm:$0xff]
      %v279 = vld [vmem:[%s1 + $0x8] sm:$0xff]
      %v280 = vld [vmem:[%s1 + $0x10] sm:$0xff]
      %v281 = vld [vmem:[%s1 + $0x18] sm:$0xff]
      %v282 = vld [vmem:[%s268] sm:$0xf]
      %v283 = vld [vmem:[%s268 + $0x4] sm:$0xf]
      %v284 = vld [vmem:[%s268 + $0x8] sm:$0xf]
      %v285 = vld [vmem:[%s268 + $0xc] sm:$0xf]
      %v286 = vld [vmem:[%s268 + $0x10] sm:$0xf]
      %v287 = vld [vmem:[%s268 + $0x14] sm:$0xf]
      %v288 = vld [vmem:[%s268 + $0x18] sm:$0xf]
      %v289 = vld [vmem:[%s268 + $0x1c] sm:$0xf]
      %v290 = vld [vmem:[%s268 + $0x20] sm:$0xf]
      %v291 = vld [vmem:[%s268 + $0x24] sm:$0xf]
      %v292 = vld [vmem:[%s268 + $0x28] sm:$0xf]
      %v293 = vld [vmem:[%s268 + $0x2c] sm:$0xf]
      %v294 = vld [vmem:[%s268 + $0x30] sm:$0xf]
      %v295 = vld [vmem:[%s268 + $0x34] sm:$0xf]
      %v296 = vld [vmem:[%s268 + $0x38] sm:$0xf]
      %v297 = vld [vmem:[%s268 + $0x3c] sm:$0xf]
      %v298 = vld [vmem:[%s268 + $0x40] sm:$0xf]
      %v299 = vld [vmem:[%s268 + $0x44] sm:$0xf]
      %v300 = vld [vmem:[%s268 + $0x48] sm:$0xf]
      %v301 = vld [vmem:[%s268 + $0x4c] sm:$0xf]
      %v302 = vld [vmem:[%s268 + $0x50] sm:$0xf]
      %v303 = vld [vmem:[%s268 + $0x54] sm:$0xf]
      %v304 = vld [vmem:[%s268 + $0x58] sm:$0xf]
      %v305 = vld [vmem:[%s268 + $0x5c] sm:$0xf]
      %v306 = vld [vmem:[%s268 + $0x60] sm:$0xf]
      %v307 = vld [vmem:[%s268 + $0x64] sm:$0xf]
      %v308 = vld [vmem:[%s268 + $0x68] sm:$0xf]
      %v309 = vld [vmem:[%s268 + $0x6c] sm:$0xf]
      %v310 = vld [vmem:[%s268 + $0x70] sm:$0xf]
      %v315 = vunpack.c.l.b16 %v278
      %v316 = vunpack.c.h.b16 %v278
      %v317 = vunpack.c.l.b16 %v279
      %v318 = vunpack.c.h.b16 %v279
      %v319 = vunpack.c.l.b16 %v280
      %v320 = vunpack.c.h.b16 %v280
      %v321 = vunpack.c.l.b16 %v281
      %v322 = vunpack.c.h.b16 %v281
      %v323 = vpack.c.b16 %v317, %v315
      %v324 = vpack.c.b16 %v318, %v316
      %v325 = vpack.c.b16 %v321, %v319
      %v326 = vpack.c.b16 %v322, %v320
      %v358 = vunpack.c.l.b16 %v282
      %v359 = vunpack.c.l.b16 %v283
      %v360 = vunpack.c.l.b16 %v284
      %v361 = vunpack.c.l.b16 %v285
      %v362 = vunpack.c.l.b16 %v286
      %v363 = vunpack.c.l.b16 %v287
      %v364 = vunpack.c.l.b16 %v288
      %v365 = vunpack.c.l.b16 %v289
      %v366 = vunpack.c.l.b16 %v290
      %v367 = vunpack.c.l.b16 %v291
      %v368 = vunpack.c.l.b16 %v292
      %v369 = vunpack.c.l.b16 %v293
      %v370 = vunpack.c.l.b16 %v294
      %v371 = vunpack.c.l.b16 %v295
      %v372 = vunpack.c.l.b16 %v296
      %v373 = vunpack.c.l.b16 %v297
      %v374 = vunpack.c.l.b16 %v298
      %v375 = vunpack.c.l.b16 %v299
      %v376 = vunpack.c.l.b16 %v300
      %v377 = vunpack.c.l.b16 %v301
      %v378 = vunpack.c.l.b16 %v302
      %v379 = vunpack.c.l.b16 %v303
      %v380 = vunpack.c.l.b16 %v304
      %v381 = vunpack.c.l.b16 %v305
      %v382 = vunpack.c.l.b16 %v306
      %v383 = vunpack.c.l.b16 %v307
      %v384 = vunpack.c.l.b16 %v308
      %v385 = vunpack.c.l.b16 %v309
      %v386 = vunpack.c.l.b16 %v310
      %v387 = vpack.c.b16 %v359, %v358
      %v388 = vpack.c.b16 %v361, %v360
      %v389 = vpack.c.b16 %v363, %v362
      %v390 = vpack.c.b16 %v365, %v364
      %v391 = vpack.c.b16 %v367, %v366
      %v392 = vpack.c.b16 %v369, %v368
      %v393 = vpack.c.b16 %v371, %v370
      %v394 = vpack.c.b16 %v373, %v372
      %v395 = vpack.c.b16 %v375, %v374
      %v396 = vpack.c.b16 %v377, %v376
      %v397 = vpack.c.b16 %v379, %v378
      %v398 = vpack.c.b16 %v381, %v380
      %v399 = vpack.c.b16 %v383, %v382
      %v400 = vpack.c.b16 %v385, %v384
      %v401 = vpack.c.b16 %v386, %v386
      %vm416 = vcmask 842752
      %v418 = vsel %vm416, %v324, 0
      %v421 = vsel %vm416, %v326, 0
      %vm423 = vcmask 1042432
      %vm424 = vcmask 1043456
      %v425 = vsel %vm423, 4294967295, 65535
      %v426 = vsel %vm424, %v425, 0
      %v428 = vand.u32 %v401, %v426
      %430 = vmatprep.subr.bf16.mxu0 0
      %431 = vmatpush1.bf16.msra.mxu0 %v387
      %432 = vmatprep.subr.bf16.mxu0 0
      %433 = vmatpush1.bf16.msra.mxu0 %v388
      %434 = vmatprep.subr.bf16.mxu0 0
      %435 = vmatpush1.bf16.msra.mxu0 %v389
      %436 = vmatprep.subr.bf16.mxu0 0
      %437 = vmatpush1.bf16.msra.mxu0 %v390
      %438 = vmatprep.subr.bf16.mxu0 0
      %439 = vmatpush1.bf16.msra.mxu0 %v391
      %440 = vmatprep.subr.bf16.mxu0 0
      %441 = vmatpush1.bf16.msra.mxu0 %v392
      %442 = vmatprep.subr.bf16.mxu0 0
      %443 = vmatpush1.bf16.msra.mxu0 %v393
      %444 = vmatprep.subr.bf16.mxu0 0
      %445 = vmatpush1.bf16.msra.mxu0 %v394
      %446 = vmatprep.subr.bf16.mxu0 0
      %447 = vmatpush1.bf16.msra.mxu0 %v395
      %448 = vmatprep.subr.bf16.mxu0 0
      %449 = vmatpush1.bf16.msra.mxu0 %v396
      %450 = vmatprep.subr.bf16.mxu0 0
      %451 = vmatpush1.bf16.msra.mxu0 %v397
      %452 = vmatprep.subr.bf16.mxu0 0
      %453 = vmatpush1.bf16.msra.mxu0 %v398
      %454 = vmatprep.subr.bf16.mxu0 0
      %455 = vmatpush1.bf16.msra.mxu0 %v399
      %456 = vmatprep.subr.bf16.mxu0 0
      %457 = vmatpush1.bf16.msra.mxu0 %v400
      %458 = vmatprep.subr.bf16.mxu0 0
      %459 = vmatpush1.bf16.msra.mxu0 %v428
      %460 = vmatprep.subr.bf16.mxu0 0
      %461 = vmatpush1.bf16.msra.mxu0 0
      %462 = vmatprep.mubr.bf16.mxu0 %v418
      %463 = vmatmul.mubr.bf16.gmra.mrb[0].mxu0 %v323
      %v464 = vpop.f32.mrb[0].mxu0
      %v465 = vadd.f32 0.0, %v464
      %v466 = vpop.f32.mrb[0].mxu0
      %v467 = vpop.f32.mrb[0].mxu0
      %v468 = vadd.f32 0.0, %v467
      %v469 = vpop.f32.mrb[0].mxu0
      %470 = vmatprep.mubr.bf16.mxu0 %v421
      %471 = vmatmul.mubr.bf16.gmra.mrb[0].mxu0 %v325
      %v472 = vpop.f32.mrb[0].mxu0
      %v473 = vadd.f32 0.0, %v472
      %v474 = vpop.f32.mrb[0].mxu0
      %v475 = vpop.f32.mrb[0].mxu0
      %v476 = vadd.f32 0.0, %v475
      %v477 = vpop.f32.mrb[0].mxu0
      %478 = vdwg.mxu0
      %v479 = vld [vmem:[%s2] sm:$0xff]
      %v480 = vld [vmem:[%s2 + $0x8] sm:$0xff]
      %v481 = vld [vmem:[%s2 + $0x10] sm:$0xff]
      %v482 = vld [vmem:[%s2 + $0x18] sm:$0xff]
      %484 = vset.pattern.permute.xlu0 0
      %485 = vperm.xlu0 %484, %v479
      %v486 = vpop.permute.xlu0 %485
      %489 = vset.pattern.permute.xlu0 0
      %490 = vperm.xlu0 %489, %v480
      %v491 = vpop.permute.xlu0 %490
      %494 = vset.pattern.permute.xlu0 0
      %495 = vperm.xlu0 %494, %v481
      %v496 = vpop.permute.xlu0 %495
      %499 = vset.pattern.permute.xlu0 0
      %500 = vperm.xlu0 %499, %v482
      %v501 = vpop.permute.xlu0 %500
      %v503 = vmul.f32 %v465, %v486
      %v504 = vmul.f32 %v468, %v491
      %v505 = vmul.f32 %v473, %v496
      %v506 = vmul.f32 %v476, %v501
      %v507 = vld [vmem:[%s3] sm:$0xff]
      %v508 = vld [vmem:[%s3 + $0x8] sm:$0xff]
      %v509 = vld [vmem:[%s3 + $0x10] sm:$0xff]
      %v510 = vld [vmem:[%s3 + $0x18] sm:$0xff]
      %512 = vset.pattern.permute.xlu0 0
      %513 = vperm.xlu0 %512, %v507
      %v514 = vpop.permute.xlu0 %513
      %517 = vset.pattern.permute.xlu0 0
      %518 = vperm.xlu0 %517, %v508
      %v519 = vpop.permute.xlu0 %518
      %522 = vset.pattern.permute.xlu0 0
      %523 = vperm.xlu0 %522, %v509
      %v524 = vpop.permute.xlu0 %523
      %527 = vset.pattern.permute.xlu0 0
      %528 = vperm.xlu0 %527, %v510
      %v529 = vpop.permute.xlu0 %528
      %v531 = vadd.f32 %v503, %v514
      %v532 = vadd.f32 %v504, %v519
      %v533 = vadd.f32 %v505, %v524
      %v534 = vadd.f32 %v506, %v529
      %v535 = vmax.f32 %v531, 0.0
      %v536 = vmax.f32 %v532, 0.0
      %v537 = vmax.f32 %v533, 0.0
      %v538 = vmax.f32 %v534, 0.0
      %v539 = vld [vmem:[%s260] sm:$0x1]
      %s540 = sld [smem:[#allocation3 + %s27]]
      %v541 = vstv %s540
      %vm542 = vcmp.lt.s32.totalorder %v539, %v541
      %v543 = vsel %vm542, 1, 0
      %v544 = vcvt.s32.f32 %v543
      %v546 = vlaneseq
      %v547 = vshrl.u32 %v546, 7
      %v548 = vsub.s32 0, %v547
      %v549 = vrot.slane %v544, %v548
      %v551 = vmul.f32 %v535, %v549
      %v552 = vmul.f32 %v536, %v549
      %v553 = vmul.f32 %v537, %v549
      %v554 = vmul.f32 %v538, %v549
      %v555 = vpack.c.bf16 %v552, %v551
      %v556 = vpack.c.bf16 %v554, %v553
      %v559 = vunpack.c.l.b16 %v555
      %v560 = vunpack.c.h.b16 %v555
      %v561 = vunpack.c.l.b16 %v556
      %v562 = vunpack.c.h.b16 %v556
      %v563 = vpack.c.b16 %v559, %v559
      %v564 = vpack.c.b16 %v560, %v560
      %v565 = vpack.c.b16 %v561, %v561
      %v566 = vpack.c.b16 %v562, %v562
      %571 = vst [vmem:[%s276] sm:$0xf] %v563
      %572 = vst [vmem:[%s276 + $0x4] sm:$0xf] %v564
      %573 = vst [vmem:[%s276 + $0x8] sm:$0xf] %v565
      %574 = vst [vmem:[%s276 + $0xc] sm:$0xf] %v566
      %p575 = scmp.lt.s32.totalorder %s27, 1
      %s576 = scalar_select %p575, %s27, 1
      %p577 = scmp.lt.s32.totalorder %s28, 0
      %s578 = scalar_select %p577, %s28, 0
      %s579 = smul.addr %s576, 4
      %s580 = sadd.s32 %s578, %s579
      %s581 = smul.addr %s580, 4
      %s582 = scalar_lea.vmem %s6, %s581
      // Predicated region
      $region41: #{acoustic_model_forward.4} parent=39 // pred_check
        %p583 = pneg %p172
      $region42: #{acoustic_model_forward.4} parent=39 // pred_check_branch
        %585 = sbr.rel (%p583) target = $region44
      $region43: #{acoustic_model_forward.4} parent=39 // pred_region
        _
      $region44: #{acoustic_model_forward.4} parent=39 // pred_fallthru
        _
    $region40: #{acoustic_model_forward.4} parent=5 // pred_fallthru
      _
    %p586 = scmp.le.s32.totalorder 2, %s18
    // Predicated region
    $region45: #{acoustic_model_forward.4} parent=5 // pred_check
      %p587 = pneg %p586
    $region46: #{acoustic_model_forward.4} parent=5 // pred_check_branch
      %589 = sbr.rel (%p587) target = $region48
    $region47: #{acoustic_model_forward.4} parent=5 // pred_region
      %s590 = ssub.s32 %s18, 2
      // Predicated region
      $region49: #{acoustic_model_forward.4} parent=47 // pred_check
        %p591 = pneg %p178
      $region50: #{acoustic_model_forward.4} parent=47 // pred_check_branch
        %593 = sbr.rel (%p591) target = $region52
      $region51: #{acoustic_model_forward.4} parent=47 // pred_region
        %p594 = scmp.lt.s32.totalorder %s29, 1
        %s595 = scalar_select %p594, %s29, 1
        %p596 = scmp.lt.s32.totalorder %s30, 0
        %s597 = scalar_select %p596, %s30, 0
        %s598 = smul.addr %s595, 4
        %s599 = sadd.s32 %s597, %s598
        %s600 = smul.addr %s599, 4
        %s601 = scalar_lea.vmem %s6, %s600
      $region52: #{acoustic_model_forward.4} parent=47 // pred_fallthru
        _
    $region48: #{acoustic_model_forward.4} parent=5 // pred_fallthru
      _
  $region6: #{acoustic_model_forward.4} parent=0 // loop_footer
    %s22 = sadd.s32 1, %s18
  $region7: #{acoustic_model_forward.4} parent=0 // loop_footer_branch
    %17 = sbr.rel target = $region3
  $region8: #{acoustic_model_forward.4} parent=0 // loop_exit
    _

// kernel: acoustic_model_forward.6
$region0: #{acoustic_model_forward.6}
  #allocation0 [shape = 'u32[]', space=smem, size = 0x4, offset = 0x4, fixed_abs, tag = 'smem constant byte address 0x4 - core index']
  #allocation1 [shape = 'u32[144,128]{1,0:T(1,128)}', space=vmem, size = 0x12000, scoped, tag = 'internal scratch']
  #allocation2 [shape = 'f32[8,32]{1,0:T(8,128)}', space=vmem, size = 0x1000, scoped, tag = 'scratch operand']
  #allocation3 [shape = 'f32[8,32]{1,0:T(8,128)}', space=vmem, size = 0x1000, scoped, tag = 'scratch operand']
  #allocation4 [shape = 'f32[64,96]{1,0:T(8,128)}', space=vmem, size = 0x8000, scoped, tag = 'scratch operand']
  #allocation5 [shape = 'f32[64,96]{1,0:T(8,128)}', space=vmem, size = 0x8000, scoped, tag = 'scratch operand']
  %s0 = inlined_call_operand.vmem [shape: bf16[64,256], index: 0, kind: input, shape index: {}, may-alias: {0,1}]
  %s1 = inlined_call_operand.vmem [shape: bf16[64,256], index: 1, kind: input, shape index: {}, may-alias: {0,1}]
  %s2 = inlined_call_operand.vmem [shape: f32[64,1], index: 2, kind: input, shape index: {}]
  %s3 = inlined_call_operand.vmem [shape: bf16[256,96], index: 3, kind: input, shape index: {}]
  %s4 = inlined_call_operand.vmem [shape: f32[1,96], index: 4, kind: input, shape index: {}]
  %s5 = inlined_call_operand.vmem [shape: bf16[256,96], index: 5, kind: input, shape index: {}]
  %s6 = inlined_call_operand.vmem [shape: f32[1,96], index: 6, kind: input, shape index: {}]
  %s7 = inlined_call_operand.vmem [shape: f32[32,96], index: 7, kind: input, shape index: {}]
  %s8 = inlined_call_operand.vmem [shape: f32[1,32], index: 8, kind: input, shape index: {}]
  %s9 = inlined_call_operand.vmem [shape: f32[32,96], index: 9, kind: input, shape index: {}]
  %s10 = inlined_call_operand.vmem [shape: f32[1,32], index: 10, kind: input, shape index: {}]
  %s11 = inlined_call_operand.vmem [shape: bf16[64,32], index: 11, kind: output, shape index: {0}]
  %s12 = inlined_call_operand.vmem [shape: bf16[64,32], index: 12, kind: output, shape index: {1}]
  %13 = xla_tuple %s11, %s12
  %s14 = sld [smem:[#allocation0]]
  $region73: #{acoustic_model_forward.6} parent=0
    _
  %s16 = ssub.s32 1, %s14
  %s17 = scalar_select 0, %s16, %s14
  // Predicated region
  $region2: #{acoustic_model_forward.6} parent=0 // pred_check
    _
  $region3: #{acoustic_model_forward.6} parent=0 // pred_check_branch
    %19 = sbr.rel (0) target = $region5
  $region4: #{acoustic_model_forward.6} parent=0 // pred_region
    _
  $region5: #{acoustic_model_forward.6} parent=0 // pred_fallthru
    _
  // Predicated region
  $region6: #{acoustic_model_forward.6} parent=0 // pred_check
    _
  $region7: #{acoustic_model_forward.6} parent=0 // pred_check_branch
    %21 = sbr.rel (0) target = $region9
  $region8: #{acoustic_model_forward.6} parent=0 // pred_region
    %s22 = ssub.s32 0, 0
    %s23 = smul.u32 8, %s22
    %p24 = scmp.lt.s32.totalorder %s23, 7
    %s25 = scalar_select %p24, %s23, 7
    %s26 = smul.addr %s25, 2
    %s27 = smul.addr %s26, 4
    %s28 = scalar_lea.vmem %s1, %s27
    %s29 = ssub.s32 0, 0
    %s30 = smul.u32 8, %s29
  $region9: #{acoustic_model_forward.6} parent=0 // pred_fallthru
    _
  // Predicated region
  $region10: #{acoustic_model_forward.6} parent=0 // pred_check
    _
  $region11: #{acoustic_model_forward.6} parent=0 // pred_check_branch
    %32 = sbr.rel (0) target = $region13
  $region12: #{acoustic_model_forward.6} parent=0 // pred_region
    %s33 = ssub.s32 0, 0
    %s34 = smul.u32 8, %s33
    %p35 = scmp.lt.s32.totalorder %s34, 7
    %s36 = scalar_select %p35, %s34, 7
    %s37 = smul.addr %s36, 8
    %s38 = scalar_lea.vmem %s2, %s37
    %s39 = ssub.s32 0, 0
    %s40 = smul.u32 8, %s39
  $region13: #{acoustic_model_forward.6} parent=0 // pred_fallthru
    _
  // Predicated region
  $region14: #{acoustic_model_forward.6} parent=0 // pred_check
    _
  $region15: #{acoustic_model_forward.6} parent=0 // pred_check_branch
    %42 = sbr.rel (0) target = $region17
  $region16: #{acoustic_model_forward.6} parent=0 // pred_region
    _
  $region17: #{acoustic_model_forward.6} parent=0 // pred_fallthru
    _
  // Predicated region
  $region18: #{acoustic_model_forward.6} parent=0 // pred_check
    _
  $region19: #{acoustic_model_forward.6} parent=0 // pred_check_branch
    %44 = sbr.rel (0) target = $region21
  $region20: #{acoustic_model_forward.6} parent=0 // pred_region
    _
  $region21: #{acoustic_model_forward.6} parent=0 // pred_fallthru
    _
  // Predicated region
  $region22: #{acoustic_model_forward.6} parent=0 // pred_check
    _
  $region23: #{acoustic_model_forward.6} parent=0 // pred_check_branch
    %46 = sbr.rel (0) target = $region25
  $region24: #{acoustic_model_forward.6} parent=0 // pred_region
    _
  $region25: #{acoustic_model_forward.6} parent=0 // pred_fallthru
    _
  // Predicated region
  $region26: #{acoustic_model_forward.6} parent=0 // pred_check
    _
  $region27: #{acoustic_model_forward.6} parent=0 // pred_check_branch
    %48 = sbr.rel (0) target = $region29
  $region28: #{acoustic_model_forward.6} parent=0 // pred_region
    _
  $region29: #{acoustic_model_forward.6} parent=0 // pred_fallthru
    _
  // Predicated region
  $region30: #{acoustic_model_forward.6} parent=0 // pred_check
    _
  $region31: #{acoustic_model_forward.6} parent=0 // pred_check_branch
    %50 = sbr.rel (0) target = $region33
  $region32: #{acoustic_model_forward.6} parent=0 // pred_region
    _
  $region33: #{acoustic_model_forward.6} parent=0 // pred_fallthru
    _
  // Predicated region
  $region34: #{acoustic_model_forward.6} parent=0 // pred_check
    _
  $region35: #{acoustic_model_forward.6} parent=0 // pred_check_branch
    %52 = sbr.rel (0) target = $region37
  $region36: #{acoustic_model_forward.6} parent=0 // pred_region
    _
  $region37: #{acoustic_model_forward.6} parent=0 // pred_fallthru
    _
  // Predicated region
  $region38: #{acoustic_model_forward.6} parent=0 // pred_check
    _
  $region39: #{acoustic_model_forward.6} parent=0 // pred_check_branch
    %54 = sbr.rel (0) target = $region41
  $region40: #{acoustic_model_forward.6} parent=0 // pred_region
    _
  $region41: #{acoustic_model_forward.6} parent=0 // pred_fallthru
    _
  // Predicated region
  $region42: #{acoustic_model_forward.6} parent=0 // pred_check
    _
  $region43: #{acoustic_model_forward.6} parent=0 // pred_check_branch
    %56 = sbr.rel (0) target = $region45
  $region44: #{acoustic_model_forward.6} parent=0 // pred_region
    _
  $region45: #{acoustic_model_forward.6} parent=0 // pred_fallthru
    _
  %s57 = ssub.s32 0, 0
  %s58 = smul.u32 8, %s57
  %p59 = scmp.lt.s32.totalorder %s58, 7
  %s60 = scalar_select %p59, %s58, 7
  %s61 = smul.addr %s60, 2
  %s62 = smul.addr %s61, 4
  %s63 = scalar_lea.vmem %s1, %s62
  %s64 = ssub.s32 0, 0
  %s65 = smul.u32 8, %s64
  %p66 = scmp.lt.s32.totalorder %s65, 7
  %s67 = scalar_select %p66, %s65, 7
  %s68 = smul.addr %s67, 8
  %s69 = scalar_lea.vmem %s2, %s68
  %s70 = ssub.s32 0, 0
  %s71 = smul.u32 8, %s70
  %p72 = scmp.lt.s32.totalorder %s71, 7
  %s73 = scalar_select %p72, %s71, 7
  %s74 = smul.addr %s73, 4
  %s75 = scalar_lea.vmem %s12, %s74
  %s76 = ssub.s32 0, 0
  %s77 = smul.u32 8, %s76
  %p78 = scmp.lt.s32.totalorder %s77, 7
  %s79 = scalar_select %p78, %s77, 7
  %s80 = smul.addr %s79, 2
  %s81 = smul.addr %s80, 4
  %s82 = scalar_lea.vmem %s1, %s81
  %s83 = ssub.s32 0, 0
  %s84 = smul.u32 8, %s83
  %s85 = ssub.s32 0, 0
  %s86 = smul.u32 8, %s85
  %p87 = scmp.lt.s32.totalorder %s86, 7
  %s88 = scalar_select %p87, %s86, 7
  %s89 = smul.addr %s88, 8
  %s90 = scalar_lea.vmem %s2, %s89
  %s91 = ssub.s32 0, 0
  %s92 = smul.u32 8, %s91
  %s93 = ssub.s32 0, 0
  %s94 = smul.u32 8, %s93
  %p95 = scmp.lt.s32.totalorder %s94, 7
  %s96 = scalar_select %p95, %s94, 7
  %s97 = smul.addr %s96, 4
  %s98 = scalar_lea.vmem %s12, %s97
  %s99 = ssub.s32 0, 0
  %s100 = smul.u32 8, %s99
  %p102 = scmp.eq.s32.totalorder 0, 0
  // Predicated region
  $region46: #{acoustic_model_forward.6} parent=0 // pred_check
    %p103 = pneg %p102
  $region47: #{acoustic_model_forward.6} parent=0 // pred_check_branch
    %105 = sbr.rel (%p103) target = $region49
  $region48: #{acoustic_model_forward.6} parent=0 // pred_region
    %vm106 = vcmask 261120
    %107 = vst.msk [vmem:[#allocation2] sm:$0xff] %vm106, 0.0
    %108 = vst.msk [vmem:[#allocation3] sm:$0xff] %vm106, 0.0
  $region49: #{acoustic_model_forward.6} parent=0 // pred_fallthru
    _
  %v109 = vld [vmem:[%s0] sm:$0xff]
  %v110 = vld [vmem:[%s0 + $0x8] sm:$0xff]
  %v111 = vld [vmem:[%s0 + $0x10] sm:$0xff]
  %v112 = vld [vmem:[%s0 + $0x18] sm:$0xff]
  %v113 = vld [vmem:[%s0 + $0x20] sm:$0xff]
  %v114 = vld [vmem:[%s0 + $0x28] sm:$0xff]
  %v115 = vld [vmem:[%s0 + $0x30] sm:$0xff]
  %v116 = vld [vmem:[%s0 + $0x38] sm:$0xff]
  %v117 = vld [vmem:[%s3] sm:$0xf]
  %v118 = vld [vmem:[%s3 + $0x4] sm:$0xf]
  %v119 = vld [vmem:[%s3 + $0x8] sm:$0xf]
  %v120 = vld [vmem:[%s3 + $0xc] sm:$0xf]
  %v121 = vld [vmem:[%s3 + $0x10] sm:$0xf]
  %v122 = vld [vmem:[%s3 + $0x14] sm:$0xf]
  %v123 = vld [vmem:[%s3 + $0x18] sm:$0xf]
  %v124 = vld [vmem:[%s3 + $0x1c] sm:$0xf]
  %v125 = vld [vmem:[%s3 + $0x20] sm:$0xf]
  %v126 = vld [vmem:[%s3 + $0x24] sm:$0xf]
  %v127 = vld [vmem:[%s3 + $0x28] sm:$0xf]
  %v128 = vld [vmem:[%s3 + $0x2c] sm:$0xf]
  %v129 = vld [vmem:[%s3 + $0x30] sm:$0xf]
  %v130 = vld [vmem:[%s3 + $0x34] sm:$0xf]
  %v131 = vld [vmem:[%s3 + $0x38] sm:$0xf]
  %v132 = vld [vmem:[%s3 + $0x3c] sm:$0xf]
  %v133 = vld [vmem:[%s3 + $0x40] sm:$0xf]
  %v134 = vld [vmem:[%s3 + $0x44] sm:$0xf]
  %v135 = vld [vmem:[%s3 + $0x48] sm:$0xf]
  %v136 = vld [vmem:[%s3 + $0x4c] sm:$0xf]
  %v137 = vld [vmem:[%s3 + $0x50] sm:$0xf]
  %v138 = vld [vmem:[%s3 + $0x54] sm:$0xf]
  %v139 = vld [vmem:[%s3 + $0x58] sm:$0xf]
  %v140 = vld [vmem:[%s3 + $0x5c] sm:$0xf]
  %v141 = vld [vmem:[%s3 + $0x60] sm:$0xf]
  %v142 = vld [vmem:[%s3 + $0x64] sm:$0xf]
  %v143 = vld [vmem:[%s3 + $0x68] sm:$0xf]
  %v144 = vld [vmem:[%s3 + $0x6c] sm:$0xf]
  %v145 = vld [vmem:[%s3 + $0x70] sm:$0xf]
  %v146 = vld [vmem:[%s3 + $0x74] sm:$0xf]
  %v147 = vld [vmem:[%s3 + $0x78] sm:$0xf]
  %v148 = vld [vmem:[%s3 + $0x7c] sm:$0xf]
  %v149 = vld [vmem:[%s4] sm:$0x1]
  %v151 = vlaneseq
  %v152 = vshrl.u32 %v151, 7
  %v153 = vsub.s32 0, %v152
  %v154 = vrot.slane %v149, %v153
  %v164 = vunpack.c.l.b16 %v109
  %v165 = vunpack.c.h.b16 %v109
  %v166 = vunpack.c.l.b16 %v110
  %v167 = vunpack.c.h.b16 %v110
  %v168 = vunpack.c.l.b16 %v111
  %v169 = vunpack.c.h.b16 %v111
  %v170 = vunpack.c.l.b16 %v112
  %v171 = vunpack.c.h.b16 %v112
  %v172 = vunpack.c.l.b16 %v113
  %v173 = vunpack.c.h.b16 %v113
  %v174 = vunpack.c.l.b16 %v114
  %v175 = vunpack.c.h.b16 %v114
  %v176 = vunpack.c.l.b16 %v115
  %v177 = vunpack.c.h.b16 %v115
  %v178 = vunpack.c.l.b16 %v116
  %v179 = vunpack.c.h.b16 %v116
  %v180 = vpack.c.b16 %v166, %v164
  %v181 = vpack.c.b16 %v167, %v165
  %v182 = vpack.c.b16 %v170, %v168
  %v183 = vpack.c.b16 %v171, %v169
  %v184 = vpack.c.b16 %v174, %v172
  %v185 = vpack.c.b16 %v175, %v173
  %v186 = vpack.c.b16 %v178, %v176
  %v187 = vpack.c.b16 %v179, %v177
  %v228 = vunpack.c.l.b16 %v117
  %v229 = vunpack.c.l.b16 %v118
  %v230 = vunpack.c.l.b16 %v119
  %v231 = vunpack.c.l.b16 %v120
  %v232 = vunpack.c.l.b16 %v121
  %v233 = vunpack.c.l.b16 %v122
  %v234 = vunpack.c.l.b16 %v123
  %v235 = vunpack.c.l.b16 %v124
  %v236 = vunpack.c.l.b16 %v125
  %v237 = vunpack.c.l.b16 %v126
  %v238 = vunpack.c.l.b16 %v127
  %v239 = vunpack.c.l.b16 %v128
  %v240 = vunpack.c.l.b16 %v129
  %v241 = vunpack.c.l.b16 %v130
  %v242 = vunpack.c.l.b16 %v131
  %v243 = vunpack.c.l.b16 %v132
  %v244 = vunpack.c.l.b16 %v133
  %v245 = vunpack.c.l.b16 %v134
  %v246 = vunpack.c.l.b16 %v135
  %v247 = vunpack.c.l.b16 %v136
  %v248 = vunpack.c.l.b16 %v137
  %v249 = vunpack.c.l.b16 %v138
  %v250 = vunpack.c.l.b16 %v139
  %v251 = vunpack.c.l.b16 %v140
  %v252 = vunpack.c.l.b16 %v141
  %v253 = vunpack.c.l.b16 %v142
  %v254 = vunpack.c.l.b16 %v143
  %v255 = vunpack.c.l.b16 %v144
  %v256 = vunpack.c.l.b16 %v145
  %v257 = vunpack.c.l.b16 %v146
  %v258 = vunpack.c.l.b16 %v147
  %v259 = vunpack.c.l.b16 %v148
  %v260 = vpack.c.b16 %v229, %v228
  %v261 = vpack.c.b16 %v231, %v230
  %v262 = vpack.c.b16 %v233, %v232
  %v263 = vpack.c.b16 %v235, %v234
  %v264 = vpack.c.b16 %v237, %v236
  %v265 = vpack.c.b16 %v239, %v238
  %v266 = vpack.c.b16 %v241, %v240
  %v267 = vpack.c.b16 %v243, %v242
  %v268 = vpack.c.b16 %v245, %v244
  %v269 = vpack.c.b16 %v247, %v246
  %v270 = vpack.c.b16 %v249, %v248
  %v271 = vpack.c.b16 %v251, %v250
  %v272 = vpack.c.b16 %v253, %v252
  %v273 = vpack.c.b16 %v255, %v254
  %v274 = vpack.c.b16 %v257, %v256
  %v275 = vpack.c.b16 %v259, %v258
  %292 = vmatprep.subr.bf16.mxu0 0
  %293 = vmatpush1.bf16.msra.mxu0 %v260
  %294 = vmatprep.subr.bf16.mxu0 0
  %295 = vmatpush1.bf16.msra.mxu0 %v261
  %296 = vmatprep.subr.bf16.mxu0 0
  %297 = vmatpush1.bf16.msra.mxu0 %v262
  %298 = vmatprep.subr.bf16.mxu0 0
  %299 = vmatpush1.bf16.msra.mxu0 %v263
  %300 = vmatprep.subr.bf16.mxu0 0
  %301 = vmatpush1.bf16.msra.mxu0 %v264
  %302 = vmatprep.subr.bf16.mxu0 0
  %303 = vmatpush1.bf16.msra.mxu0 %v265
  %304 = vmatprep.subr.bf16.mxu0 0
  %305 = vmatpush1.bf16.msra.mxu0 %v266
  %306 = vmatprep.subr.bf16.mxu0 0
  %307 = vmatpush1.bf16.msra.mxu0 %v267
  %308 = vmatprep.subr.bf16.mxu0 0
  %309 = vmatpush1.bf16.msra.mxu0 %v268
  %310 = vmatprep.subr.bf16.mxu0 0
  %311 = vmatpush1.bf16.msra.mxu0 %v269
  %312 = vmatprep.subr.bf16.mxu0 0
  %313 = vmatpush1.bf16.msra.mxu0 %v270
  %314 = vmatprep.subr.bf16.mxu0 0
  %315 = vmatpush1.bf16.msra.mxu0 %v271
  %316 = vmatprep.subr.bf16.mxu0 0
  %317 = vmatpush1.bf16.msra.mxu0 %v272
  %318 = vmatprep.subr.bf16.mxu0 0
  %319 = vmatpush1.bf16.msra.mxu0 %v273
  %320 = vmatprep.subr.bf16.mxu0 0
  %321 = vmatpush1.bf16.msra.mxu0 %v274
  %322 = vmatprep.subr.bf16.mxu0 0
  %323 = vmatpush1.bf16.msra.mxu0 %v275
  %324 = vmatprep.mubr.bf16.mxu0 %v181
  %325 = vmatmul.mubr.bf16.gmra.mrb[0].mxu0 %v180
  %v326 = vpop.f32.mrb[0].mxu0
  %v327 = vadd.f32 %v154, %v326
  %v328 = vpop.f32.mrb[0].mxu0
  %v329 = vpop.f32.mrb[0].mxu0
  %v330 = vadd.f32 %v154, %v329
  %v331 = vpop.f32.mrb[0].mxu0
  %332 = vmatprep.mubr.bf16.mxu0 %v183
  %333 = vmatmul.mubr.bf16.gmra.mrb[0].mxu0 %v182
  %v334 = vpop.f32.mrb[0].mxu0
  %v335 = vadd.f32 %v154, %v334
  %v336 = vpop.f32.mrb[0].mxu0
  %v337 = vpop.f32.mrb[0].mxu0
  %v338 = vadd.f32 %v154, %v337
  %v339 = vpop.f32.mrb[0].mxu0
  %340 = vmatprep.mubr.bf16.mxu0 %v185
  %341 = vmatmul.mubr.bf16.gmra.mrb[0].mxu0 %v184
  %v342 = vpop.f32.mrb[0].mxu0
  %v343 = vadd.f32 %v154, %v342
  %v344 = vpop.f32.mrb[0].mxu0
  %v345 = vpop.f32.mrb[0].mxu0
  %v346 = vadd.f32 %v154, %v345
  %v347 = vpop.f32.mrb[0].mxu0
  %348 = vmatprep.mubr.bf16.mxu0 %v187
  %349 = vmatmul.mubr.bf16.gmra.mrb[0].mxu0 %v186
  %v350 = vpop.f32.mrb[0].mxu0
  %v351 = vadd.f32 %v154, %v350
  %v352 = vpop.f32.mrb[0].mxu0
  %v353 = vpop.f32.mrb[0].mxu0
  %v354 = vadd.f32 %v154, %v353
  %v355 = vpop.f32.mrb[0].mxu0
  %356 = vdwg.mxu0
  %vm357 = vcmask 785408
  %358 = vst.msk [vmem:[#allocation4] sm:$0xff] %vm357, %v327
  %359 = vst.msk [vmem:[#allocation4 + $0x8] sm:$0xff] %vm357, %v330
  %360 = vst.msk [vmem:[#allocation4 + $0x10] sm:$0xff] %vm357, %v335
  %361 = vst.msk [vmem:[#allocation4 + $0x18] sm:$0xff] %vm357, %v338
  %362 = vst.msk [vmem:[#allocation4 + $0x20] sm:$0xff] %vm357, %v343
  %363 = vst.msk [vmem:[#allocation4 + $0x28] sm:$0xff] %vm357, %v346
  %364 = vst.msk [vmem:[#allocation4 + $0x30] sm:$0xff] %vm357, %v351
  %365 = vst.msk [vmem:[#allocation4 + $0x38] sm:$0xff] %vm357, %v354
  %v366 = vld [vmem:[%s82] sm:$0xff]
  %v367 = vld [vmem:[%s82 + $0x8] sm:$0xff]
  %v368 = vld [vmem:[%s82 + $0x10] sm:$0xff]
  %v369 = vld [vmem:[%s82 + $0x18] sm:$0xff]
  %v370 = vld [vmem:[%s82 + $0x20] sm:$0xff]
  %v371 = vld [vmem:[%s82 + $0x28] sm:$0xff]
  %v372 = vld [vmem:[%s82 + $0x30] sm:$0xff]
  %v373 = vld [vmem:[%s82 + $0x38] sm:$0xff]
  %v374 = vld [vmem:[%s5] sm:$0xf]
  %v375 = vld [vmem:[%s5 + $0x4] sm:$0xf]
  %v376 = vld [vmem:[%s5 + $0x8] sm:$0xf]
  %v377 = vld [vmem:[%s5 + $0xc] sm:$0xf]
  %v378 = vld [vmem:[%s5 + $0x10] sm:$0xf]
  %v379 = vld [vmem:[%s5 + $0x14] sm:$0xf]
  %v380 = vld [vmem:[%s5 + $0x18] sm:$0xf]
  %v381 = vld [vmem:[%s5 + $0x1c] sm:$0xf]
  %v382 = vld [vmem:[%s5 + $0x20] sm:$0xf]
  %v383 = vld [vmem:[%s5 + $0x24] sm:$0xf]
  %v384 = vld [vmem:[%s5 + $0x28] sm:$0xf]
  %v385 = vld [vmem:[%s5 + $0x2c] sm:$0xf]
  %v386 = vld [vmem:[%s5 + $0x30] sm:$0xf]
  %v387 = vld [vmem:[%s5 + $0x34] sm:$0xf]
  %v388 = vld [vmem:[%s5 + $0x38] sm:$0xf]
  %v389 = vld [vmem:[%s5 + $0x3c] sm:$0xf]
  %v390 = vld [vmem:[%s5 + $0x40] sm:$0xf]
  %v391 = vld [vmem:[%s5 + $0x44] sm:$0xf]
  %v392 = vld [vmem:[%s5 + $0x48] sm:$0xf]
  %v393 = vld [vmem:[%s5 + $0x4c] sm:$0xf]
  %v394 = vld [vmem:[%s5 + $0x50] sm:$0xf]
  %v395 = vld [vmem:[%s5 + $0x54] sm:$0xf]
  %v396 = vld [vmem:[%s5 + $0x58] sm:$0xf]
  %v397 = vld [vmem:[%s5 + $0x5c] sm:$0xf]
  %v398 = vld [vmem:[%s5 + $0x60] sm:$0xf]
  %v399 = vld [vmem:[%s5 + $0x64] sm:$0xf]
  %v400 = vld [vmem:[%s5 + $0x68] sm:$0xf]
  %v401 = vld [vmem:[%s5 + $0x6c] sm:$0xf]
  %v402 = vld [vmem:[%s5 + $0x70] sm:$0xf]
  %v403 = vld [vmem:[%s5 + $0x74] sm:$0xf]
  %v404 = vld [vmem:[%s5 + $0x78] sm:$0xf]
  %v405 = vld [vmem:[%s5 + $0x7c] sm:$0xf]
  %v406 = vld [vmem:[%s6] sm:$0x1]
  %v408 = vlaneseq
  %v409 = vshrl.u32 %v408, 7
  %v410 = vsub.s32 0, %v409
  %v411 = vrot.slane %v406, %v410
  %v421 = vunpack.c.l.b16 %v366
  %v422 = vunpack.c.h.b16 %v366
  %v423 = vunpack.c.l.b16 %v367
  %v424 = vunpack.c.h.b16 %v367
  %v425 = vunpack.c.l.b16 %v368
  %v426 = vunpack.c.h.b16 %v368
  %v427 = vunpack.c.l.b16 %v369
  %v428 = vunpack.c.h.b16 %v369
  %v429 = vunpack.c.l.b16 %v370
  %v430 = vunpack.c.h.b16 %v370
  %v431 = vunpack.c.l.b16 %v371
  %v432 = vunpack.c.h.b16 %v371
  %v433 = vunpack.c.l.b16 %v372
  %v434 = vunpack.c.h.b16 %v372
  %v435 = vunpack.c.l.b16 %v373
  %v436 = vunpack.c.h.b16 %v373
  %v437 = vpack.c.b16 %v423, %v421
  %v438 = vpack.c.b16 %v424, %v422
  %v439 = vpack.c.b16 %v427, %v425
  %v440 = vpack.c.b16 %v428, %v426
  %v441 = vpack.c.b16 %v431, %v429
  %v442 = vpack.c.b16 %v432, %v430
  %v443 = vpack.c.b16 %v435, %v433
  %v444 = vpack.c.b16 %v436, %v434
  %v485 = vunpack.c.l.b16 %v374
  %v486 = vunpack.c.l.b16 %v375
  %v487 = vunpack.c.l.b16 %v376
  %v488 = vunpack.c.l.b16 %v377
  %v489 = vunpack.c.l.b16 %v378
  %v490 = vunpack.c.l.b16 %v379
  %v491 = vunpack.c.l.b16 %v380
  %v492 = vunpack.c.l.b16 %v381
  %v493 = vunpack.c.l.b16 %v382
  %v494 = vunpack.c.l.b16 %v383
  %v495 = vunpack.c.l.b16 %v384
  %v496 = vunpack.c.l.b16 %v385
  %v497 = vunpack.c.l.b16 %v386
  %v498 = vunpack.c.l.b16 %v387
  %v499 = vunpack.c.l.b16 %v388
  %v500 = vunpack.c.l.b16 %v389
  %v501 = vunpack.c.l.b16 %v390
  %v502 = vunpack.c.l.b16 %v391
  %v503 = vunpack.c.l.b16 %v392
  %v504 = vunpack.c.l.b16 %v393
  %v505 = vunpack.c.l.b16 %v394
  %v506 = vunpack.c.l.b16 %v395
  %v507 = vunpack.c.l.b16 %v396
  %v508 = vunpack.c.l.b16 %v397
  %v509 = vunpack.c.l.b16 %v398
  %v510 = vunpack.c.l.b16 %v399
  %v511 = vunpack.c.l.b16 %v400
  %v512 = vunpack.c.l.b16 %v401
  %v513 = vunpack.c.l.b16 %v402
  %v514 = vunpack.c.l.b16 %v403
  %v515 = vunpack.c.l.b16 %v404
  %v516 = vunpack.c.l.b16 %v405
  %v517 = vpack.c.b16 %v486, %v485
  %v518 = vpack.c.b16 %v488, %v487
  %v519 = vpack.c.b16 %v490, %v489
  %v520 = vpack.c.b16 %v492, %v491
  %v521 = vpack.c.b16 %v494, %v493
  %v522 = vpack.c.b16 %v496, %v495
  %v523 = vpack.c.b16 %v498, %v497
  %v524 = vpack.c.b16 %v500, %v499
  %v525 = vpack.c.b16 %v502, %v501
  %v526 = vpack.c.b16 %v504, %v503
  %v527 = vpack.c.b16 %v506, %v505
  %v528 = vpack.c.b16 %v508, %v507
  %v529 = vpack.c.b16 %v510, %v509
  %v530 = vpack.c.b16 %v512, %v511
  %v531 = vpack.c.b16 %v514, %v513
  %v532 = vpack.c.b16 %v516, %v515
  %549 = vmatprep.subr.bf16.mxu0 0
  %550 = vmatpush1.bf16.msra.mxu0 %v517
  %551 = vmatprep.subr.bf16.mxu0 0
  %552 = vmatpush1.bf16.msra.mxu0 %v518
  %553 = vmatprep.subr.bf16.mxu0 0
  %554 = vmatpush1.bf16.msra.mxu0 %v519
  %555 = vmatprep.subr.bf16.mxu0 0
  %556 = vmatpush1.bf16.msra.mxu0 %v520
  %557 = vmatprep.subr.bf16.mxu0 0
  %558 = vmatpush1.bf16.msra.mxu0 %v521
  %559 = vmatprep.subr.bf16.mxu0 0
  %560 = vmatpush1.bf16.msra.mxu0 %v522
  %561 = vmatprep.subr.bf16.mxu0 0
  %562 = vmatpush1.bf16.msra.mxu0 %v523
  %563 = vmatprep.subr.bf16.mxu0 0
  %564 = vmatpush1.bf16.msra.mxu0 %v524
  %565 = vmatprep.subr.bf16.mxu0 0
  %566 = vmatpush1.bf16.msra.mxu0 %v525
  %567 = vmatprep.subr.bf16.mxu0 0
  %568 = vmatpush1.bf16.msra.mxu0 %v526
  %569 = vmatprep.subr.bf16.mxu0 0
  %570 = vmatpush1.bf16.msra.mxu0 %v527
  %571 = vmatprep.subr.bf16.mxu0 0
  %572 = vmatpush1.bf16.msra.mxu0 %v528
  %573 = vmatprep.subr.bf16.mxu0 0
  %574 = vmatpush1.bf16.msra.mxu0 %v529
  %575 = vmatprep.subr.bf16.mxu0 0
  %576 = vmatpush1.bf16.msra.mxu0 %v530
  %577 = vmatprep.subr.bf16.mxu0 0
  %578 = vmatpush1.bf16.msra.mxu0 %v531
  %579 = vmatprep.subr.bf16.mxu0 0
  %580 = vmatpush1.bf16.msra.mxu0 %v532
  %581 = vmatprep.mubr.bf16.mxu0 %v438
  %582 = vmatmul.mubr.bf16.gmra.mrb[0].mxu0 %v437
  %v583 = vpop.f32.mrb[0].mxu0
  %v584 = vadd.f32 %v411, %v583
  %v585 = vpop.f32.mrb[0].mxu0
  %v586 = vpop.f32.mrb[0].mxu0
  %v587 = vadd.f32 %v411, %v586
  %v588 = vpop.f32.mrb[0].mxu0
  %589 = vmatprep.mubr.bf16.mxu0 %v440
  %590 = vmatmul.mubr.bf16.gmra.mrb[0].mxu0 %v439
  %v591 = vpop.f32.mrb[0].mxu0
  %v592 = vadd.f32 %v411, %v591
  %v593 = vpop.f32.mrb[0].mxu0
  %v594 = vpop.f32.mrb[0].mxu0
  %v595 = vadd.f32 %v411, %v594
  %v596 = vpop.f32.mrb[0].mxu0
  %597 = vmatprep.mubr.bf16.mxu0 %v442
  %598 = vmatmul.mubr.bf16.gmra.mrb[0].mxu0 %v441
  %v599 = vpop.f32.mrb[0].mxu0
  %v600 = vadd.f32 %v411, %v599
  %v601 = vpop.f32.mrb[0].mxu0
  %v602 = vpop.f32.mrb[0].mxu0
  %v603 = vadd.f32 %v411, %v602
  %v604 = vpop.f32.mrb[0].mxu0
  %605 = vmatprep.mubr.bf16.mxu0 %v444
  %606 = vmatmul.mubr.bf16.gmra.mrb[0].mxu0 %v443
  %v607 = vpop.f32.mrb[0].mxu0
  %v608 = vadd.f32 %v411, %v607
  %v609 = vpop.f32.mrb[0].mxu0
  %v610 = vpop.f32.mrb[0].mxu0
  %v611 = vadd.f32 %v411, %v610
  %v612 = vpop.f32.mrb[0].mxu0
  %613 = vdwg.mxu0
  %614 = vst.msk [vmem:[#allocation5] sm:$0xff] %vm357, %v584
  %615 = vst.msk [vmem:[#allocation5 + $0x8] sm:$0xff] %vm357, %v587
  %616 = vst.msk [vmem:[#allocation5 + $0x10] sm:$0xff] %vm357, %v592
  %617 = vst.msk [vmem:[#allocation5 + $0x18] sm:$0xff] %vm357, %v595
  %618 = vst.msk [vmem:[#allocation5 + $0x20] sm:$0xff] %vm357, %v600
  %619 = vst.msk [vmem:[#allocation5 + $0x28] sm:$0xff] %vm357, %v603
  %620 = vst.msk [vmem:[#allocation5 + $0x30] sm:$0xff] %vm357, %v608
  %621 = vst.msk [vmem:[#allocation5 + $0x38] sm:$0xff] %vm357, %v611
  %v622 = vld [vmem:[%s7] sm:$0xff]
  %v623 = vld [vmem:[%s7 + $0x8] sm:$0xff]
  %v624 = vld [vmem:[%s7 + $0x10] sm:$0xff]
  %v625 = vld [vmem:[%s7 + $0x18] sm:$0xff]
  %v626 = vld [vmem:[%s9] sm:$0xff]
  %v627 = vld [vmem:[%s9 + $0x8] sm:$0xff]
  %v628 = vld [vmem:[%s9 + $0x10] sm:$0xff]
  %v629 = vld [vmem:[%s9 + $0x18] sm:$0xff]
  %v630 = vld [vmem:[%s8] sm:$0x1]
  %v631 = vld [vmem:[%s10] sm:$0x1]
  %v632 = vld [vmem:[#allocation2] sm:$0xff]
  %v633 = vld [vmem:[#allocation3] sm:$0xff]
  loop: start=0, step=1, limit=8
  $region50: #{acoustic_model_forward.6} parent=0 // loop_pre_header
    _
  $region51: #{acoustic_model_forward.6} parent=0 // loop_header
    %s635 = sphi 0, %s639
    %p636 = scmp.ge.s32.totalorder %s635, 8
    %v640 = vphi %v632, %v907
    %v641 = vphi %v633, %v911
  $region52: #{acoustic_model_forward.6} parent=0 // loop_header_branch
    %638 = sbr.rel (%p636) target = $region56
  $region53: #{acoustic_model_forward.6} parent=0 // loop_body
    %s642 = smul.u32 %s635, 8
    %s643 = scalar_lea.vmem [#allocation4], %s642
    %v644 = vld [vmem:[%s643] sm:$0xff]
    %vm645 = vcmask 261120
    %v647 = vsel %vm645, %v640, 0
    %649 = vmatprep.subr.mxu0 0.0
    %650 = vmatpush1.msra.mxu0 %v622
    %651 = vmatprep.subr.mxu0 0.0
    %652 = vmatpush1.msra.mxu0 %v623
    %653 = vmatprep.subr.mxu0 0.0
    %654 = vmatpush1.msra.mxu0 %v624
    %655 = vmatprep.subr.mxu0 0.0
    %656 = vmatpush1.msra.mxu0 %v625
    %657 = vmatprep.subr.mxu0 0.0
    %658 = vmatpush1.msra.mxu0 0.0
    %659 = vmatprep.subr.mxu0 0.0
    %660 = vmatpush1.msra.mxu0 0.0
    %661 = vmatprep.subr.mxu0 0.0
    %662 = vmatpush1.msra.mxu0 0.0
    %663 = vmatprep.subr.mxu0 0.0
    %664 = vmatpush1.msra.mxu0 0.0
    %665 = vmatprep.subr.mxu0 0.0
    %666 = vmatpush1.msra.mxu0 0.0
    %667 = vmatprep.subr.mxu0 0.0
    %668 = vmatpush1.msra.mxu0 0.0
    %669 = vmatprep.subr.mxu0 0.0
    %670 = vmatpush1.msra.mxu0 0.0
    %671 = vmatprep.subr.mxu0 0.0
    %672 = vmatpush1.msra.mxu0 0.0
    %673 = vmatprep.subr.mxu0 0.0
    %674 = vmatpush1.msra.mxu0 0.0
    %675 = vmatprep.subr.mxu0 0.0
    %676 = vmatpush1.msra.mxu0 0.0
    %677 = vmatprep.subr.mxu0 0.0
    %678 = vmatpush1.msra.mxu0 0.0
    %679 = vmatprep.subr.mxu0 0.0
    %680 = vmatpush1.msra.mxu0 0.0
    %681 = vmatprep.subr.mxu0 0.0
    %682 = vmatpush1.msra.mxu0 0.0
    %683 = vmatprep.subr.mxu0 0.0
    %684 = vmatpush1.msra.mxu0 0.0
    %685 = vmatprep.subr.mxu0 0.0
    %686 = vmatpush1.msra.mxu0 0.0
    %687 = vmatprep.subr.mxu0 0.0
    %688 = vmatpush1.msra.mxu0 0.0
    %689 = vmatprep.subr.mxu0 0.0
    %690 = vmatpush1.msra.mxu0 0.0
    %691 = vmatprep.subr.mxu0 0.0
    %692 = vmatpush1.msra.mxu0 0.0
    %693 = vmatprep.subr.mxu0 0.0
    %694 = vmatpush1.msra.mxu0 0.0
    %695 = vmatprep.subr.mxu0 0.0
    %696 = vmatpush1.msra.mxu0 0.0
    %697 = vmatprep.subr.mxu0 0.0
    %698 = vmatpush1.msra.mxu0 0.0
    %699 = vmatprep.subr.mxu0 0.0
    %700 = vmatpush1.msra.mxu0 0.0
    %701 = vmatprep.subr.mxu0 0.0
    %702 = vmatpush1.msra.mxu0 0.0
    %703 = vmatprep.subr.mxu0 0.0
    %704 = vmatpush1.msra.mxu0 0.0
    %705 = vmatprep.subr.mxu0 0.0
    %706 = vmatpush1.msra.mxu0 0.0
    %707 = vmatprep.subr.mxu0 0.0
    %708 = vmatpush1.msra.mxu0 0.0
    %709 = vmatprep.subr.mxu0 0.0
    %710 = vmatpush1.msra.mxu0 0.0
    %711 = vmatprep.subr.mxu0 0.0
    %712 = vmatpush1.msra.mxu0 0.0
    %713 = vmatprep.mubr.f32.mxu0 0.0
    %714 = vmatmul.mubr.f32.gmra.mrb[0].mxu0 %v647
    %v715 = vpop.f32.mrb[0].mxu0
    %v716 = vadd.f32 0.0, %v715
    %v717 = vpop.f32.mrb[0].mxu0
    %718 = vdwg.mxu0
    %v719 = vadd.f32 %v644, %v716
    %v720 = vxor.u32 %v719, 2147483648
    %v721 = vmul.f32 %v720, 1.442695
    %v722 = vpow.pop %v721
    %v723 = vadd.f32 %v722, 1.0
    %v724 = vrcp.pop %v723
    %v725 = vmul.f32 1.0, %v724
    %v727 = vlaneseq
    %v728 = vshrl.u32 %v727, 7
    %v729 = vsub.s32 0, %v728
    %v730 = vrot.slane %v630, %v729
    %731 = vrot.lane.b32.xlu0 %v730, 64
    %v732 = vpop.permute.xlu0 %731
    %v734 = vadd.f32 %v716, %v732
    %736 = vrot.lane.b32.xlu0 %v734, 64
    %v737 = vpop.permute.xlu0 %736
    %v739 = vmul.f32 %v725, %v737
    %741 = vrot.lane.b32.xlu0 %v739, 64
    %v742 = vpop.permute.xlu0 %741
    %v744 = vadd.f32 %v644, %v742
    %v745 = vtanh.pop %v744
    %v746 = vsub.f32 1.0, %v725
    %748 = vrot.lane.b32.xlu0 %v745, 96
    %v749 = vpop.permute.xlu0 %748
    %v751 = vmul.f32 %v746, %v749
    %752 = vrot.lane.b32.xlu0 %v640, 32
    %v753 = vpop.permute.xlu0 %752
    %v755 = vmul.f32 %v725, %v753
    %v756 = vadd.f32 %v751, %v755
    %v757 = vpack.c.bf16 %v756, %v756
    %v759 = vunpack.c.l.b16 %v757
    %v760 = vpack.c.b16 %v759, %v759
    %761 = vrot.lane.b32.xlu0 %v760, 96
    %v762 = vpop.permute.xlu0 %761
    %s764 = sshra.s32 %s642, 3
    %s765 = sand.u32 %s642, 7
    %s766 = smul.addr %s764, 4
    %s767 = scalar_lea.vmem %s11, %s766
    %vm768 = vcmask 257024
    %769 = vst.msk [vmem:[%s767] sm:$0xf] %vm768, %v762
    %s770 = ssub.s32 7, %s635
    %s771 = smul.u32 %s770, 8
    %s772 = scalar_lea.vmem [#allocation5], %s771
    %v773 = vld [vmem:[%s772] sm:$0xff]
    %v775 = vsel %vm645, %v641, 0
    %777 = vmatprep.subr.mxu0 0.0
    %778 = vmatpush1.msra.mxu0 %v626
    %779 = vmatprep.subr.mxu0 0.0
    %780 = vmatpush1.msra.mxu0 %v627
    %781 = vmatprep.subr.mxu0 0.0
    %782 = vmatpush1.msra.mxu0 %v628
    %783 = vmatprep.subr.mxu0 0.0
    %784 = vmatpush1.msra.mxu0 %v629
    %785 = vmatprep.subr.mxu0 0.0
    %786 = vmatpush1.msra.mxu0 0.0
    %787 = vmatprep.subr.mxu0 0.0
    %788 = vmatpush1.msra.mxu0 0.0
    %789 = vmatprep.subr.mxu0 0.0
    %790 = vmatpush1.msra.mxu0 0.0
    %791 = vmatprep.subr.mxu0 0.0
    %792 = vmatpush1.msra.mxu0 0.0
    %793 = vmatprep.subr.mxu0 0.0
    %794 = vmatpush1.msra.mxu0 0.0
    %795 = vmatprep.subr.mxu0 0.0
    %796 = vmatpush1.msra.mxu0 0.0
    %797 = vmatprep.subr.mxu0 0.0
    %798 = vmatpush1.msra.mxu0 0.0
    %799 = vmatprep.subr.mxu0 0.0
    %800 = vmatpush1.msra.mxu0 0.0
    %801 = vmatprep.subr.mxu0 0.0
    %802 = vmatpush1.msra.mxu0 0.0
    %803 = vmatprep.subr.mxu0 0.0
    %804 = vmatpush1.msra.mxu0 0.0
    %805 = vmatprep.subr.mxu0 0.0
    %806 = vmatpush1.msra.mxu0 0.0
    %807 = vmatprep.subr.mxu0 0.0
    %808 = vmatpush1.msra.mxu0 0.0
    %809 = vmatprep.subr.mxu0 0.0
    %810 = vmatpush1.msra.mxu0 0.0
    %811 = vmatprep.subr.mxu0 0.0
    %812 = vmatpush1.msra.mxu0 0.0
    %813 = vmatprep.subr.mxu0 0.0
    %814 = vmatpush1.msra.mxu0 0.0
    %815 = vmatprep.subr.mxu0 0.0
    %816 = vmatpush1.msra.mxu0 0.0
    %817 = vmatprep.subr.mxu0 0.0
    %818 = vmatpush1.msra.mxu0 0.0
    %819 = vmatprep.subr.mxu0 0.0
    %820 = vmatpush1.msra.mxu0 0.0
    %821 = vmatprep.subr.mxu0 0.0
    %822 = vmatpush1.msra.mxu0 0.0
    %823 = vmatprep.subr.mxu0 0.0
    %824 = vmatpush1.msra.mxu0 0.0
    %825 = vmatprep.subr.mxu0 0.0
    %826 = vmatpush1.msra.mxu0 0.0
    %827 = vmatprep.subr.mxu0 0.0
    %828 = vmatpush1.msra.mxu0 0.0
    %829 = vmatprep.subr.mxu0 0.0
    %830 = vmatpush1.msra.mxu0 0.0
    %831 = vmatprep.subr.mxu0 0.0
    %832 = vmatpush1.msra.mxu0 0.0
    %833 = vmatprep.subr.mxu0 0.0
    %834 = vmatpush1.msra.mxu0 0.0
    %835 = vmatprep.subr.mxu0 0.0
    %836 = vmatpush1.msra.mxu0 0.0
    %837 = vmatprep.subr.mxu0 0.0
    %838 = vmatpush1.msra.mxu0 0.0
    %839 = vmatprep.subr.mxu0 0.0
    %840 = vmatpush1.msra.mxu0 0.0
    %841 = vmatprep.mubr.f32.mxu0 0.0
    %842 = vmatmul.mubr.f32.gmra.mrb[0].mxu0 %v775
    %v843 = vpop.f32.mrb[0].mxu0
    %v844 = vadd.f32 0.0, %v843
    %v845 = vpop.f32.mrb[0].mxu0
    %846 = vdwg.mxu0
    %v847 = vadd.f32 %v773, %v844
    %v848 = vxor.u32 %v847, 2147483648
    %v849 = vmul.f32 %v848, 1.442695
    %v850 = vpow.pop %v849
    %v851 = vadd.f32 %v850, 1.0
    %v852 = vrcp.pop %v851
    %v853 = vmul.f32 1.0, %v852
    %v855 = vlaneseq
    %v856 = vshrl.u32 %v855, 7
    %v857 = vsub.s32 0, %v856
    %v858 = vrot.slane %v631, %v857
    %859 = vrot.lane.b32.xlu0 %v858, 64
    %v860 = vpop.permute.xlu0 %859
    %v862 = vadd.f32 %v844, %v860
    %864 = vrot.lane.b32.xlu0 %v862, 64
    %v865 = vpop.permute.xlu0 %864
    %v867 = vmul.f32 %v853, %v865
    %869 = vrot.lane.b32.xlu0 %v867, 64
    %v870 = vpop.permute.xlu0 %869
    %v872 = vadd.f32 %v773, %v870
    %v873 = vtanh.pop %v872
    %v874 = vsub.f32 1.0, %v853
    %876 = vrot.lane.b32.xlu0 %v873, 96
    %v877 = vpop.permute.xlu0 %876
    %v879 = vmul.f32 %v874, %v877
    %880 = vrot.lane.b32.xlu0 %v641, 32
    %v881 = vpop.permute.xlu0 %880
    %v883 = vmul.f32 %v853, %v881
    %v884 = vadd.f32 %v879, %v883
    %s885 = scalar_lea.vmem %s90, %s771
    %v886 = vld [vmem:[%s885] sm:$0xff]
    %888 = vset.pattern.permute.xlu0 0
    %889 = vperm.xlu0 %888, %v886
    %v890 = vpop.permute.xlu0 %889
    %v892 = vmul.f32 %v884, %v890
    %v893 = vpack.c.bf16 %v892, %v892
    %v895 = vunpack.c.l.b16 %v893
    %v896 = vpack.c.b16 %v895, %v895
    %897 = vrot.lane.b32.xlu0 %v896, 96
    %v898 = vpop.permute.xlu0 %897
    %s900 = sshra.s32 %s771, 3
    %s901 = sand.u32 %s771, 7
    %s902 = smul.addr %s900, 4
    %s903 = scalar_lea.vmem %s98, %s902
    %904 = vst.msk [vmem:[%s903] sm:$0xf] %vm768, %v898
    %906 = vrot.lane.b32.xlu0 %v756, 96
    %v907 = vpop.permute.xlu0 %906
    %910 = vrot.lane.b32.xlu0 %v892, 96
    %v911 = vpop.permute.xlu0 %910
  $region54: #{acoustic_model_forward.6} parent=0 // loop_footer
    %s639 = sadd.s32 1, %s635
  $region55: #{acoustic_model_forward.6} parent=0 // loop_footer_branch
    %634 = sbr.rel target = $region51
  $region56: #{acoustic_model_forward.6} parent=0 // loop_exit
    _
  %vm913 = vcmask 261120
  %914 = vst.msk [vmem:[#allocation2] sm:$0xff] %vm913, %v640
  %915 = vst.msk [vmem:[#allocation3] sm:$0xff] %vm913, %v641
  %s916 = ssub.s32 0, 0
  %s917 = smul.u32 8, %s916
  %p918 = scmp.lt.s32.totalorder %s917, 7
  %s919 = scalar_select %p918, %s917, 7
  %s920 = smul.addr %s919, 4
  %s921 = scalar_lea.vmem %s12, %s920
  // Predicated region
  $region57: #{acoustic_model_forward.6} parent=0 // pred_check
    _
  $region58: #{acoustic_model_forward.6} parent=0 // pred_check_branch
    %923 = sbr.rel (0) target = $region60
  $region59: #{acoustic_model_forward.6} parent=0 // pred_region
    _
  $region60: #{acoustic_model_forward.6} parent=0 // pred_fallthru
    _
  // Predicated region
  $region61: #{acoustic_model_forward.6} parent=0 // pred_check
    _
  $region62: #{acoustic_model_forward.6} parent=0 // pred_check_branch
    %925 = sbr.rel (0) target = $region64
  $region63: #{acoustic_model_forward.6} parent=0 // pred_region
    %s926 = ssub.s32 0, 0
    %s927 = smul.u32 8, %s926
  $region64: #{acoustic_model_forward.6} parent=0 // pred_fallthru
    _
  // Predicated region
  $region65: #{acoustic_model_forward.6} parent=0 // pred_check
    _
  $region66: #{acoustic_model_forward.6} parent=0 // pred_check_branch
    %929 = sbr.rel (0) target = $region68
  $region67: #{acoustic_model_forward.6} parent=0 // pred_region
    _
  $region68: #{acoustic_model_forward.6} parent=0 // pred_fallthru
    _
  // Predicated region
  $region69: #{acoustic_model_forward.6} parent=0 // pred_check
    _
  $region70: #{acoustic_model_forward.6} parent=0 // pred_check_branch
    %931 = sbr.rel (0) target = $region72
  $region71: #{acoustic_model_forward.6} parent=0 // pred_region
    %s932 = ssub.s32 0, 0
    %s933 = smul.u32 8, %s932
    %p934 = scmp.lt.s32.totalorder %s933, 7
    %s935 = scalar_select %p934, %s933, 7
    %s936 = smul.addr %s935, 4
    %s937 = scalar_lea.vmem %s12, %s936
  $region72: #{acoustic_model_forward.6} parent=0 // pred_fallthru
    _

// kernel: acoustic_model_forward.7
$region0: #{acoustic_model_forward.7}
  #allocation0 [shape = 'u32[]', space=smem, size = 0x4, offset = 0x4, fixed_abs, tag = 'smem constant byte address 0x4 - core index']
  #allocation1 [shape = 'u32[144,128]{1,0:T(1,128)}', space=vmem, size = 0x12000, scoped, tag = 'internal scratch']
  %s0 = inlined_call_operand.vmem [shape: bf16[64,32], index: 0, kind: input, shape index: {}]
  %s1 = inlined_call_operand.vmem [shape: bf16[64,32], index: 1, kind: input, shape index: {}]
  %s2 = inlined_call_operand.vmem [shape: f32[64,1], index: 2, kind: input, shape index: {}]
  %s3 = inlined_call_operand.vmem [shape: bf16[32,128], index: 3, kind: input, shape index: {}]
  %s4 = inlined_call_operand.vmem [shape: f32[1,128], index: 4, kind: input, shape index: {}]
  %s5 = inlined_call_operand.vmem [shape: f32[1,128], index: 5, kind: input, shape index: {}]
  %s6 = inlined_call_operand.vmem [shape: bf16[128,128], index: 6, kind: input, shape index: {}]
  %s7 = inlined_call_operand.vmem [shape: f32[1,128], index: 7, kind: input, shape index: {}]
  %s8 = inlined_call_operand.vmem [shape: f32[64,128], index: 8, kind: output, shape index: {}]
  %s9 = sld [smem:[#allocation0]]
  $region42: #{acoustic_model_forward.7} parent=0
    _
  %s11 = ssub.s32 1, %s9
  %s12 = scalar_select 0, %s11, %s9
  // Predicated region
  $region2: #{acoustic_model_forward.7} parent=0 // pred_check
    _
  $region3: #{acoustic_model_forward.7} parent=0 // pred_check_branch
    %14 = sbr.rel (0) target = $region5
  $region4: #{acoustic_model_forward.7} parent=0 // pred_region
    _
  $region5: #{acoustic_model_forward.7} parent=0 // pred_fallthru
    _
  // Predicated region
  $region6: #{acoustic_model_forward.7} parent=0 // pred_check
    _
  $region7: #{acoustic_model_forward.7} parent=0 // pred_check_branch
    %16 = sbr.rel (0) target = $region9
  $region8: #{acoustic_model_forward.7} parent=0 // pred_region
    _
  $region9: #{acoustic_model_forward.7} parent=0 // pred_fallthru
    _
  // Predicated region
  $region10: #{acoustic_model_forward.7} parent=0 // pred_check
    _
  $region11: #{acoustic_model_forward.7} parent=0 // pred_check_branch
    %18 = sbr.rel (0) target = $region13
  $region12: #{acoustic_model_forward.7} parent=0 // pred_region
    _
  $region13: #{acoustic_model_forward.7} parent=0 // pred_fallthru
    _
  // Predicated region
  $region14: #{acoustic_model_forward.7} parent=0 // pred_check
    _
  $region15: #{acoustic_model_forward.7} parent=0 // pred_check_branch
    %20 = sbr.rel (0) target = $region17
  $region16: #{acoustic_model_forward.7} parent=0 // pred_region
    _
  $region17: #{acoustic_model_forward.7} parent=0 // pred_fallthru
    _
  // Predicated region
  $region18: #{acoustic_model_forward.7} parent=0 // pred_check
    _
  $region19: #{acoustic_model_forward.7} parent=0 // pred_check_branch
    %22 = sbr.rel (0) target = $region21
  $region20: #{acoustic_model_forward.7} parent=0 // pred_region
    _
  $region21: #{acoustic_model_forward.7} parent=0 // pred_fallthru
    _
  // Predicated region
  $region22: #{acoustic_model_forward.7} parent=0 // pred_check
    _
  $region23: #{acoustic_model_forward.7} parent=0 // pred_check_branch
    %24 = sbr.rel (0) target = $region25
  $region24: #{acoustic_model_forward.7} parent=0 // pred_region
    _
  $region25: #{acoustic_model_forward.7} parent=0 // pred_fallthru
    _
  // Predicated region
  $region26: #{acoustic_model_forward.7} parent=0 // pred_check
    _
  $region27: #{acoustic_model_forward.7} parent=0 // pred_check_branch
    %26 = sbr.rel (0) target = $region29
  $region28: #{acoustic_model_forward.7} parent=0 // pred_region
    _
  $region29: #{acoustic_model_forward.7} parent=0 // pred_fallthru
    _
  // Predicated region
  $region30: #{acoustic_model_forward.7} parent=0 // pred_check
    _
  $region31: #{acoustic_model_forward.7} parent=0 // pred_check_branch
    %28 = sbr.rel (0) target = $region33
  $region32: #{acoustic_model_forward.7} parent=0 // pred_region
    _
  $region33: #{acoustic_model_forward.7} parent=0 // pred_fallthru
    _
  %v30 = vld [vmem:[%s0] sm:$0xf]
  %v31 = vld [vmem:[%s0 + $0x4] sm:$0xf]
  %v32 = vld [vmem:[%s0 + $0x8] sm:$0xf]
  %v33 = vld [vmem:[%s0 + $0xc] sm:$0xf]
  %v34 = vld [vmem:[%s0 + $0x10] sm:$0xf]
  %v35 = vld [vmem:[%s0 + $0x14] sm:$0xf]
  %v36 = vld [vmem:[%s0 + $0x18] sm:$0xf]
  %v37 = vld [vmem:[%s0 + $0x1c] sm:$0xf]
  %v38 = vld [vmem:[%s1] sm:$0xf]
  %v39 = vld [vmem:[%s1 + $0x4] sm:$0xf]
  %v40 = vld [vmem:[%s1 + $0x8] sm:$0xf]
  %v41 = vld [vmem:[%s1 + $0xc] sm:$0xf]
  %v42 = vld [vmem:[%s1 + $0x10] sm:$0xf]
  %v43 = vld [vmem:[%s1 + $0x14] sm:$0xf]
  %v44 = vld [vmem:[%s1 + $0x18] sm:$0xf]
  %v45 = vld [vmem:[%s1 + $0x1c] sm:$0xf]
  %v46 = vadd.bf16 %v30, %v38
  %v47 = vadd.bf16 %v31, %v39
  %v48 = vadd.bf16 %v32, %v40
  %v49 = vadd.bf16 %v33, %v41
  %v50 = vadd.bf16 %v34, %v42
  %v51 = vadd.bf16 %v35, %v43
  %v52 = vadd.bf16 %v36, %v44
  %v53 = vadd.bf16 %v37, %v45
  %v54 = vld [vmem:[%s3] sm:$0xf]
  %v55 = vld [vmem:[%s3 + $0x4] sm:$0xf]
  %v56 = vld [vmem:[%s3 + $0x8] sm:$0xf]
  %v57 = vld [vmem:[%s3 + $0xc] sm:$0xf]
  %v66 = vunpack.c.l.b16 %v46
  %v67 = vunpack.c.l.b16 %v47
  %v68 = vunpack.c.l.b16 %v48
  %v69 = vunpack.c.l.b16 %v49
  %v70 = vunpack.c.l.b16 %v50
  %v71 = vunpack.c.l.b16 %v51
  %v72 = vunpack.c.l.b16 %v52
  %v73 = vunpack.c.l.b16 %v53
  %v74 = vpack.c.b16 %v67, %v66
  %v75 = vpack.c.b16 %v69, %v68
  %v76 = vpack.c.b16 %v71, %v70
  %v77 = vpack.c.b16 %v73, %v72
  %v82 = vunpack.c.l.b16 %v54
  %v83 = vunpack.c.l.b16 %v55
  %v84 = vunpack.c.l.b16 %v56
  %v85 = vunpack.c.l.b16 %v57
  %v86 = vpack.c.b16 %v83, %v82
  %v87 = vpack.c.b16 %v85, %v84
  %vm90 = vcmask 261120
  %v92 = vsel %vm90, %v74, 0
  %v95 = vsel %vm90, %v75, 0
  %v98 = vsel %vm90, %v76, 0
  %v101 = vsel %vm90, %v77, 0
  %103 = vmatprep.subr.bf16.mxu0 0
  %104 = vmatpush1.bf16.msra.mxu0 %v86
  %105 = vmatprep.subr.bf16.mxu0 0
  %106 = vmatpush1.bf16.msra.mxu0 %v87
  %107 = vmatprep.subr.bf16.mxu0 0
  %108 = vmatpush1.bf16.msra.mxu0 0
  %109 = vmatprep.subr.bf16.mxu0 0
  %110 = vmatpush1.bf16.msra.mxu0 0
  %111 = vmatprep.subr.bf16.mxu0 0
  %112 = vmatpush1.bf16.msra.mxu0 0
  %113 = vmatprep.subr.bf16.mxu0 0
  %114 = vmatpush1.bf16.msra.mxu0 0
  %115 = vmatprep.subr.bf16.mxu0 0
  %116 = vmatpush1.bf16.msra.mxu0 0
  %117 = vmatprep.subr.bf16.mxu0 0
  %118 = vmatpush1.bf16.msra.mxu0 0
  %119 = vmatprep.subr.bf16.mxu0 0
  %120 = vmatpush1.bf16.msra.mxu0 0
  %121 = vmatprep.subr.bf16.mxu0 0
  %122 = vmatpush1.bf16.msra.mxu0 0
  %123 = vmatprep.subr.bf16.mxu0 0
  %124 = vmatpush1.bf16.msra.mxu0 0
  %125 = vmatprep.subr.bf16.mxu0 0
  %126 = vmatpush1.bf16.msra.mxu0 0
  %127 = vmatprep.subr.bf16.mxu0 0
  %128 = vmatpush1.bf16.msra.mxu0 0
  %129 = vmatprep.subr.bf16.mxu0 0
  %130 = vmatpush1.bf16.msra.mxu0 0
  %131 = vmatprep.subr.bf16.mxu0 0
  %132 = vmatpush1.bf16.msra.mxu0 0
  %133 = vmatprep.subr.bf16.mxu0 0
  %134 = vmatpush1.bf16.msra.mxu0 0
  %135 = vmatprep.mubr.bf16.mxu0 0
  %136 = vmatmul.mubr.bf16.gmra.mrb[0].mxu0 %v92
  %v137 = vpop.f32.mrb[0].mxu0
  %v138 = vadd.f32 0.0, %v137
  %v139 = vpop.f32.mrb[0].mxu0
  %v140 = vpop.f32.mrb[0].mxu0
  %v141 = vadd.f32 0.0, %v140
  %v142 = vpop.f32.mrb[0].mxu0
  %143 = vmatprep.mubr.bf16.mxu0 0
  %144 = vmatmul.mubr.bf16.gmra.mrb[0].mxu0 %v95
  %v145 = vpop.f32.mrb[0].mxu0
  %v146 = vadd.f32 0.0, %v145
  %v147 = vpop.f32.mrb[0].mxu0
  %v148 = vpop.f32.mrb[0].mxu0
  %v149 = vadd.f32 0.0, %v148
  %v150 = vpop.f32.mrb[0].mxu0
  %151 = vmatprep.mubr.bf16.mxu0 0
  %152 = vmatmul.mubr.bf16.gmra.mrb[0].mxu0 %v98
  %v153 = vpop.f32.mrb[0].mxu0
  %v154 = vadd.f32 0.0, %v153
  %v155 = vpop.f32.mrb[0].mxu0
  %v156 = vpop.f32.mrb[0].mxu0
  %v157 = vadd.f32 0.0, %v156
  %v158 = vpop.f32.mrb[0].mxu0
  %159 = vmatprep.mubr.bf16.mxu0 0
  %160 = vmatmul.mubr.bf16.gmra.mrb[0].mxu0 %v101
  %v161 = vpop.f32.mrb[0].mxu0
  %v162 = vadd.f32 0.0, %v161
  %v163 = vpop.f32.mrb[0].mxu0
  %v164 = vpop.f32.mrb[0].mxu0
  %v165 = vadd.f32 0.0, %v164
  %v166 = vpop.f32.mrb[0].mxu0
  %167 = vdwg.mxu0
  %v168 = vld [vmem:[%s4] sm:$0x1]
  %v170 = vlaneseq
  %v171 = vshrl.u32 %v170, 7
  %v172 = vsub.s32 0, %v171
  %v173 = vrot.slane %v168, %v172
  %v175 = vmul.f32 %v138, %v173
  %v176 = vmul.f32 %v141, %v173
  %v177 = vmul.f32 %v146, %v173
  %v178 = vmul.f32 %v149, %v173
  %v179 = vmul.f32 %v154, %v173
  %v180 = vmul.f32 %v157, %v173
  %v181 = vmul.f32 %v162, %v173
  %v182 = vmul.f32 %v165, %v173
  %v183 = vld [vmem:[%s5] sm:$0x1]
  %v185 = vlaneseq
  %v186 = vshrl.u32 %v185, 7
  %v187 = vsub.s32 0, %v186
  %v188 = vrot.slane %v183, %v187
  %v190 = vadd.f32 %v175, %v188
  %v191 = vadd.f32 %v176, %v188
  %v192 = vadd.f32 %v177, %v188
  %v193 = vadd.f32 %v178, %v188
  %v194 = vadd.f32 %v179, %v188
  %v195 = vadd.f32 %v180, %v188
  %v196 = vadd.f32 %v181, %v188
  %v197 = vadd.f32 %v182, %v188
  %v198 = vmax.f32 %v190, 0.0
  %v199 = vmax.f32 %v191, 0.0
  %v200 = vmax.f32 %v192, 0.0
  %v201 = vmax.f32 %v193, 0.0
  %v202 = vmax.f32 %v194, 0.0
  %v203 = vmax.f32 %v195, 0.0
  %v204 = vmax.f32 %v196, 0.0
  %v205 = vmax.f32 %v197, 0.0
  %v206 = vpack.c.bf16 %v199, %v198
  %v207 = vpack.c.bf16 %v201, %v200
  %v208 = vpack.c.bf16 %v203, %v202
  %v209 = vpack.c.bf16 %v205, %v204
  %v210 = vld [vmem:[%s6] sm:$0xf]
  %v211 = vld [vmem:[%s6 + $0x4] sm:$0xf]
  %v212 = vld [vmem:[%s6 + $0x8] sm:$0xf]
  %v213 = vld [vmem:[%s6 + $0xc] sm:$0xf]
  %v214 = vld [vmem:[%s6 + $0x10] sm:$0xf]
  %v215 = vld [vmem:[%s6 + $0x14] sm:$0xf]
  %v216 = vld [vmem:[%s6 + $0x18] sm:$0xf]
  %v217 = vld [vmem:[%s6 + $0x1c] sm:$0xf]
  %v218 = vld [vmem:[%s6 + $0x20] sm:$0xf]
  %v219 = vld [vmem:[%s6 + $0x24] sm:$0xf]
  %v220 = vld [vmem:[%s6 + $0x28] sm:$0xf]
  %v221 = vld [vmem:[%s6 + $0x2c] sm:$0xf]
  %v222 = vld [vmem:[%s6 + $0x30] sm:$0xf]
  %v223 = vld [vmem:[%s6 + $0x34] sm:$0xf]
  %v224 = vld [vmem:[%s6 + $0x38] sm:$0xf]
  %v225 = vld [vmem:[%s6 + $0x3c] sm:$0xf]
  %v226 = vld [vmem:[%s7] sm:$0x1]
  %v228 = vlaneseq
  %v229 = vshrl.u32 %v228, 7
  %v230 = vsub.s32 0, %v229
  %v231 = vrot.slane %v226, %v230
  %v249 = vunpack.c.l.b16 %v210
  %v250 = vunpack.c.l.b16 %v211
  %v251 = vunpack.c.l.b16 %v212
  %v252 = vunpack.c.l.b16 %v213
  %v253 = vunpack.c.l.b16 %v214
  %v254 = vunpack.c.l.b16 %v215
  %v255 = vunpack.c.l.b16 %v216
  %v256 = vunpack.c.l.b16 %v217
  %v257 = vunpack.c.l.b16 %v218
  %v258 = vunpack.c.l.b16 %v219
  %v259 = vunpack.c.l.b16 %v220
  %v260 = vunpack.c.l.b16 %v221
  %v261 = vunpack.c.l.b16 %v222
  %v262 = vunpack.c.l.b16 %v223
  %v263 = vunpack.c.l.b16 %v224
  %v264 = vunpack.c.l.b16 %v225
  %v265 = vpack.c.b16 %v250, %v249
  %v266 = vpack.c.b16 %v252, %v251
  %v267 = vpack.c.b16 %v254, %v253
  %v268 = vpack.c.b16 %v256, %v255
  %v269 = vpack.c.b16 %v258, %v257
  %v270 = vpack.c.b16 %v260, %v259
  %v271 = vpack.c.b16 %v262, %v261
  %v272 = vpack.c.b16 %v264, %v263
  %281 = vmatprep.subr.bf16.mxu0 0
  %282 = vmatpush1.bf16.msra.mxu0 %v265
  %283 = vmatprep.subr.bf16.mxu0 0
  %284 = vmatpush1.bf16.msra.mxu0 %v266
  %285 = vmatprep.subr.bf16.mxu0 0
  %286 = vmatpush1.bf16.msra.mxu0 %v267
  %287 = vmatprep.subr.bf16.mxu0 0
  %288 = vmatpush1.bf16.msra.mxu0 %v268
  %289 = vmatprep.subr.bf16.mxu0 0
  %290 = vmatpush1.bf16.msra.mxu0 %v269
  %291 = vmatprep.subr.bf16.mxu0 0
  %292 = vmatpush1.bf16.msra.mxu0 %v270
  %293 = vmatprep.subr.bf16.mxu0 0
  %294 = vmatpush1.bf16.msra.mxu0 %v271
  %295 = vmatprep.subr.bf16.mxu0 0
  %296 = vmatpush1.bf16.msra.mxu0 %v272
  %297 = vmatprep.subr.bf16.mxu0 0
  %298 = vmatpush1.bf16.msra.mxu0 0
  %299 = vmatprep.subr.bf16.mxu0 0
  %300 = vmatpush1.bf16.msra.mxu0 0
  %301 = vmatprep.subr.bf16.mxu0 0
  %302 = vmatpush1.bf16.msra.mxu0 0
  %303 = vmatprep.subr.bf16.mxu0 0
  %304 = vmatpush1.bf16.msra.mxu0 0
  %305 = vmatprep.subr.bf16.mxu0 0
  %306 = vmatpush1.bf16.msra.mxu0 0
  %307 = vmatprep.subr.bf16.mxu0 0
  %308 = vmatpush1.bf16.msra.mxu0 0
  %309 = vmatprep.subr.bf16.mxu0 0
  %310 = vmatpush1.bf16.msra.mxu0 0
  %311 = vmatprep.subr.bf16.mxu0 0
  %312 = vmatpush1.bf16.msra.mxu0 0
  %313 = vmatprep.mubr.bf16.mxu0 0
  %314 = vmatmul.mubr.bf16.gmra.mrb[0].mxu0 %v206
  %v315 = vpop.f32.mrb[0].mxu0
  %v316 = vadd.f32 %v231, %v315
  %v317 = vpop.f32.mrb[0].mxu0
  %v318 = vpop.f32.mrb[0].mxu0
  %v319 = vadd.f32 %v231, %v318
  %v320 = vpop.f32.mrb[0].mxu0
  %321 = vmatprep.mubr.bf16.mxu0 0
  %322 = vmatmul.mubr.bf16.gmra.mrb[0].mxu0 %v207
  %v323 = vpop.f32.mrb[0].mxu0
  %v324 = vadd.f32 %v231, %v323
  %v325 = vpop.f32.mrb[0].mxu0
  %v326 = vpop.f32.mrb[0].mxu0
  %v327 = vadd.f32 %v231, %v326
  %v328 = vpop.f32.mrb[0].mxu0
  %329 = vmatprep.mubr.bf16.mxu0 0
  %330 = vmatmul.mubr.bf16.gmra.mrb[0].mxu0 %v208
  %v331 = vpop.f32.mrb[0].mxu0
  %v332 = vadd.f32 %v231, %v331
  %v333 = vpop.f32.mrb[0].mxu0
  %v334 = vpop.f32.mrb[0].mxu0
  %v335 = vadd.f32 %v231, %v334
  %v336 = vpop.f32.mrb[0].mxu0
  %337 = vmatprep.mubr.bf16.mxu0 0
  %338 = vmatmul.mubr.bf16.gmra.mrb[0].mxu0 %v209
  %v339 = vpop.f32.mrb[0].mxu0
  %v340 = vadd.f32 %v231, %v339
  %v341 = vpop.f32.mrb[0].mxu0
  %v342 = vpop.f32.mrb[0].mxu0
  %v343 = vadd.f32 %v231, %v342
  %v344 = vpop.f32.mrb[0].mxu0
  %345 = vdwg.mxu0
  %346 = vmax.xlane.f32.xlu0 %v316
  %v347 = vpop.xlane.xlu0 %346
  %348 = vmax.xlane.f32.xlu0 %v319
  %v349 = vpop.xlane.xlu0 %348
  %350 = vmax.xlane.f32.xlu0 %v324
  %v351 = vpop.xlane.xlu0 %350
  %352 = vmax.xlane.f32.xlu0 %v327
  %v353 = vpop.xlane.xlu0 %352
  %354 = vmax.xlane.f32.xlu0 %v332
  %v355 = vpop.xlane.xlu0 %354
  %356 = vmax.xlane.f32.xlu0 %v335
  %v357 = vpop.xlane.xlu0 %356
  %358 = vmax.xlane.f32.xlu0 %v340
  %v359 = vpop.xlane.xlu0 %358
  %360 = vmax.xlane.f32.xlu0 %v343
  %v361 = vpop.xlane.xlu0 %360
  %v362 = vsub.f32 %v316, %v347
  %v363 = vsub.f32 %v319, %v349
  %v364 = vsub.f32 %v324, %v351
  %v365 = vsub.f32 %v327, %v353
  %v366 = vsub.f32 %v332, %v355
  %v367 = vsub.f32 %v335, %v357
  %v368 = vsub.f32 %v340, %v359
  %v369 = vsub.f32 %v343, %v361
  %v370 = vmul.f32 %v362, 1.442695
  %v371 = vpow.pop %v370
  %v372 = vmul.f32 %v363, 1.442695
  %v373 = vpow.pop %v372
  %v374 = vmul.f32 %v364, 1.442695
  %v375 = vpow.pop %v374
  %v376 = vmul.f32 %v365, 1.442695
  %v377 = vpow.pop %v376
  %v378 = vmul.f32 %v366, 1.442695
  %v379 = vpow.pop %v378
  %v380 = vmul.f32 %v367, 1.442695
  %v381 = vpow.pop %v380
  %v382 = vmul.f32 %v368, 1.442695
  %v383 = vpow.pop %v382
  %v384 = vmul.f32 %v369, 1.442695
  %v385 = vpow.pop %v384
  %386 = vadd.xlane.f32.xlu0 %v371
  %v387 = vpop.xlane.xlu0 %386
  %388 = vadd.xlane.f32.xlu0 %v373
  %v389 = vpop.xlane.xlu0 %388
  %390 = vadd.xlane.f32.xlu0 %v375
  %v391 = vpop.xlane.xlu0 %390
  %392 = vadd.xlane.f32.xlu0 %v377
  %v393 = vpop.xlane.xlu0 %392
  %394 = vadd.xlane.f32.xlu0 %v379
  %v395 = vpop.xlane.xlu0 %394
  %396 = vadd.xlane.f32.xlu0 %v381
  %v397 = vpop.xlane.xlu0 %396
  %398 = vadd.xlane.f32.xlu0 %v383
  %v399 = vpop.xlane.xlu0 %398
  %400 = vadd.xlane.f32.xlu0 %v385
  %v401 = vpop.xlane.xlu0 %400
  %v402 = vlog2.pop %v387
  %v403 = vmul.f32 %v402, 0.6931472
  %v404 = vlog2.pop %v389
  %v405 = vmul.f32 %v404, 0.6931472
  %v406 = vlog2.pop %v391
  %v407 = vmul.f32 %v406, 0.6931472
  %v408 = vlog2.pop %v393
  %v409 = vmul.f32 %v408, 0.6931472
  %v410 = vlog2.pop %v395
  %v411 = vmul.f32 %v410, 0.6931472
  %v412 = vlog2.pop %v397
  %v413 = vmul.f32 %v412, 0.6931472
  %v414 = vlog2.pop %v399
  %v415 = vmul.f32 %v414, 0.6931472
  %v416 = vlog2.pop %v401
  %v417 = vmul.f32 %v416, 0.6931472
  %v418 = vsub.f32 %v362, %v403
  %v419 = vsub.f32 %v363, %v405
  %v420 = vsub.f32 %v364, %v407
  %v421 = vsub.f32 %v365, %v409
  %v422 = vsub.f32 %v366, %v411
  %v423 = vsub.f32 %v367, %v413
  %v424 = vsub.f32 %v368, %v415
  %v425 = vsub.f32 %v369, %v417
  %v426 = vld [vmem:[%s2] sm:$0xff]
  %v427 = vld [vmem:[%s2 + $0x8] sm:$0xff]
  %v428 = vld [vmem:[%s2 + $0x10] sm:$0xff]
  %v429 = vld [vmem:[%s2 + $0x18] sm:$0xff]
  %v430 = vld [vmem:[%s2 + $0x20] sm:$0xff]
  %v431 = vld [vmem:[%s2 + $0x28] sm:$0xff]
  %v432 = vld [vmem:[%s2 + $0x30] sm:$0xff]
  %v433 = vld [vmem:[%s2 + $0x38] sm:$0xff]
  %435 = vset.pattern.permute.xlu0 0
  %436 = vperm.xlu0 %435, %v426
  %v437 = vpop.permute.xlu0 %436
  %440 = vset.pattern.permute.xlu0 0
  %441 = vperm.xlu0 %440, %v427
  %v442 = vpop.permute.xlu0 %441
  %445 = vset.pattern.permute.xlu0 0
  %446 = vperm.xlu0 %445, %v428
  %v447 = vpop.permute.xlu0 %446
  %450 = vset.pattern.permute.xlu0 0
  %451 = vperm.xlu0 %450, %v429
  %v452 = vpop.permute.xlu0 %451
  %455 = vset.pattern.permute.xlu0 0
  %456 = vperm.xlu0 %455, %v430
  %v457 = vpop.permute.xlu0 %456
  %460 = vset.pattern.permute.xlu0 0
  %461 = vperm.xlu0 %460, %v431
  %v462 = vpop.permute.xlu0 %461
  %465 = vset.pattern.permute.xlu0 0
  %466 = vperm.xlu0 %465, %v432
  %v467 = vpop.permute.xlu0 %466
  %470 = vset.pattern.permute.xlu0 0
  %471 = vperm.xlu0 %470, %v433
  %v472 = vpop.permute.xlu0 %471
  %v474 = vmul.f32 %v418, %v437
  %v475 = vmul.f32 %v419, %v442
  %v476 = vmul.f32 %v420, %v447
  %v477 = vmul.f32 %v421, %v452
  %v478 = vmul.f32 %v422, %v457
  %v479 = vmul.f32 %v423, %v462
  %v480 = vmul.f32 %v424, %v467
  %v481 = vmul.f32 %v425, %v472
  %482 = vst [vmem:[%s8] sm:$0xff] %v474
  %483 = vst [vmem:[%s8 + $0x8] sm:$0xff] %v475
  %484 = vst [vmem:[%s8 + $0x10] sm:$0xff] %v476
  %485 = vst [vmem:[%s8 + $0x18] sm:$0xff] %v477
  %486 = vst [vmem:[%s8 + $0x20] sm:$0xff] %v478
  %487 = vst [vmem:[%s8 + $0x28] sm:$0xff] %v479
  %488 = vst [vmem:[%s8 + $0x30] sm:$0xff] %v480
  %489 = vst [vmem:[%s8 + $0x38] sm:$0xff] %v481
  // Predicated region
  $region34: #{acoustic_model_forward.7} parent=0 // pred_check
    _
  $region35: #{acoustic_model_forward.7} parent=0 // pred_check_branch
    %491 = sbr.rel (0) target = $region37
  $region36: #{acoustic_model_forward.7} parent=0 // pred_region
    _
  $region37: #{acoustic_model_forward.7} parent=0 // pred_fallthru
    _
  // Predicated region
  $region38: #{acoustic_model_forward.7} parent=0 // pred_check
    _
  $region39: #{acoustic_model_forward.7} parent=0 // pred_check_branch
    %493 = sbr.rel (0) target = $region41
  $region40: #{acoustic_model_forward.7} parent=0 // pred_region
    _
  $region41: #{acoustic_model_forward.7} parent=0 // pred_fallthru
    _

// kernel: acoustic_model_forward.5
$region0: #{acoustic_model_forward.5}
  #allocation0 [shape = 'u32[]', space=smem, size = 0x4, offset = 0x4, fixed_abs, tag = 'smem constant byte address 0x4 - core index']
  #allocation1 [shape = 'u32[144,128]{1,0:T(1,128)}', space=vmem, size = 0x12000, scoped, tag = 'internal scratch']
  #allocation2 [shape = 's32[1]{0}', space=sflag, size = 0x4, scoped, tag = 'scoped memory for acoustic_model_forward.5']
  #allocation3 [shape = 'u8[512]{0}', space=smem, size = 0x200, scoped, tag = 'prefetched SMEM operand 0']
  %s0 = inlined_call_operand.vmem [shape: s32[2], index: 0, kind: input, shape index: {}]
  %s1 = inlined_call_operand.vmem [shape: bf16[32,3872], index: 1, kind: input, shape index: {}]
  %s2 = inlined_call_operand.vmem [shape: f32[32,1], index: 2, kind: input, shape index: {}]
  %s3 = inlined_call_operand.vmem [shape: f32[32,1], index: 3, kind: input, shape index: {}]
  %s4 = inlined_call_operand.vmem [shape: s32[1,128], index: 4, kind: input, shape index: {}]
  %s5 = inlined_call_operand.vmem [shape: bf16[2,3872,128], index: 5, kind: input, shape index: {}]
  %s6 = inlined_call_operand.vmem [shape: bf16[2,32,128], index: 6, kind: output, shape index: {}]
  %s7 = sld [smem:[#allocation0]]
  $region53: #{acoustic_model_forward.5} parent=0
    _
  %s9 = ssub.s32 1, %s7
  %s10 = scalar_select 0, %s9, %s7
  %s11 = sshll.u32 %s0, 4
  %s12 = int_to_ptr.vmem [resolvable:$true] %s11
  %14 = dma.vmem_to_smem %s12, 16, [#allocation3], [#allocation2]
  %15 = dma.done [#allocation2], 16
  %16 = sfence
  loop: start=0, step=1, limit=4
  $region2: #{acoustic_model_forward.5} parent=0 // loop_pre_header
    _
  $region3: #{acoustic_model_forward.5} parent=0 // loop_header
    %s18 = sphi 0, %s22
    %p19 = scmp.ge.s32.totalorder %s18, 4
    %s25 = sphi 0, %s37
    %s26 = sphi 0, %s33
    %s27 = sphi 0, %s25
    %s28 = sphi 0, %s26
    %s29 = sphi 0, %s27
    %s30 = sphi 0, %s28
    %s38 = sphi 0, %s38
    %s40 = sphi 0, %s38
    %s41 = sphi 0, %s40
    %s55 = sphi 0, %s41
    %s59 = sphi 0, %s59
    %s61 = sphi 0, %s59
    %s62 = sphi 0, %s61
    %s76 = sphi 0, %s62
    %s80 = sphi 0, %s80
    %s82 = sphi 0, %s80
    %s83 = sphi 0, %s82
    %s97 = sphi 0, %s83
    %s103 = sphi 0, %s105
    %s106 = sphi 0, %s103
    %s107 = sphi 0, %s106
    %s123 = sphi 0, %s107
    %s131 = sphi 0, %s133
    %s134 = sphi 0, %s131
    %s135 = sphi 0, %s134
    %s151 = sphi 0, %s135
    %s159 = sphi 0, %s161
    %s162 = sphi 0, %s159
    %s163 = sphi 0, %s162
    %s179 = sphi 0, %s163
  $region4: #{acoustic_model_forward.5} parent=0 // loop_header_branch
    %21 = sbr.rel (%p19) target = $region8
  $region5: #{acoustic_model_forward.5} parent=0 // loop_body
    %s23 = ssub.s32 %s18, 1
    %s24 = ssub.s32 %s18, 2
    %s31 = sadd.s32 1, %s26
    %p32 = scmp.ge.s32.totalorder %s31, 1
    %s33 = scalar_select %p32, 0, %s31
    %s34 = sadd.s32 1, %s25
    %s35 = scalar_select %p32, %s34, %s25
    %p36 = scmp.ge.s32.totalorder %s35, 2
    %s37 = scalar_select %p36, 0, %s35
    %s39 = sadd.s32 %s38, 1
    %p42 = scmp.eq.s32.totalorder %s18, 1
    %p43 = scmp.ne.s32.totalorder %s38, %s40
    %p44 = scmp.eq.s32.totalorder %s18, 0
    %p45 = por %p43, %p44
    %p46 = scmp.ne.s32.totalorder %s38, %s40
    %p47 = scmp.eq.s32.totalorder %s23, 1
    %p48 = por %p46, %p47
    %p49 = scmp.ne.s32.totalorder %s40, %s41
    %p50 = scmp.eq.s32.totalorder %s23, 0
    %p51 = por %p49, %p50
    %p52 = scmp.ne.s32.totalorder %s40, %s41
    %p53 = scmp.eq.s32.totalorder %s24, 1
    %p54 = por %p52, %p53
    %p56 = scmp.ne.s32.totalorder %s41, %s55
    %p57 = scmp.eq.s32.totalorder %s24, 0
    %p58 = por %p56, %p57
    %s60 = sadd.s32 %s59, 1
    %p63 = scmp.eq.s32.totalorder %s18, 1
    %p64 = scmp.ne.s32.totalorder %s59, %s61
    %p65 = scmp.eq.s32.totalorder %s18, 0
    %p66 = por %p64, %p65
    %p67 = scmp.ne.s32.totalorder %s59, %s61
    %p68 = scmp.eq.s32.totalorder %s23, 1
    %p69 = por %p67, %p68
    %p70 = scmp.ne.s32.totalorder %s61, %s62
    %p71 = scmp.eq.s32.totalorder %s23, 0
    %p72 = por %p70, %p71
    %p73 = scmp.ne.s32.totalorder %s61, %s62
    %p74 = scmp.eq.s32.totalorder %s24, 1
    %p75 = por %p73, %p74
    %p77 = scmp.ne.s32.totalorder %s62, %s76
    %p78 = scmp.eq.s32.totalorder %s24, 0
    %p79 = por %p77, %p78
    %s81 = sadd.s32 %s80, 1
    %p84 = scmp.eq.s32.totalorder %s18, 1
    %p85 = scmp.ne.s32.totalorder %s80, %s82
    %p86 = scmp.eq.s32.totalorder %s18, 0
    %p87 = por %p85, %p86
    %p88 = scmp.ne.s32.totalorder %s80, %s82
    %p89 = scmp.eq.s32.totalorder %s23, 1
    %p90 = por %p88, %p89
    %p91 = scmp.ne.s32.totalorder %s82, %s83
    %p92 = scmp.eq.s32.totalorder %s23, 0
    %p93 = por %p91, %p92
    %p94 = scmp.ne.s32.totalorder %s82, %s83
    %p95 = scmp.eq.s32.totalorder %s24, 1
    %p96 = por %p94, %p95
    %p98 = scmp.ne.s32.totalorder %s83, %s97
    %p99 = scmp.eq.s32.totalorder %s24, 0
    %p100 = por %p98, %p99
    %s101 = ssub.s32 %s26, %s33
    %p102 = scmp.eq.s32.totalorder %s101, 0
    %s104 = sadd.s32 %s103, 1
    %s105 = scalar_select %p102, %s103, %s104
    %p108 = pneg %p102
    %p109 = scmp.eq.s32.totalorder %s18, 1
    %p110 = por %p108, %p109
    %p111 = scmp.ne.s32.totalorder %s103, %s106
    %p112 = scmp.eq.s32.totalorder %s18, 0
    %p113 = por %p111, %p112
    %p114 = scmp.ne.s32.totalorder %s103, %s106
    %p115 = scmp.eq.s32.totalorder %s23, 1
    %p116 = por %p114, %p115
    %p117 = scmp.ne.s32.totalorder %s106, %s107
    %p118 = scmp.eq.s32.totalorder %s23, 0
    %p119 = por %p117, %p118
    %p120 = scmp.ne.s32.totalorder %s106, %s107
    %p121 = scmp.eq.s32.totalorder %s24, 1
    %p122 = por %p120, %p121
    %p124 = scmp.ne.s32.totalorder %s107, %s123
    %p125 = scmp.eq.s32.totalorder %s24, 0
    %p126 = por %p124, %p125
    %s127 = ssub.s32 %s25, %s37
    %s128 = ssub.s32 %s26, %s33
    %s129 = sor.u32 %s127, %s128
    %p130 = scmp.eq.s32.totalorder %s129, 0
    %s132 = sadd.s32 %s131, 1
    %s133 = scalar_select %p130, %s131, %s132
    %p136 = pneg %p130
    %p137 = scmp.eq.s32.totalorder %s18, 1
    %p138 = por %p136, %p137
    %p139 = scmp.ne.s32.totalorder %s131, %s134
    %p140 = scmp.eq.s32.totalorder %s18, 0
    %p141 = por %p139, %p140
    %p142 = scmp.ne.s32.totalorder %s131, %s134
    %p143 = scmp.eq.s32.totalorder %s23, 1
    %p144 = por %p142, %p143
    %p145 = scmp.ne.s32.totalorder %s134, %s135
    %p146 = scmp.eq.s32.totalorder %s23, 0
    %p147 = por %p145, %p146
    %p148 = scmp.ne.s32.totalorder %s134, %s135
    %p149 = scmp.eq.s32.totalorder %s24, 1
    %p150 = por %p148, %p149
    %p152 = scmp.ne.s32.totalorder %s135, %s151
    %p153 = scmp.eq.s32.totalorder %s24, 0
    %p154 = por %p152, %p153
    %s155 = ssub.s32 %s25, %s37
    %s156 = ssub.s32 %s26, %s33
    %s157 = sor.u32 %s155, %s156
    %p158 = scmp.eq.s32.totalorder %s157, 0
    %s160 = sadd.s32 %s159, 1
    %s161 = scalar_select %p158, %s159, %s160
    %p164 = pneg %p158
    %p165 = scmp.eq.s32.totalorder %s18, 1
    %p166 = por %p164, %p165
    %p167 = scmp.ne.s32.totalorder %s159, %s162
    %p168 = scmp.eq.s32.totalorder %s18, 0
    %p169 = por %p167, %p168
    %p170 = scmp.ne.s32.totalorder %s159, %s162
    %p171 = scmp.eq.s32.totalorder %s23, 1
    %p172 = por %p170, %p171
    %p173 = scmp.ne.s32.totalorder %s162, %s163
    %p174 = scmp.eq.s32.totalorder %s23, 0
    %p175 = por %p173, %p174
    %p176 = scmp.ne.s32.totalorder %s162, %s163
    %p177 = scmp.eq.s32.totalorder %s24, 1
    %p178 = por %p176, %p177
    %p180 = scmp.ne.s32.totalorder %s163, %s179
    %p181 = scmp.eq.s32.totalorder %s24, 0
    %p182 = por %p180, %p181
    %p183 = scmp.le.s32.totalorder 1, %s18
    %p184 = scmp.lt.s32.totalorder %s18, 3
    %p185 = pnand %p183, %p184
    %p186 = pneg %p185
    // Predicated region
    $region9: #{acoustic_model_forward.5} parent=5 // pred_check
      _
    $region10: #{acoustic_model_forward.5} parent=5 // pred_check_branch
      %188 = sbr.rel (%p185) target = $region12
    $region11: #{acoustic_model_forward.5} parent=5 // pred_region
      %s189 = ssub.s32 %s18, 1
      // Predicated region
      $region13: #{acoustic_model_forward.5} parent=11 // pred_check
        %p190 = pneg %p51
      $region14: #{acoustic_model_forward.5} parent=11 // pred_check_branch
        %192 = sbr.rel (%p190) target = $region16
      $region15: #{acoustic_model_forward.5} parent=11 // pred_region
        _
      $region16: #{acoustic_model_forward.5} parent=11 // pred_fallthru
        _
      // Predicated region
      $region17: #{acoustic_model_forward.5} parent=11 // pred_check
        %p193 = pneg %p72
      $region18: #{acoustic_model_forward.5} parent=11 // pred_check_branch
        %195 = sbr.rel (%p193) target = $region20
      $region19: #{acoustic_model_forward.5} parent=11 // pred_region
        _
      $region20: #{acoustic_model_forward.5} parent=11 // pred_fallthru
        _
      // Predicated region
      $region21: #{acoustic_model_forward.5} parent=11 // pred_check
        %p196 = pneg %p93
      $region22: #{acoustic_model_forward.5} parent=11 // pred_check_branch
        %198 = sbr.rel (%p196) target = $region24
      $region23: #{acoustic_model_forward.5} parent=11 // pred_region
        _
      $region24: #{acoustic_model_forward.5} parent=11 // pred_fallthru
        _
      // Predicated region
      $region25: #{acoustic_model_forward.5} parent=11 // pred_check
        %p199 = pneg %p119
      $region26: #{acoustic_model_forward.5} parent=11 // pred_check_branch
        %201 = sbr.rel (%p199) target = $region28
      $region27: #{acoustic_model_forward.5} parent=11 // pred_region
        %p202 = scmp.lt.s32.totalorder %s28, 0
        %s203 = scalar_select %p202, %s28, 0
        %s204 = scalar_lea.vmem %s4, %s203
      $region28: #{acoustic_model_forward.5} parent=11 // pred_fallthru
        _
    $region12: #{acoustic_model_forward.5} parent=5 // pred_fallthru
      _
    %p205 = scmp.lt.s32.totalorder %s18, 2
    // Predicated region
    $region29: #{acoustic_model_forward.5} parent=5 // pred_check
      %p206 = pneg %p205
    $region30: #{acoustic_model_forward.5} parent=5 // pred_check_branch
      %208 = sbr.rel (%p206) target = $region32
    $region31: #{acoustic_model_forward.5} parent=5 // pred_region
      // Predicated region
      $region33: #{acoustic_model_forward.5} parent=31 // pred_check
        %p209 = pneg %p141
      $region34: #{acoustic_model_forward.5} parent=31 // pred_check_branch
        %211 = sbr.rel (%p209) target = $region36
      $region35: #{acoustic_model_forward.5} parent=31 // pred_region
        %p212 = scmp.lt.s32.totalorder %s25, 1
        %s213 = scalar_select %p212, %s25, 1
        %p214 = scmp.lt.s32.totalorder %s26, 0
        %s215 = scalar_select %p214, %s26, 0
        %s216 = smul.addr %s213, 484
        %s217 = sadd.s32 %s215, %s216
        %s218 = smul.addr %s217, 4
        %s219 = scalar_lea.vmem %s5, %s218
      $region36: #{acoustic_model_forward.5} parent=31 // pred_fallthru
        _
    $region32: #{acoustic_model_forward.5} parent=5 // pred_fallthru
      _
    %p220 = scmp.le.s32.totalorder 1, %s18
    %p221 = scmp.lt.s32.totalorder %s18, 3
    %p222 = pnand %p220, %p221
    %p223 = pneg %p222
    // Predicated region
    $region37: #{acoustic_model_forward.5} parent=5 // pred_check
      _
    $region38: #{acoustic_model_forward.5} parent=5 // pred_check_branch
      %225 = sbr.rel (%p222) target = $region40
    $region39: #{acoustic_model_forward.5} parent=5 // pred_region
      %s226 = ssub.s32 %s18, 1
      %p227 = pneg %p51
      %p228 = pneg %p48
      %p229 = pneg %p72
      %p230 = pneg %p69
      %p231 = pneg %p93
      %p232 = pneg %p90
      %p233 = scmp.lt.s32.totalorder %s28, 0
      %s234 = scalar_select %p233, %s28, 0
      %s235 = scalar_lea.vmem %s4, %s234
      %p236 = pneg %p119
      %p237 = pneg %p116
      %p238 = scmp.lt.s32.totalorder %s27, 1
      %s239 = scalar_select %p238, %s27, 1
      %p240 = scmp.lt.s32.totalorder %s28, 0
      %s241 = scalar_select %p240, %s28, 0
      %s242 = smul.addr %s239, 484
      %s243 = sadd.s32 %s241, %s242
      %s244 = smul.addr %s243, 4
      %s245 = scalar_lea.vmem %s5, %s244
      %p246 = pneg %p147
      %p247 = pneg %p144
      %p248 = pneg %p175
      %p249 = pneg %p172
      %p250 = scmp.lt.s32.totalorder %s27, 1
      %s251 = scalar_select %p250, %s27, 1
      %p252 = scmp.lt.s32.totalorder %s28, 0
      %s253 = scalar_select %p252, %s28, 0
      %s254 = smul.addr %s251, 4
      %s255 = sadd.s32 %s253, %s254
      %s256 = smul.addr %s255, 4
      %s257 = scalar_lea.vmem %s6, %s256
      %p258 = scmp.lt.s32.totalorder %s28, 0
      %s259 = scalar_select %p258, %s28, 0
      %s260 = scalar_lea.vmem %s4, %s259
      %p261 = scmp.lt.s32.totalorder %s27, 1
      %s262 = scalar_select %p261, %s27, 1
      %p263 = scmp.lt.s32.totalorder %s28, 0
      %s264 = scalar_select %p263, %s28, 0
      %s265 = smul.addr %s262, 484
      %s266 = sadd.s32 %s264, %s265
      %s267 = smul.addr %s266, 4
      %s268 = scalar_lea.vmem %s5, %s267
      %p269 = scmp.lt.s32.totalorder %s27, 1
      %s270 = scalar_select %p269, %s27, 1
      %p271 = scmp.lt.s32.totalorder %s28, 0
      %s272 = scalar_select %p271, %s28, 0
      %s273 = smul.addr %s270, 4
      %s274 = sadd.s32 %s272, %s273
      %s275 = smul.addr %s274, 4
      %s276 = scalar_lea.vmem %s6, %s275
      %v278 = vld [vmem:[%s1] sm:$0xff]
      %v279 = vld [vmem:[%s1 + $0x8] sm:$0xff]
      %v280 = vld [vmem:[%s1 + $0x10] sm:$0xff]
      %v281 = vld [vmem:[%s1 + $0x18] sm:$0xff]
      %v282 = vld [vmem:[%s1 + $0x20] sm:$0xff]
      %v283 = vld [vmem:[%s1 + $0x28] sm:$0xff]
      %v284 = vld [vmem:[%s1 + $0x30] sm:$0xff]
      %v285 = vld [vmem:[%s1 + $0x38] sm:$0xff]
      %v286 = vld [vmem:[%s1 + $0x40] sm:$0xff]
      %v287 = vld [vmem:[%s1 + $0x48] sm:$0xff]
      %v288 = vld [vmem:[%s1 + $0x50] sm:$0xff]
      %v289 = vld [vmem:[%s1 + $0x58] sm:$0xff]
      %v290 = vld [vmem:[%s1 + $0x60] sm:$0xff]
      %v291 = vld [vmem:[%s1 + $0x68] sm:$0xff]
      %v292 = vld [vmem:[%s1 + $0x70] sm:$0xff]
      %v293 = vld [vmem:[%s1 + $0x78] sm:$0xf]
      %v294 = vld [vmem:[%s1 + $0x7c] sm:$0xff]
      %v295 = vld [vmem:[%s1 + $0x84] sm:$0xff]
      %v296 = vld [vmem:[%s1 + $0x8c] sm:$0xff]
      %v297 = vld [vmem:[%s1 + $0x94] sm:$0xff]
      %v298 = vld [vmem:[%s1 + $0x9c] sm:$0xff]
      %v299 = vld [vmem:[%s1 + $0xa4] sm:$0xff]
      %v300 = vld [vmem:[%s1 + $0xac] sm:$0xff]
      %v301 = vld [vmem:[%s1 + $0xb4] sm:$0xff]
      %v302 = vld [vmem:[%s1 + $0xbc] sm:$0xff]
      %v303 = vld [vmem:[%s1 + $0xc4] sm:$0xff]
      %v304 = vld [vmem:[%s1 + $0xcc] sm:$0xff]
      %v305 = vld [vmem:[%s1 + $0xd4] sm:$0xff]
      %v306 = vld [vmem:[%s1 + $0xdc] sm:$0xff]
      %v307 = vld [vmem:[%s1 + $0xe4] sm:$0xff]
      %v308 = vld [vmem:[%s1 + $0xec] sm:$0xff]
      %v309 = vld [vmem:[%s1 + $0xf4] sm:$0xf]
      %v310 = vld [vmem:[%s1 + $0xf8] sm:$0xff]
      %v311 = vld [vmem:[%s1 + $0x100] sm:$0xff]
      %v312 = vld [vmem:[%s1 + $0x108] sm:$0xff]
      %v313 = vld [vmem:[%s1 + $0x110] sm:$0xff]
      %v314 = vld [vmem:[%s1 + $0x118] sm:$0xff]
      %v315 = vld [vmem:[%s1 + $0x120] sm:$0xff]
      %v316 = vld [vmem:[%s1 + $0x128] sm:$0xff]
      %v317 = vld [vmem:[%s1 + $0x130] sm:$0xff]
      %v318 = vld [vmem:[%s1 + $0x138] sm:$0xff]
      %v319 = vld [vmem:[%s1 + $0x140] sm:$0xff]
      %v320 = vld [vmem:[%s1 + $0x148] sm:$0xff]
      %v321 = vld [vmem:[%s1 + $0x150] sm:$0xff]
      %v322 = vld [vmem:[%s1 + $0x158] sm:$0xff]
      %v323 = vld [vmem:[%s1 + $0x160] sm:$0xff]
      %v324 = vld [vmem:[%s1 + $0x168] sm:$0xff]
      %v325 = vld [vmem:[%s1 + $0x170] sm:$0xf]
      %v326 = vld [vmem:[%s1 + $0x174] sm:$0xff]
      %v327 = vld [vmem:[%s1 + $0x17c] sm:$0xff]
      %v328 = vld [vmem:[%s1 + $0x184] sm:$0xff]
      %v329 = vld [vmem:[%s1 + $0x18c] sm:$0xff]
      %v330 = vld [vmem:[%s1 + $0x194] sm:$0xff]
      %v331 = vld [vmem:[%s1 + $0x19c] sm:$0xff]
      %v332 = vld [vmem:[%s1 + $0x1a4] sm:$0xff]
      %v333 = vld [vmem:[%s1 + $0x1ac] sm:$0xff]
      %v334 = vld [vmem:[%s1 + $0x1b4] sm:$0xff]
      %v335 = vld [vmem:[%s1 + $0x1bc] sm:$0xff]
      %v336 = vld [vmem:[%s1 + $0x1c4] sm:$0xff]
      %v337 = vld [vmem:[%s1 + $0x1cc] sm:$0xff]
      %v338 = vld [vmem:[%s1 + $0x1d4] sm:$0xff]
      %v339 = vld [vmem:[%s1 + $0x1dc] sm:$0xff]
      %v340 = vld [vmem:[%s1 + $0x1e4] sm:$0xff]
      %v341 = vld [vmem:[%s1 + $0x1ec] sm:$0xf]
      %v342 = vld [vmem:[%s268] sm:$0xf]
      %v343 = vld [vmem:[%s268 + $0x4] sm:$0xf]
      %v344 = vld [vmem:[%s268 + $0x8] sm:$0xf]
      %v345 = vld [vmem:[%s268 + $0xc] sm:$0xf]
      %v346 = vld [vmem:[%s268 + $0x10] sm:$0xf]
      %v347 = vld [vmem:[%s268 + $0x14] sm:$0xf]
      %v348 = vld [vmem:[%s268 + $0x18] sm:$0xf]
      %v349 = vld [vmem:[%s268 + $0x1c] sm:$0xf]
      %v350 = vld [vmem:[%s268 + $0x20] sm:$0xf]
      %v351 = vld [vmem:[%s268 + $0x24] sm:$0xf]
      %v352 = vld [vmem:[%s268 + $0x28] sm:$0xf]
      %v353 = vld [vmem:[%s268 + $0x2c] sm:$0xf]
      %v354 = vld [vmem:[%s268 + $0x30] sm:$0xf]
      %v355 = vld [vmem:[%s268 + $0x34] sm:$0xf]
      %v356 = vld [vmem:[%s268 + $0x38] sm:$0xf]
      %v357 = vld [vmem:[%s268 + $0x3c] sm:$0xf]
      %v358 = vld [vmem:[%s268 + $0x40] sm:$0xf]
      %v359 = vld [vmem:[%s268 + $0x44] sm:$0xf]
      %v360 = vld [vmem:[%s268 + $0x48] sm:$0xf]
      %v361 = vld [vmem:[%s268 + $0x4c] sm:$0xf]
      %v362 = vld [vmem:[%s268 + $0x50] sm:$0xf]
      %v363 = vld [vmem:[%s268 + $0x54] sm:$0xf]
      %v364 = vld [vmem:[%s268 + $0x58] sm:$0xf]
      %v365 = vld [vmem:[%s268 + $0x5c] sm:$0xf]
      %v366 = vld [vmem:[%s268 + $0x60] sm:$0xf]
      %v367 = vld [vmem:[%s268 + $0x64] sm:$0xf]
      %v368 = vld [vmem:[%s268 + $0x68] sm:$0xf]
      %v369 = vld [vmem:[%s268 + $0x6c] sm:$0xf]
      %v370 = vld [vmem:[%s268 + $0x70] sm:$0xf]
      %v371 = vld [vmem:[%s268 + $0x74] sm:$0xf]
      %v372 = vld [vmem:[%s268 + $0x78] sm:$0xf]
      %v373 = vld [vmem:[%s268 + $0x7c] sm:$0xf]
      %v374 = vld [vmem:[%s268 + $0x80] sm:$0xf]
      %v375 = vld [vmem:[%s268 + $0x84] sm:$0xf]
      %v376 = vld [vmem:[%s268 + $0x88] sm:$0xf]
      %v377 = vld [vmem:[%s268 + $0x8c] sm:$0xf]
      %v378 = vld [vmem:[%s268 + $0x90] sm:$0xf]
      %v379 = vld [vmem:[%s268 + $0x94] sm:$0xf]
      %v380 = vld [vmem:[%s268 + $0x98] sm:$0xf]
      %v381 = vld [vmem:[%s268 + $0x9c] sm:$0xf]
      %v382 = vld [vmem:[%s268 + $0xa0] sm:$0xf]
      %v383 = vld [vmem:[%s268 + $0xa4] sm:$0xf]
      %v384 = vld [vmem:[%s268 + $0xa8] sm:$0xf]
      %v385 = vld [vmem:[%s268 + $0xac] sm:$0xf]
      %v386 = vld [vmem:[%s268 + $0xb0] sm:$0xf]
      %v387 = vld [vmem:[%s268 + $0xb4] sm:$0xf]
      %v388 = vld [vmem:[%s268 + $0xb8] sm:$0xf]
      %v389 = vld [vmem:[%s268 + $0xbc] sm:$0xf]
      %v390 = vld [vmem:[%s268 + $0xc0] sm:$0xf]
      %v391 = vld [vmem:[%s268 + $0xc4] sm:$0xf]
      %v392 = vld [vmem:[%s268 + $0xc8] sm:$0xf]
      %v393 = vld [vmem:[%s268 + $0xcc] sm:$0xf]
      %v394 = vld [vmem:[%s268 + $0xd0] sm:$0xf]
      %v395 = vld [vmem:[%s268 + $0xd4] sm:$0xf]
      %v396 = vld [vmem:[%s268 + $0xd8] sm:$0xf]
      %v397 = vld [vmem:[%s268 + $0xdc] sm:$0xf]
      %v398 = vld [vmem:[%s268 + $0xe0] sm:$0xf]
      %v399 = vld [vmem:[%s268 + $0xe4] sm:$0xf]
      %v400 = vld [vmem:[%s268 + $0xe8] sm:$0xf]
      %v401 = vld [vmem:[%s268 + $0xec] sm:$0xf]
      %v402 = vld [vmem:[%s268 + $0xf0] sm:$0xf]
      %v403 = vld [vmem:[%s268 + $0xf4] sm:$0xf]
      %v404 = vld [vmem:[%s268 + $0xf8] sm:$0xf]
      %v405 = vld [vmem:[%s268 + $0xfc] sm:$0xf]
      %v406 = vld [vmem:[%s268 + $0x100] sm:$0xf]
      %v407 = vld [vmem:[%s268 + $0x104] sm:$0xf]
      %v408 = vld [vmem:[%s268 + $0x108] sm:$0xf]
      %v409 = vld [vmem:[%s268 + $0x10c] sm:$0xf]
      %v410 = vld [vmem:[%s268 + $0x110] sm:$0xf]
      %v411 = vld [vmem:[%s268 + $0x114] sm:$0xf]
      %v412 = vld [vmem:[%s268 + $0x118] sm:$0xf]
      %v413 = vld [vmem:[%s268 + $0x11c] sm:$0xf]
      %v414 = vld [vmem:[%s268 + $0x120] sm:$0xf]
      %v415 = vld [vmem:[%s268 + $0x124] sm:$0xf]
      %v416 = vld [vmem:[%s268 + $0x128] sm:$0xf]
      %v417 = vld [vmem:[%s268 + $0x12c] sm:$0xf]
      %v418 = vld [vmem:[%s268 + $0x130] sm:$0xf]
      %v419 = vld [vmem:[%s268 + $0x134] sm:$0xf]
      %v420 = vld [vmem:[%s268 + $0x138] sm:$0xf]
      %v421 = vld [vmem:[%s268 + $0x13c] sm:$0xf]
      %v422 = vld [vmem:[%s268 + $0x140] sm:$0xf]
      %v423 = vld [vmem:[%s268 + $0x144] sm:$0xf]
      %v424 = vld [vmem:[%s268 + $0x148] sm:$0xf]
      %v425 = vld [vmem:[%s268 + $0x14c] sm:$0xf]
      %v426 = vld [vmem:[%s268 + $0x150] sm:$0xf]
      %v427 = vld [vmem:[%s268 + $0x154] sm:$0xf]
      %v428 = vld [vmem:[%s268 + $0x158] sm:$0xf]
      %v429 = vld [vmem:[%s268 + $0x15c] sm:$0xf]
      %v430 = vld [vmem:[%s268 + $0x160] sm:$0xf]
      %v431 = vld [vmem:[%s268 + $0x164] sm:$0xf]
      %v432 = vld [vmem:[%s268 + $0x168] sm:$0xf]
      %v433 = vld [vmem:[%s268 + $0x16c] sm:$0xf]
      %v434 = vld [vmem:[%s268 + $0x170] sm:$0xf]
      %v435 = vld [vmem:[%s268 + $0x174] sm:$0xf]
      %v436 = vld [vmem:[%s268 + $0x178] sm:$0xf]
      %v437 = vld [vmem:[%s268 + $0x17c] sm:$0xf]
      %v438 = vld [vmem:[%s268 + $0x180] sm:$0xf]
      %v439 = vld [vmem:[%s268 + $0x184] sm:$0xf]
      %v440 = vld [vmem:[%s268 + $0x188] sm:$0xf]
      %v441 = vld [vmem:[%s268 + $0x18c] sm:$0xf]
      %v442 = vld [vmem:[%s268 + $0x190] sm:$0xf]
      %v443 = vld [vmem:[%s268 + $0x194] sm:$0xf]
      %v444 = vld [vmem:[%s268 + $0x198] sm:$0xf]
      %v445 = vld [vmem:[%s268 + $0x19c] sm:$0xf]
      %v446 = vld [vmem:[%s268 + $0x1a0] sm:$0xf]
      %v447 = vld [vmem:[%s268 + $0x1a4] sm:$0xf]
      %v448 = vld [vmem:[%s268 + $0x1a8] sm:$0xf]
      %v449 = vld [vmem:[%s268 + $0x1ac] sm:$0xf]
      %v450 = vld [vmem:[%s268 + $0x1b0] sm:$0xf]
      %v451 = vld [vmem:[%s268 + $0x1b4] sm:$0xf]
      %v452 = vld [vmem:[%s268 + $0x1b8] sm:$0xf]
      %v453 = vld [vmem:[%s268 + $0x1bc] sm:$0xf]
      %v454 = vld [vmem:[%s268 + $0x1c0] sm:$0xf]
      %v455 = vld [vmem:[%s268 + $0x1c4] sm:$0xf]
      %v456 = vld [vmem:[%s268 + $0x1c8] sm:$0xf]
      %v457 = vld [vmem:[%s268 + $0x1cc] sm:$0xf]
      %v458 = vld [vmem:[%s268 + $0x1d0] sm:$0xf]
      %v459 = vld [vmem:[%s268 + $0x1d4] sm:$0xf]
      %v460 = vld [vmem:[%s268 + $0x1d8] sm:$0xf]
      %v461 = vld [vmem:[%s268 + $0x1dc] sm:$0xf]
      %v462 = vld [vmem:[%s268 + $0x1e0] sm:$0xf]
      %v463 = vld [vmem:[%s268 + $0x1e4] sm:$0xf]
      %v464 = vld [vmem:[%s268 + $0x1e8] sm:$0xf]
      %v465 = vld [vmem:[%s268 + $0x1ec] sm:$0xf]
      %v466 = vld [vmem:[%s268 + $0x1f0] sm:$0xf]
      %v467 = vld [vmem:[%s268 + $0x1f4] sm:$0xf]
      %v468 = vld [vmem:[%s268 + $0x1f8] sm:$0xf]
      %v469 = vld [vmem:[%s268 + $0x1fc] sm:$0xf]
      %v470 = vld [vmem:[%s268 + $0x200] sm:$0xf]
      %v471 = vld [vmem:[%s268 + $0x204] sm:$0xf]
      %v472 = vld [vmem:[%s268 + $0x208] sm:$0xf]
      %v473 = vld [vmem:[%s268 + $0x20c] sm:$0xf]
      %v474 = vld [vmem:[%s268 + $0x210] sm:$0xf]
      %v475 = vld [vmem:[%s268 + $0x214] sm:$0xf]
      %v476 = vld [vmem:[%s268 + $0x218] sm:$0xf]
      %v477 = vld [vmem:[%s268 + $0x21c] sm:$0xf]
      %v478 = vld [vmem:[%s268 + $0x220] sm:$0xf]
      %v479 = vld [vmem:[%s268 + $0x224] sm:$0xf]
      %v480 = vld [vmem:[%s268 + $0x228] sm:$0xf]
      %v481 = vld [vmem:[%s268 + $0x22c] sm:$0xf]
      %v482 = vld [vmem:[%s268 + $0x230] sm:$0xf]
      %v483 = vld [vmem:[%s268 + $0x234] sm:$0xf]
      %v484 = vld [vmem:[%s268 + $0x238] sm:$0xf]
      %v485 = vld [vmem:[%s268 + $0x23c] sm:$0xf]
      %v486 = vld [vmem:[%s268 + $0x240] sm:$0xf]
      %v487 = vld [vmem:[%s268 + $0x244] sm:$0xf]
      %v488 = vld [vmem:[%s268 + $0x248] sm:$0xf]
      %v489 = vld [vmem:[%s268 + $0x24c] sm:$0xf]
      %v490 = vld [vmem:[%s268 + $0x250] sm:$0xf]
      %v491 = vld [vmem:[%s268 + $0x254] sm:$0xf]
      %v492 = vld [vmem:[%s268 + $0x258] sm:$0xf]
      %v493 = vld [vmem:[%s268 + $0x25c] sm:$0xf]
      %v494 = vld [vmem:[%s268 + $0x260] sm:$0xf]
      %v495 = vld [vmem:[%s268 + $0x264] sm:$0xf]
      %v496 = vld [vmem:[%s268 + $0x268] sm:$0xf]
      %v497 = vld [vmem:[%s268 + $0x26c] sm:$0xf]
      %v498 = vld [vmem:[%s268 + $0x270] sm:$0xf]
      %v499 = vld [vmem:[%s268 + $0x274] sm:$0xf]
      %v500 = vld [vmem:[%s268 + $0x278] sm:$0xf]
      %v501 = vld [vmem:[%s268 + $0x27c] sm:$0xf]
      %v502 = vld [vmem:[%s268 + $0x280] sm:$0xf]
      %v503 = vld [vmem:[%s268 + $0x284] sm:$0xf]
      %v504 = vld [vmem:[%s268 + $0x288] sm:$0xf]
      %v505 = vld [vmem:[%s268 + $0x28c] sm:$0xf]
      %v506 = vld [vmem:[%s268 + $0x290] sm:$0xf]
      %v507 = vld [vmem:[%s268 + $0x294] sm:$0xf]
      %v508 = vld [vmem:[%s268 + $0x298] sm:$0xf]
      %v509 = vld [vmem:[%s268 + $0x29c] sm:$0xf]
      %v510 = vld [vmem:[%s268 + $0x2a0] sm:$0xf]
      %v511 = vld [vmem:[%s268 + $0x2a4] sm:$0xf]
      %v512 = vld [vmem:[%s268 + $0x2a8] sm:$0xf]
      %v513 = vld [vmem:[%s268 + $0x2ac] sm:$0xf]
      %v514 = vld [vmem:[%s268 + $0x2b0] sm:$0xf]
      %v515 = vld [vmem:[%s268 + $0x2b4] sm:$0xf]
      %v516 = vld [vmem:[%s268 + $0x2b8] sm:$0xf]
      %v517 = vld [vmem:[%s268 + $0x2bc] sm:$0xf]
      %v518 = vld [vmem:[%s268 + $0x2c0] sm:$0xf]
      %v519 = vld [vmem:[%s268 + $0x2c4] sm:$0xf]
      %v520 = vld [vmem:[%s268 + $0x2c8] sm:$0xf]
      %v521 = vld [vmem:[%s268 + $0x2cc] sm:$0xf]
      %v522 = vld [vmem:[%s268 + $0x2d0] sm:$0xf]
      %v523 = vld [vmem:[%s268 + $0x2d4] sm:$0xf]
      %v524 = vld [vmem:[%s268 + $0x2d8] sm:$0xf]
      %v525 = vld [vmem:[%s268 + $0x2dc] sm:$0xf]
      %v526 = vld [vmem:[%s268 + $0x2e0] sm:$0xf]
      %v527 = vld [vmem:[%s268 + $0x2e4] sm:$0xf]
      %v528 = vld [vmem:[%s268 + $0x2e8] sm:$0xf]
      %v529 = vld [vmem:[%s268 + $0x2ec] sm:$0xf]
      %v530 = vld [vmem:[%s268 + $0x2f0] sm:$0xf]
      %v531 = vld [vmem:[%s268 + $0x2f4] sm:$0xf]
      %v532 = vld [vmem:[%s268 + $0x2f8] sm:$0xf]
      %v533 = vld [vmem:[%s268 + $0x2fc] sm:$0xf]
      %v534 = vld [vmem:[%s268 + $0x300] sm:$0xf]
      %v535 = vld [vmem:[%s268 + $0x304] sm:$0xf]
      %v536 = vld [vmem:[%s268 + $0x308] sm:$0xf]
      %v537 = vld [vmem:[%s268 + $0x30c] sm:$0xf]
      %v538 = vld [vmem:[%s268 + $0x310] sm:$0xf]
      %v539 = vld [vmem:[%s268 + $0x314] sm:$0xf]
      %v540 = vld [vmem:[%s268 + $0x318] sm:$0xf]
      %v541 = vld [vmem:[%s268 + $0x31c] sm:$0xf]
      %v542 = vld [vmem:[%s268 + $0x320] sm:$0xf]
      %v543 = vld [vmem:[%s268 + $0x324] sm:$0xf]
      %v544 = vld [vmem:[%s268 + $0x328] sm:$0xf]
      %v545 = vld [vmem:[%s268 + $0x32c] sm:$0xf]
      %v546 = vld [vmem:[%s268 + $0x330] sm:$0xf]
      %v547 = vld [vmem:[%s268 + $0x334] sm:$0xf]
      %v548 = vld [vmem:[%s268 + $0x338] sm:$0xf]
      %v549 = vld [vmem:[%s268 + $0x33c] sm:$0xf]
      %v550 = vld [vmem:[%s268 + $0x340] sm:$0xf]
      %v551 = vld [vmem:[%s268 + $0x344] sm:$0xf]
      %v552 = vld [vmem:[%s268 + $0x348] sm:$0xf]
      %v553 = vld [vmem:[%s268 + $0x34c] sm:$0xf]
      %v554 = vld [vmem:[%s268 + $0x350] sm:$0xf]
      %v555 = vld [vmem:[%s268 + $0x354] sm:$0xf]
      %v556 = vld [vmem:[%s268 + $0x358] sm:$0xf]
      %v557 = vld [vmem:[%s268 + $0x35c] sm:$0xf]
      %v558 = vld [vmem:[%s268 + $0x360] sm:$0xf]
      %v559 = vld [vmem:[%s268 + $0x364] sm:$0xf]
      %v560 = vld [vmem:[%s268 + $0x368] sm:$0xf]
      %v561 = vld [vmem:[%s268 + $0x36c] sm:$0xf]
      %v562 = vld [vmem:[%s268 + $0x370] sm:$0xf]
      %v563 = vld [vmem:[%s268 + $0x374] sm:$0xf]
      %v564 = vld [vmem:[%s268 + $0x378] sm:$0xf]
      %v565 = vld [vmem:[%s268 + $0x37c] sm:$0xf]
      %v566 = vld [vmem:[%s268 + $0x380] sm:$0xf]
      %v567 = vld [vmem:[%s268 + $0x384] sm:$0xf]
      %v568 = vld [vmem:[%s268 + $0x388] sm:$0xf]
      %v569 = vld [vmem:[%s268 + $0x38c] sm:$0xf]
      %v570 = vld [vmem:[%s268 + $0x390] sm:$0xf]
      %v571 = vld [vmem:[%s268 + $0x394] sm:$0xf]
      %v572 = vld [vmem:[%s268 + $0x398] sm:$0xf]
      %v573 = vld [vmem:[%s268 + $0x39c] sm:$0xf]
      %v574 = vld [vmem:[%s268 + $0x3a0] sm:$0xf]
      %v575 = vld [vmem:[%s268 + $0x3a4] sm:$0xf]
      %v576 = vld [vmem:[%s268 + $0x3a8] sm:$0xf]
      %v577 = vld [vmem:[%s268 + $0x3ac] sm:$0xf]
      %v578 = vld [vmem:[%s268 + $0x3b0] sm:$0xf]
      %v579 = vld [vmem:[%s268 + $0x3b4] sm:$0xf]
      %v580 = vld [vmem:[%s268 + $0x3b8] sm:$0xf]
      %v581 = vld [vmem:[%s268 + $0x3bc] sm:$0xf]
      %v582 = vld [vmem:[%s268 + $0x3c0] sm:$0xf]
      %v583 = vld [vmem:[%s268 + $0x3c4] sm:$0xf]
      %v584 = vld [vmem:[%s268 + $0x3c8] sm:$0xf]
      %v585 = vld [vmem:[%s268 + $0x3cc] sm:$0xf]
      %v586 = vld [vmem:[%s268 + $0x3d0] sm:$0xf]
      %v587 = vld [vmem:[%s268 + $0x3d4] sm:$0xf]
      %v588 = vld [vmem:[%s268 + $0x3d8] sm:$0xf]
      %v589 = vld [vmem:[%s268 + $0x3dc] sm:$0xf]
      %v590 = vld [vmem:[%s268 + $0x3e0] sm:$0xf]
      %v591 = vld [vmem:[%s268 + $0x3e4] sm:$0xf]
      %v592 = vld [vmem:[%s268 + $0x3e8] sm:$0xf]
      %v593 = vld [vmem:[%s268 + $0x3ec] sm:$0xf]
      %v594 = vld [vmem:[%s268 + $0x3f0] sm:$0xf]
      %v595 = vld [vmem:[%s268 + $0x3f4] sm:$0xf]
      %v596 = vld [vmem:[%s268 + $0x3f8] sm:$0xf]
      %v597 = vld [vmem:[%s268 + $0x3fc] sm:$0xf]
      %v598 = vld [vmem:[%s268 + $0x400] sm:$0xf]
      %v599 = vld [vmem:[%s268 + $0x404] sm:$0xf]
      %v600 = vld [vmem:[%s268 + $0x408] sm:$0xf]
      %v601 = vld [vmem:[%s268 + $0x40c] sm:$0xf]
      %v602 = vld [vmem:[%s268 + $0x410] sm:$0xf]
      %v603 = vld [vmem:[%s268 + $0x414] sm:$0xf]
      %v604 = vld [vmem:[%s268 + $0x418] sm:$0xf]
      %v605 = vld [vmem:[%s268 + $0x41c] sm:$0xf]
      %v606 = vld [vmem:[%s268 + $0x420] sm:$0xf]
      %v607 = vld [vmem:[%s268 + $0x424] sm:$0xf]
      %v608 = vld [vmem:[%s268 + $0x428] sm:$0xf]
      %v609 = vld [vmem:[%s268 + $0x42c] sm:$0xf]
      %v610 = vld [vmem:[%s268 + $0x430] sm:$0xf]
      %v611 = vld [vmem:[%s268 + $0x434] sm:$0xf]
      %v612 = vld [vmem:[%s268 + $0x438] sm:$0xf]
      %v613 = vld [vmem:[%s268 + $0x43c] sm:$0xf]
      %v614 = vld [vmem:[%s268 + $0x440] sm:$0xf]
      %v615 = vld [vmem:[%s268 + $0x444] sm:$0xf]
      %v616 = vld [vmem:[%s268 + $0x448] sm:$0xf]
      %v617 = vld [vmem:[%s268 + $0x44c] sm:$0xf]
      %v618 = vld [vmem:[%s268 + $0x450] sm:$0xf]
      %v619 = vld [vmem:[%s268 + $0x454] sm:$0xf]
      %v620 = vld [vmem:[%s268 + $0x458] sm:$0xf]
      %v621 = vld [vmem:[%s268 + $0x45c] sm:$0xf]
      %v622 = vld [vmem:[%s268 + $0x460] sm:$0xf]
      %v623 = vld [vmem:[%s268 + $0x464] sm:$0xf]
      %v624 = vld [vmem:[%s268 + $0x468] sm:$0xf]
      %v625 = vld [vmem:[%s268 + $0x46c] sm:$0xf]
      %v626 = vld [vmem:[%s268 + $0x470] sm:$0xf]
      %v627 = vld [vmem:[%s268 + $0x474] sm:$0xf]
      %v628 = vld [vmem:[%s268 + $0x478] sm:$0xf]
      %v629 = vld [vmem:[%s268 + $0x47c] sm:$0xf]
      %v630 = vld [vmem:[%s268 + $0x480] sm:$0xf]
      %v631 = vld [vmem:[%s268 + $0x484] sm:$0xf]
      %v632 = vld [vmem:[%s268 + $0x488] sm:$0xf]
      %v633 = vld [vmem:[%s268 + $0x48c] sm:$0xf]
      %v634 = vld [vmem:[%s268 + $0x490] sm:$0xf]
      %v635 = vld [vmem:[%s268 + $0x494] sm:$0xf]
      %v636 = vld [vmem:[%s268 + $0x498] sm:$0xf]
      %v637 = vld [vmem:[%s268 + $0x49c] sm:$0xf]
      %v638 = vld [vmem:[%s268 + $0x4a0] sm:$0xf]
      %v639 = vld [vmem:[%s268 + $0x4a4] sm:$0xf]
      %v640 = vld [vmem:[%s268 + $0x4a8] sm:$0xf]
      %v641 = vld [vmem:[%s268 + $0x4ac] sm:$0xf]
      %v642 = vld [vmem:[%s268 + $0x4b0] sm:$0xf]
      %v643 = vld [vmem:[%s268 + $0x4b4] sm:$0xf]
      %v644 = vld [vmem:[%s268 + $0x4b8] sm:$0xf]
      %v645 = vld [vmem:[%s268 + $0x4bc] sm:$0xf]
      %v646 = vld [vmem:[%s268 + $0x4c0] sm:$0xf]
      %v647 = vld [vmem:[%s268 + $0x4c4] sm:$0xf]
      %v648 = vld [vmem:[%s268 + $0x4c8] sm:$0xf]
      %v649 = vld [vmem:[%s268 + $0x4cc] sm:$0xf]
      %v650 = vld [vmem:[%s268 + $0x4d0] sm:$0xf]
      %v651 = vld [vmem:[%s268 + $0x4d4] sm:$0xf]
      %v652 = vld [vmem:[%s268 + $0x4d8] sm:$0xf]
      %v653 = vld [vmem:[%s268 + $0x4dc] sm:$0xf]
      %v654 = vld [vmem:[%s268 + $0x4e0] sm:$0xf]
      %v655 = vld [vmem:[%s268 + $0x4e4] sm:$0xf]
      %v656 = vld [vmem:[%s268 + $0x4e8] sm:$0xf]
      %v657 = vld [vmem:[%s268 + $0x4ec] sm:$0xf]
      %v658 = vld [vmem:[%s268 + $0x4f0] sm:$0xf]
      %v659 = vld [vmem:[%s268 + $0x4f4] sm:$0xf]
      %v660 = vld [vmem:[%s268 + $0x4f8] sm:$0xf]
      %v661 = vld [vmem:[%s268 + $0x4fc] sm:$0xf]
      %v662 = vld [vmem:[%s268 + $0x500] sm:$0xf]
      %v663 = vld [vmem:[%s268 + $0x504] sm:$0xf]
      %v664 = vld [vmem:[%s268 + $0x508] sm:$0xf]
      %v665 = vld [vmem:[%s268 + $0x50c] sm:$0xf]
      %v666 = vld [vmem:[%s268 + $0x510] sm:$0xf]
      %v667 = vld [vmem:[%s268 + $0x514] sm:$0xf]
      %v668 = vld [vmem:[%s268 + $0x518] sm:$0xf]
      %v669 = vld [vmem:[%s268 + $0x51c] sm:$0xf]
      %v670 = vld [vmem:[%s268 + $0x520] sm:$0xf]
      %v671 = vld [vmem:[%s268 + $0x524] sm:$0xf]
      %v672 = vld [vmem:[%s268 + $0x528] sm:$0xf]
      %v673 = vld [vmem:[%s268 + $0x52c] sm:$0xf]
      %v674 = vld [vmem:[%s268 + $0x530] sm:$0xf]
      %v675 = vld [vmem:[%s268 + $0x534] sm:$0xf]
      %v676 = vld [vmem:[%s268 + $0x538] sm:$0xf]
      %v677 = vld [vmem:[%s268 + $0x53c] sm:$0xf]
      %v678 = vld [vmem:[%s268 + $0x540] sm:$0xf]
      %v679 = vld [vmem:[%s268 + $0x544] sm:$0xf]
      %v680 = vld [vmem:[%s268 + $0x548] sm:$0xf]
      %v681 = vld [vmem:[%s268 + $0x54c] sm:$0xf]
      %v682 = vld [vmem:[%s268 + $0x550] sm:$0xf]
      %v683 = vld [vmem:[%s268 + $0x554] sm:$0xf]
      %v684 = vld [vmem:[%s268 + $0x558] sm:$0xf]
      %v685 = vld [vmem:[%s268 + $0x55c] sm:$0xf]
      %v686 = vld [vmem:[%s268 + $0x560] sm:$0xf]
      %v687 = vld [vmem:[%s268 + $0x564] sm:$0xf]
      %v688 = vld [vmem:[%s268 + $0x568] sm:$0xf]
      %v689 = vld [vmem:[%s268 + $0x56c] sm:$0xf]
      %v690 = vld [vmem:[%s268 + $0x570] sm:$0xf]
      %v691 = vld [vmem:[%s268 + $0x574] sm:$0xf]
      %v692 = vld [vmem:[%s268 + $0x578] sm:$0xf]
      %v693 = vld [vmem:[%s268 + $0x57c] sm:$0xf]
      %v694 = vld [vmem:[%s268 + $0x580] sm:$0xf]
      %v695 = vld [vmem:[%s268 + $0x584] sm:$0xf]
      %v696 = vld [vmem:[%s268 + $0x588] sm:$0xf]
      %v697 = vld [vmem:[%s268 + $0x58c] sm:$0xf]
      %v698 = vld [vmem:[%s268 + $0x590] sm:$0xf]
      %v699 = vld [vmem:[%s268 + $0x594] sm:$0xf]
      %v700 = vld [vmem:[%s268 + $0x598] sm:$0xf]
      %v701 = vld [vmem:[%s268 + $0x59c] sm:$0xf]
      %v702 = vld [vmem:[%s268 + $0x5a0] sm:$0xf]
      %v703 = vld [vmem:[%s268 + $0x5a4] sm:$0xf]
      %v704 = vld [vmem:[%s268 + $0x5a8] sm:$0xf]
      %v705 = vld [vmem:[%s268 + $0x5ac] sm:$0xf]
      %v706 = vld [vmem:[%s268 + $0x5b0] sm:$0xf]
      %v707 = vld [vmem:[%s268 + $0x5b4] sm:$0xf]
      %v708 = vld [vmem:[%s268 + $0x5b8] sm:$0xf]
      %v709 = vld [vmem:[%s268 + $0x5bc] sm:$0xf]
      %v710 = vld [vmem:[%s268 + $0x5c0] sm:$0xf]
      %v711 = vld [vmem:[%s268 + $0x5c4] sm:$0xf]
      %v712 = vld [vmem:[%s268 + $0x5c8] sm:$0xf]
      %v713 = vld [vmem:[%s268 + $0x5cc] sm:$0xf]
      %v714 = vld [vmem:[%s268 + $0x5d0] sm:$0xf]
      %v715 = vld [vmem:[%s268 + $0x5d4] sm:$0xf]
      %v716 = vld [vmem:[%s268 + $0x5d8] sm:$0xf]
      %v717 = vld [vmem:[%s268 + $0x5dc] sm:$0xf]
      %v718 = vld [vmem:[%s268 + $0x5e0] sm:$0xf]
      %v719 = vld [vmem:[%s268 + $0x5e4] sm:$0xf]
      %v720 = vld [vmem:[%s268 + $0x5e8] sm:$0xf]
      %v721 = vld [vmem:[%s268 + $0x5ec] sm:$0xf]
      %v722 = vld [vmem:[%s268 + $0x5f0] sm:$0xf]
      %v723 = vld [vmem:[%s268 + $0x5f4] sm:$0xf]
      %v724 = vld [vmem:[%s268 + $0x5f8] sm:$0xf]
      %v725 = vld [vmem:[%s268 + $0x5fc] sm:$0xf]
      %v726 = vld [vmem:[%s268 + $0x600] sm:$0xf]
      %v727 = vld [vmem:[%s268 + $0x604] sm:$0xf]
      %v728 = vld [vmem:[%s268 + $0x608] sm:$0xf]
      %v729 = vld [vmem:[%s268 + $0x60c] sm:$0xf]
      %v730 = vld [vmem:[%s268 + $0x610] sm:$0xf]
      %v731 = vld [vmem:[%s268 + $0x614] sm:$0xf]
      %v732 = vld [vmem:[%s268 + $0x618] sm:$0xf]
      %v733 = vld [vmem:[%s268 + $0x61c] sm:$0xf]
      %v734 = vld [vmem:[%s268 + $0x620] sm:$0xf]
      %v735 = vld [vmem:[%s268 + $0x624] sm:$0xf]
      %v736 = vld [vmem:[%s268 + $0x628] sm:$0xf]
      %v737 = vld [vmem:[%s268 + $0x62c] sm:$0xf]
      %v738 = vld [vmem:[%s268 + $0x630] sm:$0xf]
      %v739 = vld [vmem:[%s268 + $0x634] sm:$0xf]
      %v740 = vld [vmem:[%s268 + $0x638] sm:$0xf]
      %v741 = vld [vmem:[%s268 + $0x63c] sm:$0xf]
      %v742 = vld [vmem:[%s268 + $0x640] sm:$0xf]
      %v743 = vld [vmem:[%s268 + $0x644] sm:$0xf]
      %v744 = vld [vmem:[%s268 + $0x648] sm:$0xf]
      %v745 = vld [vmem:[%s268 + $0x64c] sm:$0xf]
      %v746 = vld [vmem:[%s268 + $0x650] sm:$0xf]
      %v747 = vld [vmem:[%s268 + $0x654] sm:$0xf]
      %v748 = vld [vmem:[%s268 + $0x658] sm:$0xf]
      %v749 = vld [vmem:[%s268 + $0x65c] sm:$0xf]
      %v750 = vld [vmem:[%s268 + $0x660] sm:$0xf]
      %v751 = vld [vmem:[%s268 + $0x664] sm:$0xf]
      %v752 = vld [vmem:[%s268 + $0x668] sm:$0xf]
      %v753 = vld [vmem:[%s268 + $0x66c] sm:$0xf]
      %v754 = vld [vmem:[%s268 + $0x670] sm:$0xf]
      %v755 = vld [vmem:[%s268 + $0x674] sm:$0xf]
      %v756 = vld [vmem:[%s268 + $0x678] sm:$0xf]
      %v757 = vld [vmem:[%s268 + $0x67c] sm:$0xf]
      %v758 = vld [vmem:[%s268 + $0x680] sm:$0xf]
      %v759 = vld [vmem:[%s268 + $0x684] sm:$0xf]
      %v760 = vld [vmem:[%s268 + $0x688] sm:$0xf]
      %v761 = vld [vmem:[%s268 + $0x68c] sm:$0xf]
      %v762 = vld [vmem:[%s268 + $0x690] sm:$0xf]
      %v763 = vld [vmem:[%s268 + $0x694] sm:$0xf]
      %v764 = vld [vmem:[%s268 + $0x698] sm:$0xf]
      %v765 = vld [vmem:[%s268 + $0x69c] sm:$0xf]
      %v766 = vld [vmem:[%s268 + $0x6a0] sm:$0xf]
      %v767 = vld [vmem:[%s268 + $0x6a4] sm:$0xf]
      %v768 = vld [vmem:[%s268 + $0x6a8] sm:$0xf]
      %v769 = vld [vmem:[%s268 + $0x6ac] sm:$0xf]
      %v770 = vld [vmem:[%s268 + $0x6b0] sm:$0xf]
      %v771 = vld [vmem:[%s268 + $0x6b4] sm:$0xf]
      %v772 = vld [vmem:[%s268 + $0x6b8] sm:$0xf]
      %v773 = vld [vmem:[%s268 + $0x6bc] sm:$0xf]
      %v774 = vld [vmem:[%s268 + $0x6c0] sm:$0xf]
      %v775 = vld [vmem:[%s268 + $0x6c4] sm:$0xf]
      %v776 = vld [vmem:[%s268 + $0x6c8] sm:$0xf]
      %v777 = vld [vmem:[%s268 + $0x6cc] sm:$0xf]
      %v778 = vld [vmem:[%s268 + $0x6d0] sm:$0xf]
      %v779 = vld [vmem:[%s268 + $0x6d4] sm:$0xf]
      %v780 = vld [vmem:[%s268 + $0x6d8] sm:$0xf]
      %v781 = vld [vmem:[%s268 + $0x6dc] sm:$0xf]
      %v782 = vld [vmem:[%s268 + $0x6e0] sm:$0xf]
      %v783 = vld [vmem:[%s268 + $0x6e4] sm:$0xf]
      %v784 = vld [vmem:[%s268 + $0x6e8] sm:$0xf]
      %v785 = vld [vmem:[%s268 + $0x6ec] sm:$0xf]
      %v786 = vld [vmem:[%s268 + $0x6f0] sm:$0xf]
      %v787 = vld [vmem:[%s268 + $0x6f4] sm:$0xf]
      %v788 = vld [vmem:[%s268 + $0x6f8] sm:$0xf]
      %v789 = vld [vmem:[%s268 + $0x6fc] sm:$0xf]
      %v790 = vld [vmem:[%s268 + $0x700] sm:$0xf]
      %v791 = vld [vmem:[%s268 + $0x704] sm:$0xf]
      %v792 = vld [vmem:[%s268 + $0x708] sm:$0xf]
      %v793 = vld [vmem:[%s268 + $0x70c] sm:$0xf]
      %v794 = vld [vmem:[%s268 + $0x710] sm:$0xf]
      %v795 = vld [vmem:[%s268 + $0x714] sm:$0xf]
      %v796 = vld [vmem:[%s268 + $0x718] sm:$0xf]
      %v797 = vld [vmem:[%s268 + $0x71c] sm:$0xf]
      %v798 = vld [vmem:[%s268 + $0x720] sm:$0xf]
      %v799 = vld [vmem:[%s268 + $0x724] sm:$0xf]
      %v800 = vld [vmem:[%s268 + $0x728] sm:$0xf]
      %v801 = vld [vmem:[%s268 + $0x72c] sm:$0xf]
      %v802 = vld [vmem:[%s268 + $0x730] sm:$0xf]
      %v803 = vld [vmem:[%s268 + $0x734] sm:$0xf]
      %v804 = vld [vmem:[%s268 + $0x738] sm:$0xf]
      %v805 = vld [vmem:[%s268 + $0x73c] sm:$0xf]
      %v806 = vld [vmem:[%s268 + $0x740] sm:$0xf]
      %v807 = vld [vmem:[%s268 + $0x744] sm:$0xf]
      %v808 = vld [vmem:[%s268 + $0x748] sm:$0xf]
      %v809 = vld [vmem:[%s268 + $0x74c] sm:$0xf]
      %v810 = vld [vmem:[%s268 + $0x750] sm:$0xf]
      %v811 = vld [vmem:[%s268 + $0x754] sm:$0xf]
      %v812 = vld [vmem:[%s268 + $0x758] sm:$0xf]
      %v813 = vld [vmem:[%s268 + $0x75c] sm:$0xf]
      %v814 = vld [vmem:[%s268 + $0x760] sm:$0xf]
      %v815 = vld [vmem:[%s268 + $0x764] sm:$0xf]
      %v816 = vld [vmem:[%s268 + $0x768] sm:$0xf]
      %v817 = vld [vmem:[%s268 + $0x76c] sm:$0xf]
      %v818 = vld [vmem:[%s268 + $0x770] sm:$0xf]
      %v819 = vld [vmem:[%s268 + $0x774] sm:$0xf]
      %v820 = vld [vmem:[%s268 + $0x778] sm:$0xf]
      %v821 = vld [vmem:[%s268 + $0x77c] sm:$0xf]
      %v822 = vld [vmem:[%s268 + $0x780] sm:$0xf]
      %v823 = vld [vmem:[%s268 + $0x784] sm:$0xf]
      %v824 = vld [vmem:[%s268 + $0x788] sm:$0xf]
      %v825 = vld [vmem:[%s268 + $0x78c] sm:$0xf]
      %v890 = vunpack.c.l.b16 %v278
      %v891 = vunpack.c.h.b16 %v278
      %v892 = vunpack.c.l.b16 %v279
      %v893 = vunpack.c.h.b16 %v279
      %v894 = vunpack.c.l.b16 %v280
      %v895 = vunpack.c.h.b16 %v280
      %v896 = vunpack.c.l.b16 %v281
      %v897 = vunpack.c.h.b16 %v281
      %v898 = vunpack.c.l.b16 %v282
      %v899 = vunpack.c.h.b16 %v282
      %v900 = vunpack.c.l.b16 %v283
      %v901 = vunpack.c.h.b16 %v283
      %v902 = vunpack.c.l.b16 %v284
      %v903 = vunpack.c.h.b16 %v284
      %v904 = vunpack.c.l.b16 %v285
      %v905 = vunpack.c.h.b16 %v285
      %v906 = vunpack.c.l.b16 %v286
      %v907 = vunpack.c.h.b16 %v286
      %v908 = vunpack.c.l.b16 %v287
      %v909 = vunpack.c.h.b16 %v287
      %v910 = vunpack.c.l.b16 %v288
      %v911 = vunpack.c.h.b16 %v288
      %v912 = vunpack.c.l.b16 %v289
      %v913 = vunpack.c.h.b16 %v289
      %v914 = vunpack.c.l.b16 %v290
      %v915 = vunpack.c.h.b16 %v290
      %v916 = vunpack.c.l.b16 %v291
      %v917 = vunpack.c.h.b16 %v291
      %v918 = vunpack.c.l.b16 %v292
      %v919 = vunpack.c.h.b16 %v292
      %v920 = vunpack.c.l.b16 %v293
      %v921 = vunpack.c.l.b16 %v294
      %v922 = vunpack.c.h.b16 %v294
      %v923 = vunpack.c.l.b16 %v295
      %v924 = vunpack.c.h.b16 %v295
      %v925 = vunpack.c.l.b16 %v296
      %v926 = vunpack.c.h.b16 %v296
      %v927 = vunpack.c.l.b16 %v297
      %v928 = vunpack.c.h.b16 %v297
      %v929 = vunpack.c.l.b16 %v298
      %v930 = vunpack.c.h.b16 %v298
      %v931 = vunpack.c.l.b16 %v299
      %v932 = vunpack.c.h.b16 %v299
      %v933 = vunpack.c.l.b16 %v300
      %v934 = vunpack.c.h.b16 %v300
      %v935 = vunpack.c.l.b16 %v301
      %v936 = vunpack.c.h.b16 %v301
      %v937 = vunpack.c.l.b16 %v302
      %v938 = vunpack.c.h.b16 %v302
      %v939 = vunpack.c.l.b16 %v303
      %v940 = vunpack.c.h.b16 %v303
      %v941 = vunpack.c.l.b16 %v304
      %v942 = vunpack.c.h.b16 %v304
      %v943 = vunpack.c.l.b16 %v305
      %v944 = vunpack.c.h.b16 %v305
      %v945 = vunpack.c.l.b16 %v306
      %v946 = vunpack.c.h.b16 %v306
      %v947 = vunpack.c.l.b16 %v307
      %v948 = vunpack.c.h.b16 %v307
      %v949 = vunpack.c.l.b16 %v308
      %v950 = vunpack.c.h.b16 %v308
      %v951 = vunpack.c.l.b16 %v309
      %v952 = vunpack.c.l.b16 %v310
      %v953 = vunpack.c.h.b16 %v310
      %v954 = vunpack.c.l.b16 %v311
      %v955 = vunpack.c.h.b16 %v311
      %v956 = vunpack.c.l.b16 %v312
      %v957 = vunpack.c.h.b16 %v312
      %v958 = vunpack.c.l.b16 %v313
      %v959 = vunpack.c.h.b16 %v313
      %v960 = vunpack.c.l.b16 %v314
      %v961 = vunpack.c.h.b16 %v314
      %v962 = vunpack.c.l.b16 %v315
      %v963 = vunpack.c.h.b16 %v315
      %v964 = vunpack.c.l.b16 %v316
      %v965 = vunpack.c.h.b16 %v316
      %v966 = vunpack.c.l.b16 %v317
      %v967 = vunpack.c.h.b16 %v317
      %v968 = vunpack.c.l.b16 %v318
      %v969 = vunpack.c.h.b16 %v318
      %v970 = vunpack.c.l.b16 %v319
      %v971 = vunpack.c.h.b16 %v319
      %v972 = vunpack.c.l.b16 %v320
      %v973 = vunpack.c.h.b16 %v320
      %v974 = vunpack.c.l.b16 %v321
      %v975 = vunpack.c.h.b16 %v321
      %v976 = vunpack.c.l.b16 %v322
      %v977 = vunpack.c.h.b16 %v322
      %v978 = vunpack.c.l.b16 %v323
      %v979 = vunpack.c.h.b16 %v323
      %v980 = vunpack.c.l.b16 %v324
      %v981 = vunpack.c.h.b16 %v324
      %v982 = vunpack.c.l.b16 %v325
      %v983 = vunpack.c.l.b16 %v326
      %v984 = vunpack.c.h.b16 %v326
      %v985 = vunpack.c.l.b16 %v327
      %v986 = vunpack.c.h.b16 %v327
      %v987 = vunpack.c.l.b16 %v328
      %v988 = vunpack.c.h.b16 %v328
      %v989 = vunpack.c.l.b16 %v329
      %v990 = vunpack.c.h.b16 %v329
      %v991 = vunpack.c.l.b16 %v330
      %v992 = vunpack.c.h.b16 %v330
      %v993 = vunpack.c.l.b16 %v331
      %v994 = vunpack.c.h.b16 %v331
      %v995 = vunpack.c.l.b16 %v332
      %v996 = vunpack.c.h.b16 %v332
      %v997 = vunpack.c.l.b16 %v333
      %v998 = vunpack.c.h.b16 %v333
      %v999 = vunpack.c.l.b16 %v334
      %v1000 = vunpack.c.h.b16 %v334
      %v1001 = vunpack.c.l.b16 %v335
      %v1002 = vunpack.c.h.b16 %v335
      %v1003 = vunpack.c.l.b16 %v336
      %v1004 = vunpack.c.h.b16 %v336
      %v1005 = vunpack.c.l.b16 %v337
      %v1006 = vunpack.c.h.b16 %v337
      %v1007 = vunpack.c.l.b16 %v338
      %v1008 = vunpack.c.h.b16 %v338
      %v1009 = vunpack.c.l.b16 %v339
      %v1010 = vunpack.c.h.b16 %v339
      %v1011 = vunpack.c.l.b16 %v340
      %v1012 = vunpack.c.h.b16 %v340
      %v1013 = vunpack.c.l.b16 %v341
      %v1014 = vpack.c.b16 %v921, %v890
      %v1015 = vpack.c.b16 %v922, %v891
      %v1016 = vpack.c.b16 %v923, %v892
      %v1017 = vpack.c.b16 %v924, %v893
      %v1018 = vpack.c.b16 %v925, %v894
      %v1019 = vpack.c.b16 %v926, %v895
      %v1020 = vpack.c.b16 %v927, %v896
      %v1021 = vpack.c.b16 %v928, %v897
      %v1022 = vpack.c.b16 %v929, %v898
      %v1023 = vpack.c.b16 %v930, %v899
      %v1024 = vpack.c.b16 %v931, %v900
      %v1025 = vpack.c.b16 %v932, %v901
      %v1026 = vpack.c.b16 %v933, %v902
      %v1027 = vpack.c.b16 %v934, %v903
      %v1028 = vpack.c.b16 %v935, %v904
      %v1029 = vpack.c.b16 %v936, %v905
      %v1030 = vpack.c.b16 %v937, %v906
      %v1031 = vpack.c.b16 %v938, %v907
      %v1032 = vpack.c.b16 %v939, %v908
      %v1033 = vpack.c.b16 %v940, %v909
      %v1034 = vpack.c.b16 %v941, %v910
      %v1035 = vpack.c.b16 %v942, %v911
      %v1036 = vpack.c.b16 %v943, %v912
      %v1037 = vpack.c.b16 %v944, %v913
      %v1038 = vpack.c.b16 %v945, %v914
      %v1039 = vpack.c.b16 %v946, %v915
      %v1040 = vpack.c.b16 %v947, %v916
      %v1041 = vpack.c.b16 %v948, %v917
      %v1042 = vpack.c.b16 %v949, %v918
      %v1043 = vpack.c.b16 %v950, %v919
      %v1044 = vpack.c.b16 %v951, %v920
      %v1045 = vpack.c.b16 %v983, %v952
      %v1046 = vpack.c.b16 %v984, %v953
      %v1047 = vpack.c.b16 %v985, %v954
      %v1048 = vpack.c.b16 %v986, %v955
      %v1049 = vpack.c.b16 %v987, %v956
      %v1050 = vpack.c.b16 %v988, %v957
      %v1051 = vpack.c.b16 %v989, %v958
      %v1052 = vpack.c.b16 %v990, %v959
      %v1053 = vpack.c.b16 %v991, %v960
      %v1054 = vpack.c.b16 %v992, %v961
      %v1055 = vpack.c.b16 %v993, %v962
      %v1056 = vpack.c.b16 %v994, %v963
      %v1057 = vpack.c.b16 %v995, %v964
      %v1058 = vpack.c.b16 %v996, %v965
      %v1059 = vpack.c.b16 %v997, %v966
      %v1060 = vpack.c.b16 %v998, %v967
      %v1061 = vpack.c.b16 %v999, %v968
      %v1062 = vpack.c.b16 %v1000, %v969
      %v1063 = vpack.c.b16 %v1001, %v970
      %v1064 = vpack.c.b16 %v1002, %v971
      %v1065 = vpack.c.b16 %v1003, %v972
      %v1066 = vpack.c.b16 %v1004, %v973
      %v1067 = vpack.c.b16 %v1005, %v974
      %v1068 = vpack.c.b16 %v1006, %v975
      %v1069 = vpack.c.b16 %v1007, %v976
      %v1070 = vpack.c.b16 %v1008, %v977
      %v1071 = vpack.c.b16 %v1009, %v978
      %v1072 = vpack.c.b16 %v1010, %v979
      %v1073 = vpack.c.b16 %v1011, %v980
      %v1074 = vpack.c.b16 %v1012, %v981
      %v1075 = vpack.c.b16 %v1013, %v982
      %v1620 = vunpack.c.l.b16 %v342
      %v1621 = vunpack.c.l.b16 %v343
      %v1622 = vunpack.c.l.b16 %v344
      %v1623 = vunpack.c.l.b16 %v345
      %v1624 = vunpack.c.l.b16 %v346
      %v1625 = vunpack.c.l.b16 %v347
      %v1626 = vunpack.c.l.b16 %v348
      %v1627 = vunpack.c.l.b16 %v349
      %v1628 = vunpack.c.l.b16 %v350
      %v1629 = vunpack.c.l.b16 %v351
      %v1630 = vunpack.c.l.b16 %v352
      %v1631 = vunpack.c.l.b16 %v353
      %v1632 = vunpack.c.l.b16 %v354
      %v1633 = vunpack.c.l.b16 %v355
      %v1634 = vunpack.c.l.b16 %v356
      %v1635 = vunpack.c.l.b16 %v357
      %v1636 = vunpack.c.l.b16 %v358
      %v1637 = vunpack.c.l.b16 %v359
      %v1638 = vunpack.c.l.b16 %v360
      %v1639 = vunpack.c.l.b16 %v361
      %v1640 = vunpack.c.l.b16 %v362
      %v1641 = vunpack.c.l.b16 %v363
      %v1642 = vunpack.c.l.b16 %v364
      %v1643 = vunpack.c.l.b16 %v365
      %v1644 = vunpack.c.l.b16 %v366
      %v1645 = vunpack.c.l.b16 %v367
      %v1646 = vunpack.c.l.b16 %v368
      %v1647 = vunpack.c.l.b16 %v369
      %v1648 = vunpack.c.l.b16 %v370
      %v1649 = vunpack.c.l.b16 %v371
      %v1650 = vunpack.c.l.b16 %v372
      %v1651 = vunpack.c.l.b16 %v373
      %v1652 = vunpack.c.l.b16 %v374
      %v1653 = vunpack.c.l.b16 %v375
      %v1654 = vunpack.c.l.b16 %v376
      %v1655 = vunpack.c.l.b16 %v377
      %v1656 = vunpack.c.l.b16 %v378
      %v1657 = vunpack.c.l.b16 %v379
      %v1658 = vunpack.c.l.b16 %v380
      %v1659 = vunpack.c.l.b16 %v381
      %v1660 = vunpack.c.l.b16 %v382
      %v1661 = vunpack.c.l.b16 %v383
      %v1662 = vunpack.c.l.b16 %v384
      %v1663 = vunpack.c.l.b16 %v385
      %v1664 = vunpack.c.l.b16 %v386
      %v1665 = vunpack.c.l.b16 %v387
      %v1666 = vunpack.c.l.b16 %v388
      %v1667 = vunpack.c.l.b16 %v389
      %v1668 = vunpack.c.l.b16 %v390
      %v1669 = vunpack.c.l.b16 %v391
      %v1670 = vunpack.c.l.b16 %v392
      %v1671 = vunpack.c.l.b16 %v393
      %v1672 = vunpack.c.l.b16 %v394
      %v1673 = vunpack.c.l.b16 %v395
      %v1674 = vunpack.c.l.b16 %v396
      %v1675 = vunpack.c.l.b16 %v397
      %v1676 = vunpack.c.l.b16 %v398
      %v1677 = vunpack.c.l.b16 %v399
      %v1678 = vunpack.c.l.b16 %v400
      %v1679 = vunpack.c.l.b16 %v401
      %v1680 = vunpack.c.l.b16 %v402
      %v1681 = vunpack.c.l.b16 %v403
      %v1682 = vunpack.c.l.b16 %v404
      %v1683 = vunpack.c.l.b16 %v405
      %v1684 = vunpack.c.l.b16 %v406
      %v1685 = vunpack.c.l.b16 %v407
      %v1686 = vunpack.c.l.b16 %v408
      %v1687 = vunpack.c.l.b16 %v409
      %v1688 = vunpack.c.l.b16 %v410
      %v1689 = vunpack.c.l.b16 %v411
      %v1690 = vunpack.c.l.b16 %v412
      %v1691 = vunpack.c.l.b16 %v413
      %v1692 = vunpack.c.l.b16 %v414
      %v1693 = vunpack.c.l.b16 %v415
      %v1694 = vunpack.c.l.b16 %v416
      %v1695 = vunpack.c.l.b16 %v417
      %v1696 = vunpack.c.l.b16 %v418
      %v1697 = vunpack.c.l.b16 %v419
      %v1698 = vunpack.c.l.b16 %v420
      %v1699 = vunpack.c.l.b16 %v421
      %v1700 = vunpack.c.l.b16 %v422
      %v1701 = vunpack.c.l.b16 %v423
      %v1702 = vunpack.c.l.b16 %v424
      %v1703 = vunpack.c.l.b16 %v425
      %v1704 = vunpack.c.l.b16 %v426
      %v1705 = vunpack.c.l.b16 %v427
      %v1706 = vunpack.c.l.b16 %v428
      %v1707 = vunpack.c.l.b16 %v429
      %v1708 = vunpack.c.l.b16 %v430
      %v1709 = vunpack.c.l.b16 %v431
      %v1710 = vunpack.c.l.b16 %v432
      %v1711 = vunpack.c.l.b16 %v433
      %v1712 = vunpack.c.l.b16 %v434
      %v1713 = vunpack.c.l.b16 %v435
      %v1714 = vunpack.c.l.b16 %v436
      %v1715 = vunpack.c.l.b16 %v437
      %v1716 = vunpack.c.l.b16 %v438
      %v1717 = vunpack.c.l.b16 %v439
      %v1718 = vunpack.c.l.b16 %v440
      %v1719 = vunpack.c.l.b16 %v441
      %v1720 = vunpack.c.l.b16 %v442
      %v1721 = vunpack.c.l.b16 %v443
      %v1722 = vunpack.c.l.b16 %v444
      %v1723 = vunpack.c.l.b16 %v445
      %v1724 = vunpack.c.l.b16 %v446
      %v1725 = vunpack.c.l.b16 %v447
      %v1726 = vunpack.c.l.b16 %v448
      %v1727 = vunpack.c.l.b16 %v449
      %v1728 = vunpack.c.l.b16 %v450
      %v1729 = vunpack.c.l.b16 %v451
      %v1730 = vunpack.c.l.b16 %v452
      %v1731 = vunpack.c.l.b16 %v453
      %v1732 = vunpack.c.l.b16 %v454
      %v1733 = vunpack.c.l.b16 %v455
      %v1734 = vunpack.c.l.b16 %v456
      %v1735 = vunpack.c.l.b16 %v457
      %v1736 = vunpack.c.l.b16 %v458
      %v1737 = vunpack.c.l.b16 %v459
      %v1738 = vunpack.c.l.b16 %v460
      %v1739 = vunpack.c.l.b16 %v461
      %v1740 = vunpack.c.l.b16 %v462
      %v1741 = vunpack.c.l.b16 %v463
      %v1742 = vunpack.c.l.b16 %v464
      %v1743 = vunpack.c.l.b16 %v465
      %v1744 = vunpack.c.l.b16 %v466
      %v1745 = vunpack.c.l.b16 %v467
      %v1746 = vunpack.c.l.b16 %v468
      %v1747 = vunpack.c.l.b16 %v469
      %v1748 = vunpack.c.l.b16 %v470
      %v1749 = vunpack.c.l.b16 %v471
      %v1750 = vunpack.c.l.b16 %v472
      %v1751 = vunpack.c.l.b16 %v473
      %v1752 = vunpack.c.l.b16 %v474
      %v1753 = vunpack.c.l.b16 %v475
      %v1754 = vunpack.c.l.b16 %v476
      %v1755 = vunpack.c.l.b16 %v477
      %v1756 = vunpack.c.l.b16 %v478
      %v1757 = vunpack.c.l.b16 %v479
      %v1758 = vunpack.c.l.b16 %v480
      %v1759 = vunpack.c.l.b16 %v481
      %v1760 = vunpack.c.l.b16 %v482
      %v1761 = vunpack.c.l.b16 %v483
      %v1762 = vunpack.c.l.b16 %v484
      %v1763 = vunpack.c.l.b16 %v485
      %v1764 = vunpack.c.l.b16 %v486
      %v1765 = vunpack.c.l.b16 %v487
      %v1766 = vunpack.c.l.b16 %v488
      %v1767 = vunpack.c.l.b16 %v489
      %v1768 = vunpack.c.l.b16 %v490
      %v1769 = vunpack.c.l.b16 %v491
      %v1770 = vunpack.c.l.b16 %v492
      %v1771 = vunpack.c.l.b16 %v493
      %v1772 = vunpack.c.l.b16 %v494
      %v1773 = vunpack.c.l.b16 %v495
      %v1774 = vunpack.c.l.b16 %v496
      %v1775 = vunpack.c.l.b16 %v497
      %v1776 = vunpack.c.l.b16 %v498
      %v1777 = vunpack.c.l.b16 %v499
      %v1778 = vunpack.c.l.b16 %v500
      %v1779 = vunpack.c.l.b16 %v501
      %v1780 = vunpack.c.l.b16 %v502
      %v1781 = vunpack.c.l.b16 %v503
      %v1782 = vunpack.c.l.b16 %v504
      %v1783 = vunpack.c.l.b16 %v505
      %v1784 = vunpack.c.l.b16 %v506
      %v1785 = vunpack.c.l.b16 %v507
      %v1786 = vunpack.c.l.b16 %v508
      %v1787 = vunpack.c.l.b16 %v509
      %v1788 = vunpack.c.l.b16 %v510
      %v1789 = vunpack.c.l.b16 %v511
      %v1790 = vunpack.c.l.b16 %v512
      %v1791 = vunpack.c.l.b16 %v513
      %v1792 = vunpack.c.l.b16 %v514
      %v1793 = vunpack.c.l.b16 %v515
      %v1794 = vunpack.c.l.b16 %v516
      %v1795 = vunpack.c.l.b16 %v517
      %v1796 = vunpack.c.l.b16 %v518
      %v1797 = vunpack.c.l.b16 %v519
      %v1798 = vunpack.c.l.b16 %v520
      %v1799 = vunpack.c.l.b16 %v521
      %v1800 = vunpack.c.l.b16 %v522
      %v1801 = vunpack.c.l.b16 %v523
      %v1802 = vunpack.c.l.b16 %v524
      %v1803 = vunpack.c.l.b16 %v525
      %v1804 = vunpack.c.l.b16 %v526
      %v1805 = vunpack.c.l.b16 %v527
      %v1806 = vunpack.c.l.b16 %v528
      %v1807 = vunpack.c.l.b16 %v529
      %v1808 = vunpack.c.l.b16 %v530
      %v1809 = vunpack.c.l.b16 %v531
      %v1810 = vunpack.c.l.b16 %v532
      %v1811 = vunpack.c.l.b16 %v533
      %v1812 = vunpack.c.l.b16 %v534
      %v1813 = vunpack.c.l.b16 %v535
      %v1814 = vunpack.c.l.b16 %v536
      %v1815 = vunpack.c.l.b16 %v537
      %v1816 = vunpack.c.l.b16 %v538
      %v1817 = vunpack.c.l.b16 %v539
      %v1818 = vunpack.c.l.b16 %v540
      %v1819 = vunpack.c.l.b16 %v541
      %v1820 = vunpack.c.l.b16 %v542
      %v1821 = vunpack.c.l.b16 %v543
      %v1822 = vunpack.c.l.b16 %v544
      %v1823 = vunpack.c.l.b16 %v545
      %v1824 = vunpack.c.l.b16 %v546
      %v1825 = vunpack.c.l.b16 %v547
      %v1826 = vunpack.c.l.b16 %v548
      %v1827 = vunpack.c.l.b16 %v549
      %v1828 = vunpack.c.l.b16 %v550
      %v1829 = vunpack.c.l.b16 %v551
      %v1830 = vunpack.c.l.b16 %v552
      %v1831 = vunpack.c.l.b16 %v553
      %v1832 = vunpack.c.l.b16 %v554
      %v1833 = vunpack.c.l.b16 %v555
      %v1834 = vunpack.c.l.b16 %v556
      %v1835 = vunpack.c.l.b16 %v557
      %v1836 = vunpack.c.l.b16 %v558
      %v1837 = vunpack.c.l.b16 %v559
      %v1838 = vunpack.c.l.b16 %v560
      %v1839 = vunpack.c.l.b16 %v561
      %v1840 = vunpack.c.l.b16 %v562
      %v1841 = vunpack.c.l.b16 %v563
      %v1842 = vunpack.c.l.b16 %v564
      %v1843 = vunpack.c.l.b16 %v565
      %v1844 = vunpack.c.l.b16 %v566
      %v1845 = vunpack.c.l.b16 %v567
      %v1846 = vunpack.c.l.b16 %v568
      %v1847 = vunpack.c.l.b16 %v569
      %v1848 = vunpack.c.l.b16 %v570
      %v1849 = vunpack.c.l.b16 %v571
      %v1850 = vunpack.c.l.b16 %v572
      %v1851 = vunpack.c.l.b16 %v573
      %v1852 = vunpack.c.l.b16 %v574
      %v1853 = vunpack.c.l.b16 %v575
      %v1854 = vunpack.c.l.b16 %v576
      %v1855 = vunpack.c.l.b16 %v577
      %v1856 = vunpack.c.l.b16 %v578
      %v1857 = vunpack.c.l.b16 %v579
      %v1858 = vunpack.c.l.b16 %v580
      %v1859 = vunpack.c.l.b16 %v581
      %v1860 = vunpack.c.l.b16 %v582
      %v1861 = vunpack.c.l.b16 %v583
      %v1862 = vunpack.c.l.b16 %v584
      %v1863 = vunpack.c.l.b16 %v585
      %v1864 = vunpack.c.l.b16 %v586
      %v1865 = vunpack.c.l.b16 %v587
      %v1866 = vunpack.c.l.b16 %v588
      %v1867 = vunpack.c.l.b16 %v589
      %v1868 = vunpack.c.l.b16 %v590
      %v1869 = vunpack.c.l.b16 %v591
      %v1870 = vunpack.c.l.b16 %v592
      %v1871 = vunpack.c.l.b16 %v593
      %v1872 = vunpack.c.l.b16 %v594
      %v1873 = vunpack.c.l.b16 %v595
      %v1874 = vunpack.c.l.b16 %v596
      %v1875 = vunpack.c.l.b16 %v597
      %v1876 = vunpack.c.l.b16 %v598
      %v1877 = vunpack.c.l.b16 %v599
      %v1878 = vunpack.c.l.b16 %v600
      %v1879 = vunpack.c.l.b16 %v601
      %v1880 = vunpack.c.l.b16 %v602
      %v1881 = vunpack.c.l.b16 %v603
      %v1882 = vunpack.c.l.b16 %v604
      %v1883 = vunpack.c.l.b16 %v605
      %v1884 = vunpack.c.l.b16 %v606
      %v1885 = vunpack.c.l.b16 %v607
      %v1886 = vunpack.c.l.b16 %v608
      %v1887 = vunpack.c.l.b16 %v609
      %v1888 = vunpack.c.l.b16 %v610
      %v1889 = vunpack.c.l.b16 %v611
      %v1890 = vunpack.c.l.b16 %v612
      %v1891 = vunpack.c.l.b16 %v613
      %v1892 = vunpack.c.l.b16 %v614
      %v1893 = vunpack.c.l.b16 %v615
      %v1894 = vunpack.c.l.b16 %v616
      %v1895 = vunpack.c.l.b16 %v617
      %v1896 = vunpack.c.l.b16 %v618
      %v1897 = vunpack.c.l.b16 %v619
      %v1898 = vunpack.c.l.b16 %v620
      %v1899 = vunpack.c.l.b16 %v621
      %v1900 = vunpack.c.l.b16 %v622
      %v1901 = vunpack.c.l.b16 %v623
      %v1902 = vunpack.c.l.b16 %v624
      %v1903 = vunpack.c.l.b16 %v625
      %v1904 = vunpack.c.l.b16 %v626
      %v1905 = vunpack.c.l.b16 %v627
      %v1906 = vunpack.c.l.b16 %v628
      %v1907 = vunpack.c.l.b16 %v629
      %v1908 = vunpack.c.l.b16 %v630
      %v1909 = vunpack.c.l.b16 %v631
      %v1910 = vunpack.c.l.b16 %v632
      %v1911 = vunpack.c.l.b16 %v633
      %v1912 = vunpack.c.l.b16 %v634
      %v1913 = vunpack.c.l.b16 %v635
      %v1914 = vunpack.c.l.b16 %v636
      %v1915 = vunpack.c.l.b16 %v637
      %v1916 = vunpack.c.l.b16 %v638
      %v1917 = vunpack.c.l.b16 %v639
      %v1918 = vunpack.c.l.b16 %v640
      %v1919 = vunpack.c.l.b16 %v641
      %v1920 = vunpack.c.l.b16 %v642
      %v1921 = vunpack.c.l.b16 %v643
      %v1922 = vunpack.c.l.b16 %v644
      %v1923 = vunpack.c.l.b16 %v645
      %v1924 = vunpack.c.l.b16 %v646
      %v1925 = vunpack.c.l.b16 %v647
      %v1926 = vunpack.c.l.b16 %v648
      %v1927 = vunpack.c.l.b16 %v649
      %v1928 = vunpack.c.l.b16 %v650
      %v1929 = vunpack.c.l.b16 %v651
      %v1930 = vunpack.c.l.b16 %v652
      %v1931 = vunpack.c.l.b16 %v653
      %v1932 = vunpack.c.l.b16 %v654
      %v1933 = vunpack.c.l.b16 %v655
      %v1934 = vunpack.c.l.b16 %v656
      %v1935 = vunpack.c.l.b16 %v657
      %v1936 = vunpack.c.l.b16 %v658
      %v1937 = vunpack.c.l.b16 %v659
      %v1938 = vunpack.c.l.b16 %v660
      %v1939 = vunpack.c.l.b16 %v661
      %v1940 = vunpack.c.l.b16 %v662
      %v1941 = vunpack.c.l.b16 %v663
      %v1942 = vunpack.c.l.b16 %v664
      %v1943 = vunpack.c.l.b16 %v665
      %v1944 = vunpack.c.l.b16 %v666
      %v1945 = vunpack.c.l.b16 %v667
      %v1946 = vunpack.c.l.b16 %v668
      %v1947 = vunpack.c.l.b16 %v669
      %v1948 = vunpack.c.l.b16 %v670
      %v1949 = vunpack.c.l.b16 %v671
      %v1950 = vunpack.c.l.b16 %v672
      %v1951 = vunpack.c.l.b16 %v673
      %v1952 = vunpack.c.l.b16 %v674
      %v1953 = vunpack.c.l.b16 %v675
      %v1954 = vunpack.c.l.b16 %v676
      %v1955 = vunpack.c.l.b16 %v677
      %v1956 = vunpack.c.l.b16 %v678
      %v1957 = vunpack.c.l.b16 %v679
      %v1958 = vunpack.c.l.b16 %v680
      %v1959 = vunpack.c.l.b16 %v681
      %v1960 = vunpack.c.l.b16 %v682
      %v1961 = vunpack.c.l.b16 %v683
      %v1962 = vunpack.c.l.b16 %v684
      %v1963 = vunpack.c.l.b16 %v685
      %v1964 = vunpack.c.l.b16 %v686
      %v1965 = vunpack.c.l.b16 %v687
      %v1966 = vunpack.c.l.b16 %v688
      %v1967 = vunpack.c.l.b16 %v689
      %v1968 = vunpack.c.l.b16 %v690
      %v1969 = vunpack.c.l.b16 %v691
      %v1970 = vunpack.c.l.b16 %v692
      %v1971 = vunpack.c.l.b16 %v693
      %v1972 = vunpack.c.l.b16 %v694
      %v1973 = vunpack.c.l.b16 %v695
      %v1974 = vunpack.c.l.b16 %v696
      %v1975 = vunpack.c.l.b16 %v697
      %v1976 = vunpack.c.l.b16 %v698
      %v1977 = vunpack.c.l.b16 %v699
      %v1978 = vunpack.c.l.b16 %v700
      %v1979 = vunpack.c.l.b16 %v701
      %v1980 = vunpack.c.l.b16 %v702
      %v1981 = vunpack.c.l.b16 %v703
      %v1982 = vunpack.c.l.b16 %v704
      %v1983 = vunpack.c.l.b16 %v705
      %v1984 = vunpack.c.l.b16 %v706
      %v1985 = vunpack.c.l.b16 %v707
      %v1986 = vunpack.c.l.b16 %v708
      %v1987 = vunpack.c.l.b16 %v709
      %v1988 = vunpack.c.l.b16 %v710
      %v1989 = vunpack.c.l.b16 %v711
      %v1990 = vunpack.c.l.b16 %v712
      %v1991 = vunpack.c.l.b16 %v713
      %v1992 = vunpack.c.l.b16 %v714
      %v1993 = vunpack.c.l.b16 %v715
      %v1994 = vunpack.c.l.b16 %v716
      %v1995 = vunpack.c.l.b16 %v717
      %v1996 = vunpack.c.l.b16 %v718
      %v1997 = vunpack.c.l.b16 %v719
      %v1998 = vunpack.c.l.b16 %v720
      %v1999 = vunpack.c.l.b16 %v721
      %v2000 = vunpack.c.l.b16 %v722
      %v2001 = vunpack.c.l.b16 %v723
      %v2002 = vunpack.c.l.b16 %v724
      %v2003 = vunpack.c.l.b16 %v725
      %v2004 = vunpack.c.l.b16 %v726
      %v2005 = vunpack.c.l.b16 %v727
      %v2006 = vunpack.c.l.b16 %v728
      %v2007 = vunpack.c.l.b16 %v729
      %v2008 = vunpack.c.l.b16 %v730
      %v2009 = vunpack.c.l.b16 %v731
      %v2010 = vunpack.c.l.b16 %v732
      %v2011 = vunpack.c.l.b16 %v733
      %v2012 = vunpack.c.l.b16 %v734
      %v2013 = vunpack.c.l.b16 %v735
      %v2014 = vunpack.c.l.b16 %v736
      %v2015 = vunpack.c.l.b16 %v737
      %v2016 = vunpack.c.l.b16 %v738
      %v2017 = vunpack.c.l.b16 %v739
      %v2018 = vunpack.c.l.b16 %v740
      %v2019 = vunpack.c.l.b16 %v741
      %v2020 = vunpack.c.l.b16 %v742
      %v2021 = vunpack.c.l.b16 %v743
      %v2022 = vunpack.c.l.b16 %v744
      %v2023 = vunpack.c.l.b16 %v745
      %v2024 = vunpack.c.l.b16 %v746
      %v2025 = vunpack.c.l.b16 %v747
      %v2026 = vunpack.c.l.b16 %v748
      %v2027 = vunpack.c.l.b16 %v749
      %v2028 = vunpack.c.l.b16 %v750
      %v2029 = vunpack.c.l.b16 %v751
      %v2030 = vunpack.c.l.b16 %v752
      %v2031 = vunpack.c.l.b16 %v753
      %v2032 = vunpack.c.l.b16 %v754
      %v2033 = vunpack.c.l.b16 %v755
      %v2034 = vunpack.c.l.b16 %v756
      %v2035 = vunpack.c.l.b16 %v757
      %v2036 = vunpack.c.l.b16 %v758
      %v2037 = vunpack.c.l.b16 %v759
      %v2038 = vunpack.c.l.b16 %v760
      %v2039 = vunpack.c.l.b16 %v761
      %v2040 = vunpack.c.l.b16 %v762
      %v2041 = vunpack.c.l.b16 %v763
      %v2042 = vunpack.c.l.b16 %v764
      %v2043 = vunpack.c.l.b16 %v765
      %v2044 = vunpack.c.l.b16 %v766
      %v2045 = vunpack.c.l.b16 %v767
      %v2046 = vunpack.c.l.b16 %v768
      %v2047 = vunpack.c.l.b16 %v769
      %v2048 = vunpack.c.l.b16 %v770
      %v2049 = vunpack.c.l.b16 %v771
      %v2050 = vunpack.c.l.b16 %v772
      %v2051 = vunpack.c.l.b16 %v773
      %v2052 = vunpack.c.l.b16 %v774
      %v2053 = vunpack.c.l.b16 %v775
      %v2054 = vunpack.c.l.b16 %v776
      %v2055 = vunpack.c.l.b16 %v777
      %v2056 = vunpack.c.l.b16 %v778
      %v2057 = vunpack.c.l.b16 %v779
      %v2058 = vunpack.c.l.b16 %v780
      %v2059 = vunpack.c.l.b16 %v781
      %v2060 = vunpack.c.l.b16 %v782
      %v2061 = vunpack.c.l.b16 %v783
      %v2062 = vunpack.c.l.b16 %v784
      %v2063 = vunpack.c.l.b16 %v785
      %v2064 = vunpack.c.l.b16 %v786
      %v2065 = vunpack.c.l.b16 %v787
      %v2066 = vunpack.c.l.b16 %v788
      %v2067 = vunpack.c.l.b16 %v789
      %v2068 = vunpack.c.l.b16 %v790
      %v2069 = vunpack.c.l.b16 %v791
      %v2070 = vunpack.c.l.b16 %v792
      %v2071 = vunpack.c.l.b16 %v793
      %v2072 = vunpack.c.l.b16 %v794
      %v2073 = vunpack.c.l.b16 %v795
      %v2074 = vunpack.c.l.b16 %v796
      %v2075 = vunpack.c.l.b16 %v797
      %v2076 = vunpack.c.l.b16 %v798
      %v2077 = vunpack.c.l.b16 %v799
      %v2078 = vunpack.c.l.b16 %v800
      %v2079 = vunpack.c.l.b16 %v801
      %v2080 = vunpack.c.l.b16 %v802
      %v2081 = vunpack.c.l.b16 %v803
      %v2082 = vunpack.c.l.b16 %v804
      %v2083 = vunpack.c.l.b16 %v805
      %v2084 = vunpack.c.l.b16 %v806
      %v2085 = vunpack.c.l.b16 %v807
      %v2086 = vunpack.c.l.b16 %v808
      %v2087 = vunpack.c.l.b16 %v809
      %v2088 = vunpack.c.l.b16 %v810
      %v2089 = vunpack.c.l.b16 %v811
      %v2090 = vunpack.c.l.b16 %v812
      %v2091 = vunpack.c.l.b16 %v813
      %v2092 = vunpack.c.l.b16 %v814
      %v2093 = vunpack.c.l.b16 %v815
      %v2094 = vunpack.c.l.b16 %v816
      %v2095 = vunpack.c.l.b16 %v817
      %v2096 = vunpack.c.l.b16 %v818
      %v2097 = vunpack.c.l.b16 %v819
      %v2098 = vunpack.c.l.b16 %v820
      %v2099 = vunpack.c.l.b16 %v821
      %v2100 = vunpack.c.l.b16 %v822
      %v2101 = vunpack.c.l.b16 %v823
      %v2102 = vunpack.c.l.b16 %v824
      %v2103 = vunpack.c.l.b16 %v825
      %v2104 = vpack.c.b16 %v1621, %v1620
      %v2105 = vpack.c.b16 %v1623, %v1622
      %v2106 = vpack.c.b16 %v1625, %v1624
      %v2107 = vpack.c.b16 %v1627, %v1626
      %v2108 = vpack.c.b16 %v1629, %v1628
      %v2109 = vpack.c.b16 %v1631, %v1630
      %v2110 = vpack.c.b16 %v1633, %v1632
      %v2111 = vpack.c.b16 %v1635, %v1634
      %v2112 = vpack.c.b16 %v1637, %v1636
      %v2113 = vpack.c.b16 %v1639, %v1638
      %v2114 = vpack.c.b16 %v1641, %v1640
      %v2115 = vpack.c.b16 %v1643, %v1642
      %v2116 = vpack.c.b16 %v1645, %v1644
      %v2117 = vpack.c.b16 %v1647, %v1646
      %v2118 = vpack.c.b16 %v1649, %v1648
      %v2119 = vpack.c.b16 %v1651, %v1650
      %v2120 = vpack.c.b16 %v1653, %v1652
      %v2121 = vpack.c.b16 %v1655, %v1654
      %v2122 = vpack.c.b16 %v1657, %v1656
      %v2123 = vpack.c.b16 %v1659, %v1658
      %v2124 = vpack.c.b16 %v1661, %v1660
      %v2125 = vpack.c.b16 %v1663, %v1662
      %v2126 = vpack.c.b16 %v1665, %v1664
      %v2127 = vpack.c.b16 %v1667, %v1666
      %v2128 = vpack.c.b16 %v1669, %v1668
      %v2129 = vpack.c.b16 %v1671, %v1670
      %v2130 = vpack.c.b16 %v1673, %v1672
      %v2131 = vpack.c.b16 %v1675, %v1674
      %v2132 = vpack.c.b16 %v1677, %v1676
      %v2133 = vpack.c.b16 %v1679, %v1678
      %v2134 = vpack.c.b16 %v1681, %v1680
      %v2135 = vpack.c.b16 %v1683, %v1682
      %v2136 = vpack.c.b16 %v1685, %v1684
      %v2137 = vpack.c.b16 %v1687, %v1686
      %v2138 = vpack.c.b16 %v1689, %v1688
      %v2139 = vpack.c.b16 %v1691, %v1690
      %v2140 = vpack.c.b16 %v1693, %v1692
      %v2141 = vpack.c.b16 %v1695, %v1694
      %v2142 = vpack.c.b16 %v1697, %v1696
      %v2143 = vpack.c.b16 %v1699, %v1698
      %v2144 = vpack.c.b16 %v1701, %v1700
      %v2145 = vpack.c.b16 %v1703, %v1702
      %v2146 = vpack.c.b16 %v1705, %v1704
      %v2147 = vpack.c.b16 %v1707, %v1706
      %v2148 = vpack.c.b16 %v1709, %v1708
      %v2149 = vpack.c.b16 %v1711, %v1710
      %v2150 = vpack.c.b16 %v1713, %v1712
      %v2151 = vpack.c.b16 %v1715, %v1714
      %v2152 = vpack.c.b16 %v1717, %v1716
      %v2153 = vpack.c.b16 %v1719, %v1718
      %v2154 = vpack.c.b16 %v1721, %v1720
      %v2155 = vpack.c.b16 %v1723, %v1722
      %v2156 = vpack.c.b16 %v1725, %v1724
      %v2157 = vpack.c.b16 %v1727, %v1726
      %v2158 = vpack.c.b16 %v1729, %v1728
      %v2159 = vpack.c.b16 %v1731, %v1730
      %v2160 = vpack.c.b16 %v1733, %v1732
      %v2161 = vpack.c.b16 %v1735, %v1734
      %v2162 = vpack.c.b16 %v1737, %v1736
      %v2163 = vpack.c.b16 %v1739, %v1738
      %v2164 = vpack.c.b16 %v1741, %v1740
      %v2165 = vpack.c.b16 %v1743, %v1742
      %v2166 = vpack.c.b16 %v1745, %v1744
      %v2167 = vpack.c.b16 %v1747, %v1746
      %v2168 = vpack.c.b16 %v1749, %v1748
      %v2169 = vpack.c.b16 %v1751, %v1750
      %v2170 = vpack.c.b16 %v1753, %v1752
      %v2171 = vpack.c.b16 %v1755, %v1754
      %v2172 = vpack.c.b16 %v1757, %v1756
      %v2173 = vpack.c.b16 %v1759, %v1758
      %v2174 = vpack.c.b16 %v1761, %v1760
      %v2175 = vpack.c.b16 %v1763, %v1762
      %v2176 = vpack.c.b16 %v1765, %v1764
      %v2177 = vpack.c.b16 %v1767, %v1766
      %v2178 = vpack.c.b16 %v1769, %v1768
      %v2179 = vpack.c.b16 %v1771, %v1770
      %v2180 = vpack.c.b16 %v1773, %v1772
      %v2181 = vpack.c.b16 %v1775, %v1774
      %v2182 = vpack.c.b16 %v1777, %v1776
      %v2183 = vpack.c.b16 %v1779, %v1778
      %v2184 = vpack.c.b16 %v1781, %v1780
      %v2185 = vpack.c.b16 %v1783, %v1782
      %v2186 = vpack.c.b16 %v1785, %v1784
      %v2187 = vpack.c.b16 %v1787, %v1786
      %v2188 = vpack.c.b16 %v1789, %v1788
      %v2189 = vpack.c.b16 %v1791, %v1790
      %v2190 = vpack.c.b16 %v1793, %v1792
      %v2191 = vpack.c.b16 %v1795, %v1794
      %v2192 = vpack.c.b16 %v1797, %v1796
      %v2193 = vpack.c.b16 %v1799, %v1798
      %v2194 = vpack.c.b16 %v1801, %v1800
      %v2195 = vpack.c.b16 %v1803, %v1802
      %v2196 = vpack.c.b16 %v1805, %v1804
      %v2197 = vpack.c.b16 %v1807, %v1806
      %v2198 = vpack.c.b16 %v1809, %v1808
      %v2199 = vpack.c.b16 %v1811, %v1810
      %v2200 = vpack.c.b16 %v1813, %v1812
      %v2201 = vpack.c.b16 %v1815, %v1814
      %v2202 = vpack.c.b16 %v1817, %v1816
      %v2203 = vpack.c.b16 %v1819, %v1818
      %v2204 = vpack.c.b16 %v1821, %v1820
      %v2205 = vpack.c.b16 %v1823, %v1822
      %v2206 = vpack.c.b16 %v1825, %v1824
      %v2207 = vpack.c.b16 %v1827, %v1826
      %v2208 = vpack.c.b16 %v1829, %v1828
      %v2209 = vpack.c.b16 %v1831, %v1830
      %v2210 = vpack.c.b16 %v1833, %v1832
      %v2211 = vpack.c.b16 %v1835, %v1834
      %v2212 = vpack.c.b16 %v1837, %v1836
      %v2213 = vpack.c.b16 %v1839, %v1838
      %v2214 = vpack.c.b16 %v1841, %v1840
      %v2215 = vpack.c.b16 %v1843, %v1842
      %v2216 = vpack.c.b16 %v1845, %v1844
      %v2217 = vpack.c.b16 %v1847, %v1846
      %v2218 = vpack.c.b16 %v1849, %v1848
      %v2219 = vpack.c.b16 %v1851, %v1850
      %v2220 = vpack.c.b16 %v1853, %v1852
      %v2221 = vpack.c.b16 %v1855, %v1854
      %v2222 = vpack.c.b16 %v1857, %v1856
      %v2223 = vpack.c.b16 %v1859, %v1858
      %v2224 = vpack.c.b16 %v1861, %v1860
      %v2225 = vpack.c.b16 %v1863, %v1862
      %v2226 = vpack.c.b16 %v1865, %v1864
      %v2227 = vpack.c.b16 %v1867, %v1866
      %v2228 = vpack.c.b16 %v1869, %v1868
      %v2229 = vpack.c.b16 %v1871, %v1870
      %v2230 = vpack.c.b16 %v1873, %v1872
      %v2231 = vpack.c.b16 %v1875, %v1874
      %v2232 = vpack.c.b16 %v1877, %v1876
      %v2233 = vpack.c.b16 %v1879, %v1878
      %v2234 = vpack.c.b16 %v1881, %v1880
      %v2235 = vpack.c.b16 %v1883, %v1882
      %v2236 = vpack.c.b16 %v1885, %v1884
      %v2237 = vpack.c.b16 %v1887, %v1886
      %v2238 = vpack.c.b16 %v1889, %v1888
      %v2239 = vpack.c.b16 %v1891, %v1890
      %v2240 = vpack.c.b16 %v1893, %v1892
      %v2241 = vpack.c.b16 %v1895, %v1894
      %v2242 = vpack.c.b16 %v1897, %v1896
      %v2243 = vpack.c.b16 %v1899, %v1898
      %v2244 = vpack.c.b16 %v1901, %v1900
      %v2245 = vpack.c.b16 %v1903, %v1902
      %v2246 = vpack.c.b16 %v1905, %v1904
      %v2247 = vpack.c.b16 %v1907, %v1906
      %v2248 = vpack.c.b16 %v1909, %v1908
      %v2249 = vpack.c.b16 %v1911, %v1910
      %v2250 = vpack.c.b16 %v1913, %v1912
      %v2251 = vpack.c.b16 %v1915, %v1914
      %v2252 = vpack.c.b16 %v1917, %v1916
      %v2253 = vpack.c.b16 %v1919, %v1918
      %v2254 = vpack.c.b16 %v1921, %v1920
      %v2255 = vpack.c.b16 %v1923, %v1922
      %v2256 = vpack.c.b16 %v1925, %v1924
      %v2257 = vpack.c.b16 %v1927, %v1926
      %v2258 = vpack.c.b16 %v1929, %v1928
      %v2259 = vpack.c.b16 %v1931, %v1930
      %v2260 = vpack.c.b16 %v1933, %v1932
      %v2261 = vpack.c.b16 %v1935, %v1934
      %v2262 = vpack.c.b16 %v1937, %v1936
      %v2263 = vpack.c.b16 %v1939, %v1938
      %v2264 = vpack.c.b16 %v1941, %v1940
      %v2265 = vpack.c.b16 %v1943, %v1942
      %v2266 = vpack.c.b16 %v1945, %v1944
      %v2267 = vpack.c.b16 %v1947, %v1946
      %v2268 = vpack.c.b16 %v1949, %v1948
      %v2269 = vpack.c.b16 %v1951, %v1950
      %v2270 = vpack.c.b16 %v1953, %v1952
      %v2271 = vpack.c.b16 %v1955, %v1954
      %v2272 = vpack.c.b16 %v1957, %v1956
      %v2273 = vpack.c.b16 %v1959, %v1958
      %v2274 = vpack.c.b16 %v1961, %v1960
      %v2275 = vpack.c.b16 %v1963, %v1962
      %v2276 = vpack.c.b16 %v1965, %v1964
      %v2277 = vpack.c.b16 %v1967, %v1966
      %v2278 = vpack.c.b16 %v1969, %v1968
      %v2279 = vpack.c.b16 %v1971, %v1970
      %v2280 = vpack.c.b16 %v1973, %v1972
      %v2281 = vpack.c.b16 %v1975, %v1974
      %v2282 = vpack.c.b16 %v1977, %v1976
      %v2283 = vpack.c.b16 %v1979, %v1978
      %v2284 = vpack.c.b16 %v1981, %v1980
      %v2285 = vpack.c.b16 %v1983, %v1982
      %v2286 = vpack.c.b16 %v1985, %v1984
      %v2287 = vpack.c.b16 %v1987, %v1986
      %v2288 = vpack.c.b16 %v1989, %v1988
      %v2289 = vpack.c.b16 %v1991, %v1990
      %v2290 = vpack.c.b16 %v1993, %v1992
      %v2291 = vpack.c.b16 %v1995, %v1994
      %v2292 = vpack.c.b16 %v1997, %v1996
      %v2293 = vpack.c.b16 %v1999, %v1998
      %v2294 = vpack.c.b16 %v2001, %v2000
      %v2295 = vpack.c.b16 %v2003, %v2002
      %v2296 = vpack.c.b16 %v2005, %v2004
      %v2297 = vpack.c.b16 %v2007, %v2006
      %v2298 = vpack.c.b16 %v2009, %v2008
      %v2299 = vpack.c.b16 %v2011, %v2010
      %v2300 = vpack.c.b16 %v2013, %v2012
      %v2301 = vpack.c.b16 %v2015, %v2014
      %v2302 = vpack.c.b16 %v2017, %v2016
      %v2303 = vpack.c.b16 %v2019, %v2018
      %v2304 = vpack.c.b16 %v2021, %v2020
      %v2305 = vpack.c.b16 %v2023, %v2022
      %v2306 = vpack.c.b16 %v2025, %v2024
      %v2307 = vpack.c.b16 %v2027, %v2026
      %v2308 = vpack.c.b16 %v2029, %v2028
      %v2309 = vpack.c.b16 %v2031, %v2030
      %v2310 = vpack.c.b16 %v2033, %v2032
      %v2311 = vpack.c.b16 %v2035, %v2034
      %v2312 = vpack.c.b16 %v2037, %v2036
      %v2313 = vpack.c.b16 %v2039, %v2038
      %v2314 = vpack.c.b16 %v2041, %v2040
      %v2315 = vpack.c.b16 %v2043, %v2042
      %v2316 = vpack.c.b16 %v2045, %v2044
      %v2317 = vpack.c.b16 %v2047, %v2046
      %v2318 = vpack.c.b16 %v2049, %v2048
      %v2319 = vpack.c.b16 %v2051, %v2050
      %v2320 = vpack.c.b16 %v2053, %v2052
      %v2321 = vpack.c.b16 %v2055, %v2054
      %v2322 = vpack.c.b16 %v2057, %v2056
      %v2323 = vpack.c.b16 %v2059, %v2058
      %v2324 = vpack.c.b16 %v2061, %v2060
      %v2325 = vpack.c.b16 %v2063, %v2062
      %v2326 = vpack.c.b16 %v2065, %v2064
      %v2327 = vpack.c.b16 %v2067, %v2066
      %v2328 = vpack.c.b16 %v2069, %v2068
      %v2329 = vpack.c.b16 %v2071, %v2070
      %v2330 = vpack.c.b16 %v2073, %v2072
      %v2331 = vpack.c.b16 %v2075, %v2074
      %v2332 = vpack.c.b16 %v2077, %v2076
      %v2333 = vpack.c.b16 %v2079, %v2078
      %v2334 = vpack.c.b16 %v2081, %v2080
      %v2335 = vpack.c.b16 %v2083, %v2082
      %v2336 = vpack.c.b16 %v2085, %v2084
      %v2337 = vpack.c.b16 %v2087, %v2086
      %v2338 = vpack.c.b16 %v2089, %v2088
      %v2339 = vpack.c.b16 %v2091, %v2090
      %v2340 = vpack.c.b16 %v2093, %v2092
      %v2341 = vpack.c.b16 %v2095, %v2094
      %v2342 = vpack.c.b16 %v2097, %v2096
      %v2343 = vpack.c.b16 %v2099, %v2098
      %v2344 = vpack.c.b16 %v2101, %v2100
      %v2345 = vpack.c.b16 %v2103, %v2102
      %vm2588 = vcmask 261120
      %v2590 = vsel %vm2588, %v1044, 0
      %v2593 = vsel %vm2588, %v1075, 0
      %2595 = vmatprep.subr.bf16.mxu0 0
      %2596 = vmatpush1.bf16.msra.mxu0 %v2104
      %2597 = vmatprep.subr.bf16.mxu0 0
      %2598 = vmatpush1.bf16.msra.mxu0 %v2105
      %2599 = vmatprep.subr.bf16.mxu0 0
      %2600 = vmatpush1.bf16.msra.mxu0 %v2106
      %2601 = vmatprep.subr.bf16.mxu0 0
      %2602 = vmatpush1.bf16.msra.mxu0 %v2107
      %2603 = vmatprep.subr.bf16.mxu0 0
      %2604 = vmatpush1.bf16.msra.mxu0 %v2108
      %2605 = vmatprep.subr.bf16.mxu0 0
      %2606 = vmatpush1.bf16.msra.mxu0 %v2109
      %2607 = vmatprep.subr.bf16.mxu0 0
      %2608 = vmatpush1.bf16.msra.mxu0 %v2110
      %2609 = vmatprep.subr.bf16.mxu0 0
      %2610 = vmatpush1.bf16.msra.mxu0 %v2111
      %2611 = vmatprep.subr.bf16.mxu0 0
      %2612 = vmatpush1.bf16.msra.mxu0 %v2112
      %2613 = vmatprep.subr.bf16.mxu0 0
      %2614 = vmatpush1.bf16.msra.mxu0 %v2113
      %2615 = vmatprep.subr.bf16.mxu0 0
      %2616 = vmatpush1.bf16.msra.mxu0 %v2114
      %2617 = vmatprep.subr.bf16.mxu0 0
      %2618 = vmatpush1.bf16.msra.mxu0 %v2115
      %2619 = vmatprep.subr.bf16.mxu0 0
      %2620 = vmatpush1.bf16.msra.mxu0 %v2116
      %2621 = vmatprep.subr.bf16.mxu0 0
      %2622 = vmatpush1.bf16.msra.mxu0 %v2117
      %2623 = vmatprep.subr.bf16.mxu0 0
      %2624 = vmatpush1.bf16.msra.mxu0 %v2118
      %2625 = vmatprep.subr.bf16.mxu0 0
      %2626 = vmatpush1.bf16.msra.mxu0 %v2119
      %2627 = vmatprep.mubr.bf16.mxu0 %v1015
      %2628 = vmatmul.mubr.bf16.gmra.mrb[0].mxu0 %v1014
      %v2629 = vpop.f32.mrb[0].mxu0
      %v2630 = vadd.f32 0.0, %v2629
      %v2631 = vpop.f32.mrb[0].mxu0
      %v2632 = vpop.f32.mrb[0].mxu0
      %v2633 = vadd.f32 0.0, %v2632
      %v2634 = vpop.f32.mrb[0].mxu0
      %2635 = vmatprep.mubr.bf16.mxu0 %v1046
      %2636 = vmatmul.mubr.bf16.gmra.mrb[0].mxu0 %v1045
      %v2637 = vpop.f32.mrb[0].mxu0
      %v2638 = vadd.f32 0.0, %v2637
      %v2639 = vpop.f32.mrb[0].mxu0
      %v2640 = vpop.f32.mrb[0].mxu0
      %v2641 = vadd.f32 0.0, %v2640
      %v2642 = vpop.f32.mrb[0].mxu0
      %2643 = vdwg.mxu0
      %2644 = vmatprep.subr.bf16.mxu0 0
      %2645 = vmatpush1.bf16.msra.mxu0 %v2120
      %2646 = vmatprep.subr.bf16.mxu0 0
      %2647 = vmatpush1.bf16.msra.mxu0 %v2121
      %2648 = vmatprep.subr.bf16.mxu0 0
      %2649 = vmatpush1.bf16.msra.mxu0 %v2122
      %2650 = vmatprep.subr.bf16.mxu0 0
      %2651 = vmatpush1.bf16.msra.mxu0 %v2123
      %2652 = vmatprep.subr.bf16.mxu0 0
      %2653 = vmatpush1.bf16.msra.mxu0 %v2124
      %2654 = vmatprep.subr.bf16.mxu0 0
      %2655 = vmatpush1.bf16.msra.mxu0 %v2125
      %2656 = vmatprep.subr.bf16.mxu0 0
      %2657 = vmatpush1.bf16.msra.mxu0 %v2126
      %2658 = vmatprep.subr.bf16.mxu0 0
      %2659 = vmatpush1.bf16.msra.mxu0 %v2127
      %2660 = vmatprep.subr.bf16.mxu0 0
      %2661 = vmatpush1.bf16.msra.mxu0 %v2128
      %2662 = vmatprep.subr.bf16.mxu0 0
      %2663 = vmatpush1.bf16.msra.mxu0 %v2129
      %2664 = vmatprep.subr.bf16.mxu0 0
      %2665 = vmatpush1.bf16.msra.mxu0 %v2130
      %2666 = vmatprep.subr.bf16.mxu0 0
      %2667 = vmatpush1.bf16.msra.mxu0 %v2131
      %2668 = vmatprep.subr.bf16.mxu0 0
      %2669 = vmatpush1.bf16.msra.mxu0 %v2132
      %2670 = vmatprep.subr.bf16.mxu0 0
      %2671 = vmatpush1.bf16.msra.mxu0 %v2133
      %2672 = vmatprep.subr.bf16.mxu0 0
      %2673 = vmatpush1.bf16.msra.mxu0 %v2134
      %2674 = vmatprep.subr.bf16.mxu0 0
      %2675 = vmatpush1.bf16.msra.mxu0 %v2135
      %2676 = vmatprep.mubr.bf16.mxu0 %v1017
      %2677 = vmatmul.mubr.bf16.gmra.mrb[0].mxu0 %v1016
      %v2678 = vpop.f32.mrb[0].mxu0
      %v2679 = vadd.f32 %v2630, %v2678
      %v2680 = vpop.f32.mrb[0].mxu0
      %v2681 = vpop.f32.mrb[0].mxu0
      %v2682 = vadd.f32 %v2633, %v2681
      %v2683 = vpop.f32.mrb[0].mxu0
      %2684 = vmatprep.mubr.bf16.mxu0 %v1048
      %2685 = vmatmul.mubr.bf16.gmra.mrb[0].mxu0 %v1047
      %v2686 = vpop.f32.mrb[0].mxu0
      %v2687 = vadd.f32 %v2638, %v2686
      %v2688 = vpop.f32.mrb[0].mxu0
      %v2689 = vpop.f32.mrb[0].mxu0
      %v2690 = vadd.f32 %v2641, %v2689
      %v2691 = vpop.f32.mrb[0].mxu0
      %2692 = vdwg.mxu0
      %2693 = vmatprep.subr.bf16.mxu0 0
      %2694 = vmatpush1.bf16.msra.mxu0 %v2136
      %2695 = vmatprep.subr.bf16.mxu0 0
      %2696 = vmatpush1.bf16.msra.mxu0 %v2137
      %2697 = vmatprep.subr.bf16.mxu0 0
      %2698 = vmatpush1.bf16.msra.mxu0 %v2138
      %2699 = vmatprep.subr.bf16.mxu0 0
      %2700 = vmatpush1.bf16.msra.mxu0 %v2139
      %2701 = vmatprep.subr.bf16.mxu0 0
      %2702 = vmatpush1.bf16.msra.mxu0 %v2140
      %2703 = vmatprep.subr.bf16.mxu0 0
      %2704 = vmatpush1.bf16.msra.mxu0 %v2141
      %2705 = vmatprep.subr.bf16.mxu0 0
      %2706 = vmatpush1.bf16.msra.mxu0 %v2142
      %2707 = vmatprep.subr.bf16.mxu0 0
      %2708 = vmatpush1.bf16.msra.mxu0 %v2143
      %2709 = vmatprep.subr.bf16.mxu0 0
      %2710 = vmatpush1.bf16.msra.mxu0 %v2144
      %2711 = vmatprep.subr.bf16.mxu0 0
      %2712 = vmatpush1.bf16.msra.mxu0 %v2145
      %2713 = vmatprep.subr.bf16.mxu0 0
      %2714 = vmatpush1.bf16.msra.mxu0 %v2146
      %2715 = vmatprep.subr.bf16.mxu0 0
      %2716 = vmatpush1.bf16.msra.mxu0 %v2147
      %2717 = vmatprep.subr.bf16.mxu0 0
      %2718 = vmatpush1.bf16.msra.mxu0 %v2148
      %2719 = vmatprep.subr.bf16.mxu0 0
      %2720 = vmatpush1.bf16.msra.mxu0 %v2149
      %2721 = vmatprep.subr.bf16.mxu0 0
      %2722 = vmatpush1.bf16.msra.mxu0 %v2150
      %2723 = vmatprep.subr.bf16.mxu0 0
      %2724 = vmatpush1.bf16.msra.mxu0 %v2151
      %2725 = vmatprep.mubr.bf16.mxu0 %v1019
      %2726 = vmatmul.mubr.bf16.gmra.mrb[0].mxu0 %v1018
      %v2727 = vpop.f32.mrb[0].mxu0
      %v2728 = vadd.f32 %v2679, %v2727
      %v2729 = vpop.f32.mrb[0].mxu0
      %v2730 = vpop.f32.mrb[0].mxu0
      %v2731 = vadd.f32 %v2682, %v2730
      %v2732 = vpop.f32.mrb[0].mxu0
      %2733 = vmatprep.mubr.bf16.mxu0 %v1050
      %2734 = vmatmul.mubr.bf16.gmra.mrb[0].mxu0 %v1049
      %v2735 = vpop.f32.mrb[0].mxu0
      %v2736 = vadd.f32 %v2687, %v2735
      %v2737 = vpop.f32.mrb[0].mxu0
      %v2738 = vpop.f32.mrb[0].mxu0
      %v2739 = vadd.f32 %v2690, %v2738
      %v2740 = vpop.f32.mrb[0].mxu0
      %2741 = vdwg.mxu0
      %2742 = vmatprep.subr.bf16.mxu0 0
      %2743 = vmatpush1.bf16.msra.mxu0 %v2152
      %2744 = vmatprep.subr.bf16.mxu0 0
      %2745 = vmatpush1.bf16.msra.mxu0 %v2153
      %2746 = vmatprep.subr.bf16.mxu0 0
      %2747 = vmatpush1.bf16.msra.mxu0 %v2154
      %2748 = vmatprep.subr.bf16.mxu0 0
      %2749 = vmatpush1.bf16.msra.mxu0 %v2155
      %2750 = vmatprep.subr.bf16.mxu0 0
      %2751 = vmatpush1.bf16.msra.mxu0 %v2156
      %2752 = vmatprep.subr.bf16.mxu0 0
      %2753 = vmatpush1.bf16.msra.mxu0 %v2157
      %2754 = vmatprep.subr.bf16.mxu0 0
      %2755 = vmatpush1.bf16.msra.mxu0 %v2158
      %2756 = vmatprep.subr.bf16.mxu0 0
      %2757 = vmatpush1.bf16.msra.mxu0 %v2159
      %2758 = vmatprep.subr.bf16.mxu0 0
      %2759 = vmatpush1.bf16.msra.mxu0 %v2160
      %2760 = vmatprep.subr.bf16.mxu0 0
      %2761 = vmatpush1.bf16.msra.mxu0 %v2161
      %2762 = vmatprep.subr.bf16.mxu0 0
      %2763 = vmatpush1.bf16.msra.mxu0 %v2162
      %2764 = vmatprep.subr.bf16.mxu0 0
      %2765 = vmatpush1.bf16.msra.mxu0 %v2163
      %2766 = vmatprep.subr.bf16.mxu0 0
      %2767 = vmatpush1.bf16.msra.mxu0 %v2164
      %2768 = vmatprep.subr.bf16.mxu0 0
      %2769 = vmatpush1.bf16.msra.mxu0 %v2165
      %2770 = vmatprep.subr.bf16.mxu0 0
      %2771 = vmatpush1.bf16.msra.mxu0 %v2166
      %2772 = vmatprep.subr.bf16.mxu0 0
      %2773 = vmatpush1.bf16.msra.mxu0 %v2167
      %2774 = vmatprep.mubr.bf16.mxu0 %v1021
      %2775 = vmatmul.mubr.bf16.gmra.mrb[0].mxu0 %v1020
      %v2776 = vpop.f32.mrb[0].mxu0
      %v2777 = vadd.f32 %v2728, %v2776
      %v2778 = vpop.f32.mrb[0].mxu0
      %v2779 = vpop.f32.mrb[0].mxu0
      %v2780 = vadd.f32 %v2731, %v2779
      %v2781 = vpop.f32.mrb[0].mxu0
      %2782 = vmatprep.mubr.bf16.mxu0 %v1052
      %2783 = vmatmul.mubr.bf16.gmra.mrb[0].mxu0 %v1051
      %v2784 = vpop.f32.mrb[0].mxu0
      %v2785 = vadd.f32 %v2736, %v2784
      %v2786 = vpop.f32.mrb[0].mxu0
      %v2787 = vpop.f32.mrb[0].mxu0
      %v2788 = vadd.f32 %v2739, %v2787
      %v2789 = vpop.f32.mrb[0].mxu0
      %2790 = vdwg.mxu0
      %2791 = vmatprep.subr.bf16.mxu0 0
      %2792 = vmatpush1.bf16.msra.mxu0 %v2168
      %2793 = vmatprep.subr.bf16.mxu0 0
      %2794 = vmatpush1.bf16.msra.mxu0 %v2169
      %2795 = vmatprep.subr.bf16.mxu0 0
      %2796 = vmatpush1.bf16.msra.mxu0 %v2170
      %2797 = vmatprep.subr.bf16.mxu0 0
      %2798 = vmatpush1.bf16.msra.mxu0 %v2171
      %2799 = vmatprep.subr.bf16.mxu0 0
      %2800 = vmatpush1.bf16.msra.mxu0 %v2172
      %2801 = vmatprep.subr.bf16.mxu0 0
      %2802 = vmatpush1.bf16.msra.mxu0 %v2173
      %2803 = vmatprep.subr.bf16.mxu0 0
      %2804 = vmatpush1.bf16.msra.mxu0 %v2174
      %2805 = vmatprep.subr.bf16.mxu0 0
      %2806 = vmatpush1.bf16.msra.mxu0 %v2175
      %2807 = vmatprep.subr.bf16.mxu0 0
      %2808 = vmatpush1.bf16.msra.mxu0 %v2176
      %2809 = vmatprep.subr.bf16.mxu0 0
      %2810 = vmatpush1.bf16.msra.mxu0 %v2177
      %2811 = vmatprep.subr.bf16.mxu0 0
      %2812 = vmatpush1.bf16.msra.mxu0 %v2178
      %2813 = vmatprep.subr.bf16.mxu0 0
      %2814 = vmatpush1.bf16.msra.mxu0 %v2179
      %2815 = vmatprep.subr.bf16.mxu0 0
      %2816 = vmatpush1.bf16.msra.mxu0 %v2180
      %2817 = vmatprep.subr.bf16.mxu0 0
      %2818 = vmatpush1.bf16.msra.mxu0 %v2181
      %2819 = vmatprep.subr.bf16.mxu0 0
      %2820 = vmatpush1.bf16.msra.mxu0 %v2182
      %2821 = vmatprep.subr.bf16.mxu0 0
      %2822 = vmatpush1.bf16.msra.mxu0 %v2183
      %2823 = vmatprep.mubr.bf16.mxu0 %v1023
      %2824 = vmatmul.mubr.bf16.gmra.mrb[0].mxu0 %v1022
      %v2825 = vpop.f32.mrb[0].mxu0
      %v2826 = vadd.f32 %v2777, %v2825
      %v2827 = vpop.f32.mrb[0].mxu0
      %v2828 = vpop.f32.mrb[0].mxu0
      %v2829 = vadd.f32 %v2780, %v2828
      %v2830 = vpop.f32.mrb[0].mxu0
      %2831 = vmatprep.mubr.bf16.mxu0 %v1054
      %2832 = vmatmul.mubr.bf16.gmra.mrb[0].mxu0 %v1053
      %v2833 = vpop.f32.mrb[0].mxu0
      %v2834 = vadd.f32 %v2785, %v2833
      %v2835 = vpop.f32.mrb[0].mxu0
      %v2836 = vpop.f32.mrb[0].mxu0
      %v2837 = vadd.f32 %v2788, %v2836
      %v2838 = vpop.f32.mrb[0].mxu0
      %2839 = vdwg.mxu0
      %2840 = vmatprep.subr.bf16.mxu0 0
      %2841 = vmatpush1.bf16.msra.mxu0 %v2184
      %2842 = vmatprep.subr.bf16.mxu0 0
      %2843 = vmatpush1.bf16.msra.mxu0 %v2185
      %2844 = vmatprep.subr.bf16.mxu0 0
      %2845 = vmatpush1.bf16.msra.mxu0 %v2186
      %2846 = vmatprep.subr.bf16.mxu0 0
      %2847 = vmatpush1.bf16.msra.mxu0 %v2187
      %2848 = vmatprep.subr.bf16.mxu0 0
      %2849 = vmatpush1.bf16.msra.mxu0 %v2188
      %2850 = vmatprep.subr.bf16.mxu0 0
      %2851 = vmatpush1.bf16.msra.mxu0 %v2189
      %2852 = vmatprep.subr.bf16.mxu0 0
      %2853 = vmatpush1.bf16.msra.mxu0 %v2190
      %2854 = vmatprep.subr.bf16.mxu0 0
      %2855 = vmatpush1.bf16.msra.mxu0 %v2191
      %2856 = vmatprep.subr.bf16.mxu0 0
      %2857 = vmatpush1.bf16.msra.mxu0 %v2192
      %2858 = vmatprep.subr.bf16.mxu0 0
      %2859 = vmatpush1.bf16.msra.mxu0 %v2193
      %2860 = vmatprep.subr.bf16.mxu0 0
      %2861 = vmatpush1.bf16.msra.mxu0 %v2194
      %2862 = vmatprep.subr.bf16.mxu0 0
      %2863 = vmatpush1.bf16.msra.mxu0 %v2195
      %2864 = vmatprep.subr.bf16.mxu0 0
      %2865 = vmatpush1.bf16.msra.mxu0 %v2196
      %2866 = vmatprep.subr.bf16.mxu0 0
      %2867 = vmatpush1.bf16.msra.mxu0 %v2197
      %2868 = vmatprep.subr.bf16.mxu0 0
      %2869 = vmatpush1.bf16.msra.mxu0 %v2198
      %2870 = vmatprep.subr.bf16.mxu0 0
      %2871 = vmatpush1.bf16.msra.mxu0 %v2199
      %2872 = vmatprep.mubr.bf16.mxu0 %v1025
      %2873 = vmatmul.mubr.bf16.gmra.mrb[0].mxu0 %v1024
      %v2874 = vpop.f32.mrb[0].mxu0
      %v2875 = vadd.f32 %v2826, %v2874
      %v2876 = vpop.f32.mrb[0].mxu0
      %v2877 = vpop.f32.mrb[0].mxu0
      %v2878 = vadd.f32 %v2829, %v2877
      %v2879 = vpop.f32.mrb[0].mxu0
      %2880 = vmatprep.mubr.bf16.mxu0 %v1056
      %2881 = vmatmul.mubr.bf16.gmra.mrb[0].mxu0 %v1055
      %v2882 = vpop.f32.mrb[0].mxu0
      %v2883 = vadd.f32 %v2834, %v2882
      %v2884 = vpop.f32.mrb[0].mxu0
      %v2885 = vpop.f32.mrb[0].mxu0
      %v2886 = vadd.f32 %v2837, %v2885
      %v2887 = vpop.f32.mrb[0].mxu0
      %2888 = vdwg.mxu0
      %2889 = vmatprep.subr.bf16.mxu0 0
      %2890 = vmatpush1.bf16.msra.mxu0 %v2200
      %2891 = vmatprep.subr.bf16.mxu0 0
      %2892 = vmatpush1.bf16.msra.mxu0 %v2201
      %2893 = vmatprep.subr.bf16.mxu0 0
      %2894 = vmatpush1.bf16.msra.mxu0 %v2202
      %2895 = vmatprep.subr.bf16.mxu0 0
      %2896 = vmatpush1.bf16.msra.mxu0 %v2203
      %2897 = vmatprep.subr.bf16.mxu0 0
      %2898 = vmatpush1.bf16.msra.mxu0 %v2204
      %2899 = vmatprep.subr.bf16.mxu0 0
      %2900 = vmatpush1.bf16.msra.mxu0 %v2205
      %2901 = vmatprep.subr.bf16.mxu0 0
      %2902 = vmatpush1.bf16.msra.mxu0 %v2206
      %2903 = vmatprep.subr.bf16.mxu0 0
      %2904 = vmatpush1.bf16.msra.mxu0 %v2207
      %2905 = vmatprep.subr.bf16.mxu0 0
      %2906 = vmatpush1.bf16.msra.mxu0 %v2208
      %2907 = vmatprep.subr.bf16.mxu0 0
      %2908 = vmatpush1.bf16.msra.mxu0 %v2209
      %2909 = vmatprep.subr.bf16.mxu0 0
      %2910 = vmatpush1.bf16.msra.mxu0 %v2210
      %2911 = vmatprep.subr.bf16.mxu0 0
      %2912 = vmatpush1.bf16.msra.mxu0 %v2211
      %2913 = vmatprep.subr.bf16.mxu0 0
      %2914 = vmatpush1.bf16.msra.mxu0 %v2212
      %2915 = vmatprep.subr.bf16.mxu0 0
      %2916 = vmatpush1.bf16.msra.mxu0 %v2213
      %2917 = vmatprep.subr.bf16.mxu0 0
      %2918 = vmatpush1.bf16.msra.mxu0 %v2214
      %2919 = vmatprep.subr.bf16.mxu0 0
      %2920 = vmatpush1.bf16.msra.mxu0 %v2215
      %2921 = vmatprep.mubr.bf16.mxu0 %v1027
      %2922 = vmatmul.mubr.bf16.gmra.mrb[0].mxu0 %v1026
      %v2923 = vpop.f32.mrb[0].mxu0
      %v2924 = vadd.f32 %v2875, %v2923
      %v2925 = vpop.f32.mrb[0].mxu0
      %v2926 = vpop.f32.mrb[0].mxu0
      %v2927 = vadd.f32 %v2878, %v2926
      %v2928 = vpop.f32.mrb[0].mxu0
      %2929 = vmatprep.mubr.bf16.mxu0 %v1058
      %2930 = vmatmul.mubr.bf16.gmra.mrb[0].mxu0 %v1057
      %v2931 = vpop.f32.mrb[0].mxu0
      %v2932 = vadd.f32 %v2883, %v2931
      %v2933 = vpop.f32.mrb[0].mxu0
      %v2934 = vpop.f32.mrb[0].mxu0
      %v2935 = vadd.f32 %v2886, %v2934
      %v2936 = vpop.f32.mrb[0].mxu0
      %2937 = vdwg.mxu0
      %2938 = vmatprep.subr.bf16.mxu0 0
      %2939 = vmatpush1.bf16.msra.mxu0 %v2216
      %2940 = vmatprep.subr.bf16.mxu0 0
      %2941 = vmatpush1.bf16.msra.mxu0 %v2217
      %2942 = vmatprep.subr.bf16.mxu0 0
      %2943 = vmatpush1.bf16.msra.mxu0 %v2218
      %2944 = vmatprep.subr.bf16.mxu0 0
      %2945 = vmatpush1.bf16.msra.mxu0 %v2219
      %2946 = vmatprep.subr.bf16.mxu0 0
      %2947 = vmatpush1.bf16.msra.mxu0 %v2220
      %2948 = vmatprep.subr.bf16.mxu0 0
      %2949 = vmatpush1.bf16.msra.mxu0 %v2221
      %2950 = vmatprep.subr.bf16.mxu0 0
      %2951 = vmatpush1.bf16.msra.mxu0 %v2222
      %2952 = vmatprep.subr.bf16.mxu0 0
      %2953 = vmatpush1.bf16.msra.mxu0 %v2223
      %2954 = vmatprep.subr.bf16.mxu0 0
      %2955 = vmatpush1.bf16.msra.mxu0 %v2224
      %2956 = vmatprep.subr.bf16.mxu0 0
      %2957 = vmatpush1.bf16.msra.mxu0 %v2225
      %2958 = vmatprep.subr.bf16.mxu0 0
      %2959 = vmatpush1.bf16.msra.mxu0 %v2226
      %2960 = vmatprep.subr.bf16.mxu0 0
      %2961 = vmatpush1.bf16.msra.mxu0 %v2227
      %2962 = vmatprep.subr.bf16.mxu0 0
      %2963 = vmatpush1.bf16.msra.mxu0 %v2228
      %2964 = vmatprep.subr.bf16.mxu0 0
      %2965 = vmatpush1.bf16.msra.mxu0 %v2229
      %2966 = vmatprep.subr.bf16.mxu0 0
      %2967 = vmatpush1.bf16.msra.mxu0 %v2230
      %2968 = vmatprep.subr.bf16.mxu0 0
      %2969 = vmatpush1.bf16.msra.mxu0 %v2231
      %2970 = vmatprep.mubr.bf16.mxu0 %v1029
      %2971 = vmatmul.mubr.bf16.gmra.mrb[0].mxu0 %v1028
      %v2972 = vpop.f32.mrb[0].mxu0
      %v2973 = vadd.f32 %v2924, %v2972
      %v2974 = vpop.f32.mrb[0].mxu0
      %v2975 = vpop.f32.mrb[0].mxu0
      %v2976 = vadd.f32 %v2927, %v2975
      %v2977 = vpop.f32.mrb[0].mxu0
      %2978 = vmatprep.mubr.bf16.mxu0 %v1060
      %2979 = vmatmul.mubr.bf16.gmra.mrb[0].mxu0 %v1059
      %v2980 = vpop.f32.mrb[0].mxu0
      %v2981 = vadd.f32 %v2932, %v2980
      %v2982 = vpop.f32.mrb[0].mxu0
      %v2983 = vpop.f32.mrb[0].mxu0
      %v2984 = vadd.f32 %v2935, %v2983
      %v2985 = vpop.f32.mrb[0].mxu0
      %2986 = vdwg.mxu0
      %2987 = vmatprep.subr.bf16.mxu0 0
      %2988 = vmatpush1.bf16.msra.mxu0 %v2232
      %2989 = vmatprep.subr.bf16.mxu0 0
      %2990 = vmatpush1.bf16.msra.mxu0 %v2233
      %2991 = vmatprep.subr.bf16.mxu0 0
      %2992 = vmatpush1.bf16.msra.mxu0 %v2234
      %2993 = vmatprep.subr.bf16.mxu0 0
      %2994 = vmatpush1.bf16.msra.mxu0 %v2235
      %2995 = vmatprep.subr.bf16.mxu0 0
      %2996 = vmatpush1.bf16.msra.mxu0 %v2236
      %2997 = vmatprep.subr.bf16.mxu0 0
      %2998 = vmatpush1.bf16.msra.mxu0 %v2237
      %2999 = vmatprep.subr.bf16.mxu0 0
      %3000 = vmatpush1.bf16.msra.mxu0 %v2238
      %3001 = vmatprep.subr.bf16.mxu0 0
      %3002 = vmatpush1.bf16.msra.mxu0 %v2239
      %3003 = vmatprep.subr.bf16.mxu0 0
      %3004 = vmatpush1.bf16.msra.mxu0 %v2240
      %3005 = vmatprep.subr.bf16.mxu0 0
      %3006 = vmatpush1.bf16.msra.mxu0 %v2241
      %3007 = vmatprep.subr.bf16.mxu0 0
      %3008 = vmatpush1.bf16.msra.mxu0 %v2242
      %3009 = vmatprep.subr.bf16.mxu0 0
      %3010 = vmatpush1.bf16.msra.mxu0 %v2243
      %3011 = vmatprep.subr.bf16.mxu0 0
      %3012 = vmatpush1.bf16.msra.mxu0 %v2244
      %3013 = vmatprep.subr.bf16.mxu0 0
      %3014 = vmatpush1.bf16.msra.mxu0 %v2245
      %3015 = vmatprep.subr.bf16.mxu0 0
      %3016 = vmatpush1.bf16.msra.mxu0 %v2246
      %3017 = vmatprep.subr.bf16.mxu0 0
      %3018 = vmatpush1.bf16.msra.mxu0 %v2247
      %3019 = vmatprep.mubr.bf16.mxu0 %v1031
      %3020 = vmatmul.mubr.bf16.gmra.mrb[0].mxu0 %v1030
      %v3021 = vpop.f32.mrb[0].mxu0
      %v3022 = vadd.f32 %v2973, %v3021
      %v3023 = vpop.f32.mrb[0].mxu0
      %v3024 = vpop.f32.mrb[0].mxu0
      %v3025 = vadd.f32 %v2976, %v3024
      %v3026 = vpop.f32.mrb[0].mxu0
      %3027 = vmatprep.mubr.bf16.mxu0 %v1062
      %3028 = vmatmul.mubr.bf16.gmra.mrb[0].mxu0 %v1061
      %v3029 = vpop.f32.mrb[0].mxu0
      %v3030 = vadd.f32 %v2981, %v3029
      %v3031 = vpop.f32.mrb[0].mxu0
      %v3032 = vpop.f32.mrb[0].mxu0
      %v3033 = vadd.f32 %v2984, %v3032
      %v3034 = vpop.f32.mrb[0].mxu0
      %3035 = vdwg.mxu0
      %3036 = vmatprep.subr.bf16.mxu0 0
      %3037 = vmatpush1.bf16.msra.mxu0 %v2248
      %3038 = vmatprep.subr.bf16.mxu0 0
      %3039 = vmatpush1.bf16.msra.mxu0 %v2249
      %3040 = vmatprep.subr.bf16.mxu0 0
      %3041 = vmatpush1.bf16.msra.mxu0 %v2250
      %3042 = vmatprep.subr.bf16.mxu0 0
      %3043 = vmatpush1.bf16.msra.mxu0 %v2251
      %3044 = vmatprep.subr.bf16.mxu0 0
      %3045 = vmatpush1.bf16.msra.mxu0 %v2252
      %3046 = vmatprep.subr.bf16.mxu0 0
      %3047 = vmatpush1.bf16.msra.mxu0 %v2253
      %3048 = vmatprep.subr.bf16.mxu0 0
      %3049 = vmatpush1.bf16.msra.mxu0 %v2254
      %3050 = vmatprep.subr.bf16.mxu0 0
      %3051 = vmatpush1.bf16.msra.mxu0 %v2255
      %3052 = vmatprep.subr.bf16.mxu0 0
      %3053 = vmatpush1.bf16.msra.mxu0 %v2256
      %3054 = vmatprep.subr.bf16.mxu0 0
      %3055 = vmatpush1.bf16.msra.mxu0 %v2257
      %3056 = vmatprep.subr.bf16.mxu0 0
      %3057 = vmatpush1.bf16.msra.mxu0 %v2258
      %3058 = vmatprep.subr.bf16.mxu0 0
      %3059 = vmatpush1.bf16.msra.mxu0 %v2259
      %3060 = vmatprep.subr.bf16.mxu0 0
      %3061 = vmatpush1.bf16.msra.mxu0 %v2260
      %3062 = vmatprep.subr.bf16.mxu0 0
      %3063 = vmatpush1.bf16.msra.mxu0 %v2261
      %3064 = vmatprep.subr.bf16.mxu0 0
      %3065 = vmatpush1.bf16.msra.mxu0 %v2262
      %3066 = vmatprep.subr.bf16.mxu0 0
      %3067 = vmatpush1.bf16.msra.mxu0 %v2263
      %3068 = vmatprep.mubr.bf16.mxu0 %v1033
      %3069 = vmatmul.mubr.bf16.gmra.mrb[0].mxu0 %v1032
      %v3070 = vpop.f32.mrb[0].mxu0
      %v3071 = vadd.f32 %v3022, %v3070
      %v3072 = vpop.f32.mrb[0].mxu0
      %v3073 = vpop.f32.mrb[0].mxu0
      %v3074 = vadd.f32 %v3025, %v3073
      %v3075 = vpop.f32.mrb[0].mxu0
      %3076 = vmatprep.mubr.bf16.mxu0 %v1064
      %3077 = vmatmul.mubr.bf16.gmra.mrb[0].mxu0 %v1063
      %v3078 = vpop.f32.mrb[0].mxu0
      %v3079 = vadd.f32 %v3030, %v3078
      %v3080 = vpop.f32.mrb[0].mxu0
      %v3081 = vpop.f32.mrb[0].mxu0
      %v3082 = vadd.f32 %v3033, %v3081
      %v3083 = vpop.f32.mrb[0].mxu0
      %3084 = vdwg.mxu0
      %3085 = vmatprep.subr.bf16.mxu0 0
      %3086 = vmatpush1.bf16.msra.mxu0 %v2264
      %3087 = vmatprep.subr.bf16.mxu0 0
      %3088 = vmatpush1.bf16.msra.mxu0 %v2265
      %3089 = vmatprep.subr.bf16.mxu0 0
      %3090 = vmatpush1.bf16.msra.mxu0 %v2266
      %3091 = vmatprep.subr.bf16.mxu0 0
      %3092 = vmatpush1.bf16.msra.mxu0 %v2267
      %3093 = vmatprep.subr.bf16.mxu0 0
      %3094 = vmatpush1.bf16.msra.mxu0 %v2268
      %3095 = vmatprep.subr.bf16.mxu0 0
      %3096 = vmatpush1.bf16.msra.mxu0 %v2269
      %3097 = vmatprep.subr.bf16.mxu0 0
      %3098 = vmatpush1.bf16.msra.mxu0 %v2270
      %3099 = vmatprep.subr.bf16.mxu0 0
      %3100 = vmatpush1.bf16.msra.mxu0 %v2271
      %3101 = vmatprep.subr.bf16.mxu0 0
      %3102 = vmatpush1.bf16.msra.mxu0 %v2272
      %3103 = vmatprep.subr.bf16.mxu0 0
      %3104 = vmatpush1.bf16.msra.mxu0 %v2273
      %3105 = vmatprep.subr.bf16.mxu0 0
      %3106 = vmatpush1.bf16.msra.mxu0 %v2274
      %3107 = vmatprep.subr.bf16.mxu0 0
      %3108 = vmatpush1.bf16.msra.mxu0 %v2275
      %3109 = vmatprep.subr.bf16.mxu0 0
      %3110 = vmatpush1.bf16.msra.mxu0 %v2276
      %3111 = vmatprep.subr.bf16.mxu0 0
      %3112 = vmatpush1.bf16.msra.mxu0 %v2277
      %3113 = vmatprep.subr.bf16.mxu0 0
      %3114 = vmatpush1.bf16.msra.mxu0 %v2278
      %3115 = vmatprep.subr.bf16.mxu0 0
      %3116 = vmatpush1.bf16.msra.mxu0 %v2279
      %3117 = vmatprep.mubr.bf16.mxu0 %v1035
      %3118 = vmatmul.mubr.bf16.gmra.mrb[0].mxu0 %v1034
      %v3119 = vpop.f32.mrb[0].mxu0
      %v3120 = vadd.f32 %v3071, %v3119
      %v3121 = vpop.f32.mrb[0].mxu0
      %v3122 = vpop.f32.mrb[0].mxu0
      %v3123 = vadd.f32 %v3074, %v3122
      %v3124 = vpop.f32.mrb[0].mxu0
      %3125 = vmatprep.mubr.bf16.mxu0 %v1066
      %3126 = vmatmul.mubr.bf16.gmra.mrb[0].mxu0 %v1065
      %v3127 = vpop.f32.mrb[0].mxu0
      %v3128 = vadd.f32 %v3079, %v3127
      %v3129 = vpop.f32.mrb[0].mxu0
      %v3130 = vpop.f32.mrb[0].mxu0
      %v3131 = vadd.f32 %v3082, %v3130
      %v3132 = vpop.f32.mrb[0].mxu0
      %3133 = vdwg.mxu0
      %3134 = vmatprep.subr.bf16.mxu0 0
      %3135 = vmatpush1.bf16.msra.mxu0 %v2280
      %3136 = vmatprep.subr.bf16.mxu0 0
      %3137 = vmatpush1.bf16.msra.mxu0 %v2281
      %3138 = vmatprep.subr.bf16.mxu0 0
      %3139 = vmatpush1.bf16.msra.mxu0 %v2282
      %3140 = vmatprep.subr.bf16.mxu0 0
      %3141 = vmatpush1.bf16.msra.mxu0 %v2283
      %3142 = vmatprep.subr.bf16.mxu0 0
      %3143 = vmatpush1.bf16.msra.mxu0 %v2284
      %3144 = vmatprep.subr.bf16.mxu0 0
      %3145 = vmatpush1.bf16.msra.mxu0 %v2285
      %3146 = vmatprep.subr.bf16.mxu0 0
      %3147 = vmatpush1.bf16.msra.mxu0 %v2286
      %3148 = vmatprep.subr.bf16.mxu0 0
      %3149 = vmatpush1.bf16.msra.mxu0 %v2287
      %3150 = vmatprep.subr.bf16.mxu0 0
      %3151 = vmatpush1.bf16.msra.mxu0 %v2288
      %3152 = vmatprep.subr.bf16.mxu0 0
      %3153 = vmatpush1.bf16.msra.mxu0 %v2289
      %3154 = vmatprep.subr.bf16.mxu0 0
      %3155 = vmatpush1.bf16.msra.mxu0 %v2290
      %3156 = vmatprep.subr.bf16.mxu0 0
      %3157 = vmatpush1.bf16.msra.mxu0 %v2291
      %3158 = vmatprep.subr.bf16.mxu0 0
      %3159 = vmatpush1.bf16.msra.mxu0 %v2292
      %3160 = vmatprep.subr.bf16.mxu0 0
      %3161 = vmatpush1.bf16.msra.mxu0 %v2293
      %3162 = vmatprep.subr.bf16.mxu0 0
      %3163 = vmatpush1.bf16.msra.mxu0 %v2294
      %3164 = vmatprep.subr.bf16.mxu0 0
      %3165 = vmatpush1.bf16.msra.mxu0 %v2295
      %3166 = vmatprep.mubr.bf16.mxu0 %v1037
      %3167 = vmatmul.mubr.bf16.gmra.mrb[0].mxu0 %v1036
      %v3168 = vpop.f32.mrb[0].mxu0
      %v3169 = vadd.f32 %v3120, %v3168
      %v3170 = vpop.f32.mrb[0].mxu0
      %v3171 = vpop.f32.mrb[0].mxu0
      %v3172 = vadd.f32 %v3123, %v3171
      %v3173 = vpop.f32.mrb[0].mxu0
      %3174 = vmatprep.mubr.bf16.mxu0 %v1068
      %3175 = vmatmul.mubr.bf16.gmra.mrb[0].mxu0 %v1067
      %v3176 = vpop.f32.mrb[0].mxu0
      %v3177 = vadd.f32 %v3128, %v3176
      %v3178 = vpop.f32.mrb[0].mxu0
      %v3179 = vpop.f32.mrb[0].mxu0
      %v3180 = vadd.f32 %v3131, %v3179
      %v3181 = vpop.f32.mrb[0].mxu0
      %3182 = vdwg.mxu0
      %3183 = vmatprep.subr.bf16.mxu0 0
      %3184 = vmatpush1.bf16.msra.mxu0 %v2296
      %3185 = vmatprep.subr.bf16.mxu0 0
      %3186 = vmatpush1.bf16.msra.mxu0 %v2297
      %3187 = vmatprep.subr.bf16.mxu0 0
      %3188 = vmatpush1.bf16.msra.mxu0 %v2298
      %3189 = vmatprep.subr.bf16.mxu0 0
      %3190 = vmatpush1.bf16.msra.mxu0 %v2299
      %3191 = vmatprep.subr.bf16.mxu0 0
      %3192 = vmatpush1.bf16.msra.mxu0 %v2300
      %3193 = vmatprep.subr.bf16.mxu0 0
      %3194 = vmatpush1.bf16.msra.mxu0 %v2301
      %3195 = vmatprep.subr.bf16.mxu0 0
      %3196 = vmatpush1.bf16.msra.mxu0 %v2302
      %3197 = vmatprep.subr.bf16.mxu0 0
      %3198 = vmatpush1.bf16.msra.mxu0 %v2303
      %3199 = vmatprep.subr.bf16.mxu0 0
      %3200 = vmatpush1.bf16.msra.mxu0 %v2304
      %3201 = vmatprep.subr.bf16.mxu0 0
      %3202 = vmatpush1.bf16.msra.mxu0 %v2305
      %3203 = vmatprep.subr.bf16.mxu0 0
      %3204 = vmatpush1.bf16.msra.mxu0 %v2306
      %3205 = vmatprep.subr.bf16.mxu0 0
      %3206 = vmatpush1.bf16.msra.mxu0 %v2307
      %3207 = vmatprep.subr.bf16.mxu0 0
      %3208 = vmatpush1.bf16.msra.mxu0 %v2308
      %3209 = vmatprep.subr.bf16.mxu0 0
      %3210 = vmatpush1.bf16.msra.mxu0 %v2309
      %3211 = vmatprep.subr.bf16.mxu0 0
      %3212 = vmatpush1.bf16.msra.mxu0 %v2310
      %3213 = vmatprep.subr.bf16.mxu0 0
      %3214 = vmatpush1.bf16.msra.mxu0 %v2311
      %3215 = vmatprep.mubr.bf16.mxu0 %v1039
      %3216 = vmatmul.mubr.bf16.gmra.mrb[0].mxu0 %v1038
      %v3217 = vpop.f32.mrb[0].mxu0
      %v3218 = vadd.f32 %v3169, %v3217
      %v3219 = vpop.f32.mrb[0].mxu0
      %v3220 = vpop.f32.mrb[0].mxu0
      %v3221 = vadd.f32 %v3172, %v3220
      %v3222 = vpop.f32.mrb[0].mxu0
      %3223 = vmatprep.mubr.bf16.mxu0 %v1070
      %3224 = vmatmul.mubr.bf16.gmra.mrb[0].mxu0 %v1069
      %v3225 = vpop.f32.mrb[0].mxu0
      %v3226 = vadd.f32 %v3177, %v3225
      %v3227 = vpop.f32.mrb[0].mxu0
      %v3228 = vpop.f32.mrb[0].mxu0
      %v3229 = vadd.f32 %v3180, %v3228
      %v3230 = vpop.f32.mrb[0].mxu0
      %3231 = vdwg.mxu0
      %3232 = vmatprep.subr.bf16.mxu0 0
      %3233 = vmatpush1.bf16.msra.mxu0 %v2312
      %3234 = vmatprep.subr.bf16.mxu0 0
      %3235 = vmatpush1.bf16.msra.mxu0 %v2313
      %3236 = vmatprep.subr.bf16.mxu0 0
      %3237 = vmatpush1.bf16.msra.mxu0 %v2314
      %3238 = vmatprep.subr.bf16.mxu0 0
      %3239 = vmatpush1.bf16.msra.mxu0 %v2315
      %3240 = vmatprep.subr.bf16.mxu0 0
      %3241 = vmatpush1.bf16.msra.mxu0 %v2316
      %3242 = vmatprep.subr.bf16.mxu0 0
      %3243 = vmatpush1.bf16.msra.mxu0 %v2317
      %3244 = vmatprep.subr.bf16.mxu0 0
      %3245 = vmatpush1.bf16.msra.mxu0 %v2318
      %3246 = vmatprep.subr.bf16.mxu0 0
      %3247 = vmatpush1.bf16.msra.mxu0 %v2319
      %3248 = vmatprep.subr.bf16.mxu0 0
      %3249 = vmatpush1.bf16.msra.mxu0 %v2320
      %3250 = vmatprep.subr.bf16.mxu0 0
      %3251 = vmatpush1.bf16.msra.mxu0 %v2321
      %3252 = vmatprep.subr.bf16.mxu0 0
      %3253 = vmatpush1.bf16.msra.mxu0 %v2322
      %3254 = vmatprep.subr.bf16.mxu0 0
      %3255 = vmatpush1.bf16.msra.mxu0 %v2323
      %3256 = vmatprep.subr.bf16.mxu0 0
      %3257 = vmatpush1.bf16.msra.mxu0 %v2324
      %3258 = vmatprep.subr.bf16.mxu0 0
      %3259 = vmatpush1.bf16.msra.mxu0 %v2325
      %3260 = vmatprep.subr.bf16.mxu0 0
      %3261 = vmatpush1.bf16.msra.mxu0 %v2326
      %3262 = vmatprep.subr.bf16.mxu0 0
      %3263 = vmatpush1.bf16.msra.mxu0 %v2327
      %3264 = vmatprep.mubr.bf16.mxu0 %v1041
      %3265 = vmatmul.mubr.bf16.gmra.mrb[0].mxu0 %v1040
      %v3266 = vpop.f32.mrb[0].mxu0
      %v3267 = vadd.f32 %v3218, %v3266
      %v3268 = vpop.f32.mrb[0].mxu0
      %v3269 = vpop.f32.mrb[0].mxu0
      %v3270 = vadd.f32 %v3221, %v3269
      %v3271 = vpop.f32.mrb[0].mxu0
      %3272 = vmatprep.mubr.bf16.mxu0 %v1072
      %3273 = vmatmul.mubr.bf16.gmra.mrb[0].mxu0 %v1071
      %v3274 = vpop.f32.mrb[0].mxu0
      %v3275 = vadd.f32 %v3226, %v3274
      %v3276 = vpop.f32.mrb[0].mxu0
      %v3277 = vpop.f32.mrb[0].mxu0
      %v3278 = vadd.f32 %v3229, %v3277
      %v3279 = vpop.f32.mrb[0].mxu0
      %3280 = vdwg.mxu0
      %3281 = vmatprep.subr.bf16.mxu0 0
      %3282 = vmatpush1.bf16.msra.mxu0 %v2328
      %3283 = vmatprep.subr.bf16.mxu0 0
      %3284 = vmatpush1.bf16.msra.mxu0 %v2329
      %3285 = vmatprep.subr.bf16.mxu0 0
      %3286 = vmatpush1.bf16.msra.mxu0 %v2330
      %3287 = vmatprep.subr.bf16.mxu0 0
      %3288 = vmatpush1.bf16.msra.mxu0 %v2331
      %3289 = vmatprep.subr.bf16.mxu0 0
      %3290 = vmatpush1.bf16.msra.mxu0 %v2332
      %3291 = vmatprep.subr.bf16.mxu0 0
      %3292 = vmatpush1.bf16.msra.mxu0 %v2333
      %3293 = vmatprep.subr.bf16.mxu0 0
      %3294 = vmatpush1.bf16.msra.mxu0 %v2334
      %3295 = vmatprep.subr.bf16.mxu0 0
      %3296 = vmatpush1.bf16.msra.mxu0 %v2335
      %3297 = vmatprep.subr.bf16.mxu0 0
      %3298 = vmatpush1.bf16.msra.mxu0 %v2336
      %3299 = vmatprep.subr.bf16.mxu0 0
      %3300 = vmatpush1.bf16.msra.mxu0 %v2337
      %3301 = vmatprep.subr.bf16.mxu0 0
      %3302 = vmatpush1.bf16.msra.mxu0 %v2338
      %3303 = vmatprep.subr.bf16.mxu0 0
      %3304 = vmatpush1.bf16.msra.mxu0 %v2339
      %3305 = vmatprep.subr.bf16.mxu0 0
      %3306 = vmatpush1.bf16.msra.mxu0 %v2340
      %3307 = vmatprep.subr.bf16.mxu0 0
      %3308 = vmatpush1.bf16.msra.mxu0 %v2341
      %3309 = vmatprep.subr.bf16.mxu0 0
      %3310 = vmatpush1.bf16.msra.mxu0 %v2342
      %3311 = vmatprep.subr.bf16.mxu0 0
      %3312 = vmatpush1.bf16.msra.mxu0 %v2343
      %3313 = vmatprep.mubr.bf16.mxu0 %v1043
      %3314 = vmatmul.mubr.bf16.gmra.mrb[0].mxu0 %v1042
      %v3315 = vpop.f32.mrb[0].mxu0
      %v3316 = vadd.f32 %v3267, %v3315
      %v3317 = vpop.f32.mrb[0].mxu0
      %v3318 = vpop.f32.mrb[0].mxu0
      %v3319 = vadd.f32 %v3270, %v3318
      %v3320 = vpop.f32.mrb[0].mxu0
      %3321 = vmatprep.mubr.bf16.mxu0 %v1074
      %3322 = vmatmul.mubr.bf16.gmra.mrb[0].mxu0 %v1073
      %v3323 = vpop.f32.mrb[0].mxu0
      %v3324 = vadd.f32 %v3275, %v3323
      %v3325 = vpop.f32.mrb[0].mxu0
      %v3326 = vpop.f32.mrb[0].mxu0
      %v3327 = vadd.f32 %v3278, %v3326
      %v3328 = vpop.f32.mrb[0].mxu0
      %3329 = vdwg.mxu0
      %3330 = vmatprep.subr.bf16.mxu0 0
      %3331 = vmatpush1.bf16.msra.mxu0 %v2344
      %3332 = vmatprep.subr.bf16.mxu0 0
      %3333 = vmatpush1.bf16.msra.mxu0 %v2345
      %3334 = vmatprep.subr.bf16.mxu0 0
      %3335 = vmatpush1.bf16.msra.mxu0 0
      %3336 = vmatprep.subr.bf16.mxu0 0
      %3337 = vmatpush1.bf16.msra.mxu0 0
      %3338 = vmatprep.subr.bf16.mxu0 0
      %3339 = vmatpush1.bf16.msra.mxu0 0
      %3340 = vmatprep.subr.bf16.mxu0 0
      %3341 = vmatpush1.bf16.msra.mxu0 0
      %3342 = vmatprep.subr.bf16.mxu0 0
      %3343 = vmatpush1.bf16.msra.mxu0 0
      %3344 = vmatprep.subr.bf16.mxu0 0
      %3345 = vmatpush1.bf16.msra.mxu0 0
      %3346 = vmatprep.subr.bf16.mxu0 0
      %3347 = vmatpush1.bf16.msra.mxu0 0
      %3348 = vmatprep.subr.bf16.mxu0 0
      %3349 = vmatpush1.bf16.msra.mxu0 0
      %3350 = vmatprep.subr.bf16.mxu0 0
      %3351 = vmatpush1.bf16.msra.mxu0 0
      %3352 = vmatprep.subr.bf16.mxu0 0
      %3353 = vmatpush1.bf16.msra.mxu0 0
      %3354 = vmatprep.subr.bf16.mxu0 0
      %3355 = vmatpush1.bf16.msra.mxu0 0
      %3356 = vmatprep.subr.bf16.mxu0 0
      %3357 = vmatpush1.bf16.msra.mxu0 0
      %3358 = vmatprep.subr.bf16.mxu0 0
      %3359 = vmatpush1.bf16.msra.mxu0 0
      %3360 = vmatprep.subr.bf16.mxu0 0
      %3361 = vmatpush1.bf16.msra.mxu0 0
      %3362 = vmatprep.mubr.bf16.mxu0 0
      %3363 = vmatmul.mubr.bf16.gmra.mrb[0].mxu0 %v2590
      %v3364 = vpop.f32.mrb[0].mxu0
      %v3365 = vadd.f32 %v3316, %v3364
      %v3366 = vpop.f32.mrb[0].mxu0
      %v3367 = vpop.f32.mrb[0].mxu0
      %v3368 = vadd.f32 %v3319, %v3367
      %v3369 = vpop.f32.mrb[0].mxu0
      %3370 = vmatprep.mubr.bf16.mxu0 0
      %3371 = vmatmul.mubr.bf16.gmra.mrb[0].mxu0 %v2593
      %v3372 = vpop.f32.mrb[0].mxu0
      %v3373 = vadd.f32 %v3324, %v3372
      %v3374 = vpop.f32.mrb[0].mxu0
      %v3375 = vpop.f32.mrb[0].mxu0
      %v3376 = vadd.f32 %v3327, %v3375
      %v3377 = vpop.f32.mrb[0].mxu0
      %3378 = vdwg.mxu0
      %v3379 = vld [vmem:[%s2] sm:$0xff]
      %v3380 = vld [vmem:[%s2 + $0x8] sm:$0xff]
      %v3381 = vld [vmem:[%s2 + $0x10] sm:$0xff]
      %v3382 = vld [vmem:[%s2 + $0x18] sm:$0xff]
      %3384 = vset.pattern.permute.xlu0 0
      %3385 = vperm.xlu0 %3384, %v3379
      %v3386 = vpop.permute.xlu0 %3385
      %3389 = vset.pattern.permute.xlu0 0
      %3390 = vperm.xlu0 %3389, %v3380
      %v3391 = vpop.permute.xlu0 %3390
      %3394 = vset.pattern.permute.xlu0 0
      %3395 = vperm.xlu0 %3394, %v3381
      %v3396 = vpop.permute.xlu0 %3395
      %3399 = vset.pattern.permute.xlu0 0
      %3400 = vperm.xlu0 %3399, %v3382
      %v3401 = vpop.permute.xlu0 %3400
      %v3403 = vmul.f32 %v3365, %v3386
      %v3404 = vmul.f32 %v3368, %v3391
      %v3405 = vmul.f32 %v3373, %v3396
      %v3406 = vmul.f32 %v3376, %v3401
      %v3407 = vld [vmem:[%s3] sm:$0xff]
      %v3408 = vld [vmem:[%s3 + $0x8] sm:$0xff]
      %v3409 = vld [vmem:[%s3 + $0x10] sm:$0xff]
      %v3410 = vld [vmem:[%s3 + $0x18] sm:$0xff]
      %3412 = vset.pattern.permute.xlu0 0
      %3413 = vperm.xlu0 %3412, %v3407
      %v3414 = vpop.permute.xlu0 %3413
      %3417 = vset.pattern.permute.xlu0 0
      %3418 = vperm.xlu0 %3417, %v3408
      %v3419 = vpop.permute.xlu0 %3418
      %3422 = vset.pattern.permute.xlu0 0
      %3423 = vperm.xlu0 %3422, %v3409
      %v3424 = vpop.permute.xlu0 %3423
      %3427 = vset.pattern.permute.xlu0 0
      %3428 = vperm.xlu0 %3427, %v3410
      %v3429 = vpop.permute.xlu0 %3428
      %v3431 = vadd.f32 %v3403, %v3414
      %v3432 = vadd.f32 %v3404, %v3419
      %v3433 = vadd.f32 %v3405, %v3424
      %v3434 = vadd.f32 %v3406, %v3429
      %v3435 = vmax.f32 %v3431, 0.0
      %v3436 = vmax.f32 %v3432, 0.0
      %v3437 = vmax.f32 %v3433, 0.0
      %v3438 = vmax.f32 %v3434, 0.0
      %v3439 = vld [vmem:[%s260] sm:$0x1]
      %s3440 = sld [smem:[#allocation3 + %s27]]
      %v3441 = vstv %s3440
      %vm3442 = vcmp.lt.s32.totalorder %v3439, %v3441
      %v3443 = vsel %vm3442, 1, 0
      %v3444 = vcvt.s32.f32 %v3443
      %v3446 = vlaneseq
      %v3447 = vshrl.u32 %v3446, 7
      %v3448 = vsub.s32 0, %v3447
      %v3449 = vrot.slane %v3444, %v3448
      %v3451 = vmul.f32 %v3435, %v3449
      %v3452 = vmul.f32 %v3436, %v3449
      %v3453 = vmul.f32 %v3437, %v3449
      %v3454 = vmul.f32 %v3438, %v3449
      %v3455 = vpack.c.bf16 %v3452, %v3451
      %v3456 = vpack.c.bf16 %v3454, %v3453
      %v3459 = vunpack.c.l.b16 %v3455
      %v3460 = vunpack.c.h.b16 %v3455
      %v3461 = vunpack.c.l.b16 %v3456
      %v3462 = vunpack.c.h.b16 %v3456
      %v3463 = vpack.c.b16 %v3459, %v3459
      %v3464 = vpack.c.b16 %v3460, %v3460
      %v3465 = vpack.c.b16 %v3461, %v3461
      %v3466 = vpack.c.b16 %v3462, %v3462
      %3471 = vst [vmem:[%s276] sm:$0xf] %v3463
      %3472 = vst [vmem:[%s276 + $0x4] sm:$0xf] %v3464
      %3473 = vst [vmem:[%s276 + $0x8] sm:$0xf] %v3465
      %3474 = vst [vmem:[%s276 + $0xc] sm:$0xf] %v3466
      %p3475 = scmp.lt.s32.totalorder %s27, 1
      %s3476 = scalar_select %p3475, %s27, 1
      %p3477 = scmp.lt.s32.totalorder %s28, 0
      %s3478 = scalar_select %p3477, %s28, 0
      %s3479 = smul.addr %s3476, 4
      %s3480 = sadd.s32 %s3478, %s3479
      %s3481 = smul.addr %s3480, 4
      %s3482 = scalar_lea.vmem %s6, %s3481
      // Predicated region
      $region41: #{acoustic_model_forward.5} parent=39 // pred_check
        %p3483 = pneg %p172
      $region42: #{acoustic_model_forward.5} parent=39 // pred_check_branch
        %3485 = sbr.rel (%p3483) target = $region44
      $region43: #{acoustic_model_forward.5} parent=39 // pred_region
        _
      $region44: #{acoustic_model_forward.5} parent=39 // pred_fallthru
        _
    $region40: #{acoustic_model_forward.5} parent=5 // pred_fallthru
      _
    %p3486 = scmp.le.s32.totalorder 2, %s18
    // Predicated region
    $region45: #{acoustic_model_forward.5} parent=5 // pred_check
      %p3487 = pneg %p3486
    $region46: #{acoustic_model_forward.5} parent=5 // pred_check_branch
      %3489 = sbr.rel (%p3487) target = $region48
    $region47: #{acoustic_model_forward.5} parent=5 // pred_region
      %s3490 = ssub.s32 %s18, 2
      // Predicated region
      $region49: #{acoustic_model_forward.5} parent=47 // pred_check
        %p3491 = pneg %p178
      $region50: #{acoustic_model_forward.5} parent=47 // pred_check_branch
        %3493 = sbr.rel (%p3491) target = $region52
      $region51: #{acoustic_model_forward.5} parent=47 // pred_region
        %p3494 = scmp.lt.s32.totalorder %s29, 1
        %s3495 = scalar_select %p3494, %s29, 1
        %p3496 = scmp.lt.s32.totalorder %s30, 0
        %s3497 = scalar_select %p3496, %s30, 0
        %s3498 = smul.addr %s3495, 4
        %s3499 = sadd.s32 %s3497, %s3498
        %s3500 = smul.addr %s3499, 4
        %s3501 = scalar_lea.vmem %s6, %s3500
      $region52: #{acoustic_model_forward.5} parent=47 // pred_fallthru
        _
    $region48: #{acoustic_model_forward.5} parent=5 // pred_fallthru
      _
  $region6: #{acoustic_model_forward.5} parent=0 // loop_footer
    %s22 = sadd.s32 1, %s18
  $region7: #{acoustic_model_forward.5} parent=0 // loop_footer_branch
    %17 = sbr.rel target = $region3
  $region8: #{acoustic_model_forward.5} parent=0 // loop_exit
    _

</llo_original>
